<compile_context>
chip_gen: v7x
topology: tpu7x:2x2x1
jax: 0.10.0
libtpu: 0.0.40
codegen_flags: <defaults>
</compile_context>

<pallas_src>
import math
import functools

import jax
import jax.numpy as jnp
from jax.experimental import pallas as pl
from jax.experimental.pallas import tpu as pltpu


def _mha_kernel(q_ref, k_ref, v_ref, bias_ref,
                wq_ref, bq_ref, wk_ref, bk_ref,
                wv_ref, bv_ref, wo_ref, bo_ref,
                out_ref, *, n_heads, d_k, batch_block, seq_len, mxu_dtype):
    """One grid step processes `batch_block` batch elements.

    Q/K/V/O projections run on the folded (batch_block*S, D) operand so the
    MXU sees large M and full K/N.  The attention core is a static loop over
    heads whose matmuls are batched over the batch block.  exp and the
    approximate reciprocal go to the EUP; the additive mask is one VPU add.
    """
    bb, S = batch_block, seq_len
    D = n_heads * d_k
    inv_sqrt_dk = 1.0 / math.sqrt(d_k)

    def proj(x_ref, w_ref, b_ref, scale=None):
        # Fold batch into the matmul M dim (collapsing leading dims is free).
        x = x_ref[...].reshape(bb * S, D).astype(mxu_dtype)
        y = jnp.dot(x, w_ref[...], preferred_element_type=jnp.float32)
        y = y + b_ref[...]
        if scale is not None:
            y = y * scale
        # Single cast; only the mxu-dtype value stays live past this point.
        return y.astype(mxu_dtype).reshape(bb, S, D)

    # 1/sqrt(d_k) folded into Q once (bb*S*D mults, not bb*H*S^2 per step).
    Q = proj(q_ref, wq_ref, bq_ref, scale=inv_sqrt_dk)
    K = proj(k_ref, wk_ref, bk_ref)
    V = proj(v_ref, wv_ref, bv_ref)

    bias = bias_ref[...]          # (1 | bb, S, S) additive mask, loaded once

    # Static head loop; matmuls batched over the bb dim via einsum.  Head
    # slices are static last-dim slices (tile-aligned when d_k % 128 == 0).
    # TODO(synk): a single head-batched dot_general ((b, h) batch dims) plus
    # flash-style KV tiling is the production-shape structure.
    ctx_heads = []
    for h in range(n_heads):
        lo = h * d_k
        Qh = Q[:, :, lo:lo + d_k]                       # (bb, S, d_k)
        Kh = K[:, :, lo:lo + d_k]
        Vh = V[:, :, lo:lo + d_k]
        s = jnp.einsum('bqd,bkd->bqk', Qh, Kh,
                       preferred_element_type=jnp.float32) + bias
        s = s - jnp.max(s, axis=-1, keepdims=True)
        p = jnp.exp(s)
        p = p * pl.reciprocal(jnp.sum(p, axis=-1, keepdims=True), approx=True)
        # TODO(synk): training-mode dropout on `p` (identity in inference).
        ctx_heads.append(jnp.einsum('bqk,bkd->bqd', p.astype(mxu_dtype), Vh,
                                    preferred_element_type=jnp.float32))

    # Full-width, lane-dense context feeds the Wo matmul directly (no VMEM
    # scratch, no per-head masked stores).
    ctx = ctx_heads[0] if n_heads == 1 else jnp.concatenate(ctx_heads, axis=-1)
    ctx = ctx.reshape(bb * S, D).astype(mxu_dtype)

    out = jnp.dot(ctx, wo_ref[...], preferred_element_type=jnp.float32)
    out = out + bo_ref[...]
    out_ref[...] = out.reshape(bb, S, D).astype(out_ref.dtype)


def multi_head_attention(q, k, v, mask, params, *, n_heads,
                         batch_block=None, mxu_dtype=jnp.float32):
    """q, k, v: (B, S, D) float32.  mask: None or any shape broadcastable to
    (B, 1, S, S), 1 = keep, 0 = masked (per-head masks unsupported).
    params: Wq..Wo as (D, D) = (in, out), bq..bo as (1, D).

    mxu_dtype=jnp.bfloat16 runs the five big matmuls with bf16 operands and
    f32 accumulation — typically the fastest setting on v5e, v6e and v7x
    alike (MXU peak is a bf16 number on all three); keep float32 (default)
    only when exact f32 matmul parity with the PyTorch module matters.
    """
    B, S, D = q.shape
    assert D % n_heads == 0, "d_model is not divisible by h"
    d_k = D // n_heads

    # batch_block: fill the MXU M dim (target >= 256 rows) while keeping >= 4
    # grid steps when B allows, so BlockSpec double-buffering has steps to
    # pipeline and both v7x TensorCores get >= 2 steps each.
    if batch_block is None:
        batch_block = max(1, -(-256 // S))              # ceil(256 / S)
        batch_block = min(batch_block, max(1, B // 4))
    batch_block = max(1, min(batch_block, B))
    while B % batch_block:
        batch_block -= 1
    grid_b = B // batch_block

    # Additive mask bias, computed once outside the kernel: 0 keep, -1e9 drop.
    # (1,1,S,S)-style masks stay one shared (1,S,S) block; per-batch padding
    # masks become per-batch-block (bb,S,S) blocks (correctness fix).
    if mask is None:
        bias = jnp.zeros((1, S, S), jnp.float32)
    else:
        assert mask.ndim == 4 and mask.shape[1] == 1, \
            "mask must broadcast to (B, 1, S, S); per-head masks unsupported"
        mb = mask.shape[0]
        assert mb in (1, B)
        mask3 = jnp.broadcast_to(mask, (mb, 1, S, S)).reshape(mb, S, S)
        bias = jnp.where(mask3 == 0, jnp.float32(-1e9), jnp.float32(0.0))
    shared_bias = bias.shape[0] == 1

    # Pre-cast weights to the MXU dtype in the wrapper (halves weight DMA and
    # VMEM, removes per-step in-kernel cast passes when mxu_dtype is bf16).
    def w(name):
        wt = params[name]
        return wt if mxu_dtype == jnp.float32 else wt.astype(mxu_dtype)
    # TODO(synk): fp8 projection weights + per-output-channel scales on v7x.

    kernel = functools.partial(_mha_kernel, n_heads=n_heads, d_k=d_k,
                               batch_block=batch_block, seq_len=S,
                               mxu_dtype=mxu_dtype)

    # VMEM budget: single-buffered weights + double-buffered q/k/v/out blocks
    # + in-flight intermediates, clamped to [32 MiB, 64 MiB] so the limit is
    # valid on every generation (v7x physical VMEM is 64 MiB).
    wbytes = jnp.dtype(mxu_dtype).itemsize
    blk = batch_block * S * D * 4
    est = (4 * D * D * wbytes + 4 * D * 4
           + bias.size * 4 * (1 if shared_bias else 2)
           + 4 * 2 * blk                       # pipelined q, k, v, out blocks
           + 6 * blk                           # live projections / context
           + 4 * batch_block * S * S * 4)      # scores / probs working set
    vmem_limit = int(min(max(est * 3 // 2, 32 * 1024 * 1024), 64 * 1024 * 1024))

    seq_spec = pl.BlockSpec((batch_block, S, D), lambda b: (b, 0, 0))

    def call(single_buffer_invariants):
        # Grid-invariant blocks never change across the grid — single-buffer
        # them (no lost overlap, half the VMEM for the four DxD weights).
        const_kw = ({"pipeline_mode": pl.Buffered(1)}
                    if single_buffer_invariants else {})
        w_spec = pl.BlockSpec((D, D), lambda b: (0, 0), **const_kw)
        b_spec = pl.BlockSpec((1, D), lambda b: (0, 0), **const_kw)
        if shared_bias:
            bias_spec = pl.BlockSpec((1, S, S), lambda b: (0, 0, 0), **const_kw)
        else:
            bias_spec = pl.BlockSpec((batch_block, S, S), lambda b: (b, 0, 0))
        return pl.pallas_call(
            kernel,
            out_shape=jax.ShapeDtypeStruct((B, S, D), jnp.float32),
            grid=(grid_b,),
            in_specs=[seq_spec, seq_spec, seq_spec, bias_spec,
                      w_spec, b_spec, w_spec, b_spec,
                      w_spec, b_spec, w_spec, b_spec],
            out_specs=seq_spec,
            compiler_params=pltpu.CompilerParams(
                dimension_semantics=("parallel",),
                vmem_limit_bytes=vmem_limit),
        )(q, k, v, bias,
          w("Wq"), params["bq"], w("Wk"), params["bk"],
          w("Wv"), params["bv"], w("Wo"), params["bo"])

    try:
        return call(True)
    except Exception:
        # Fallback for JAX versions whose pipeline rejects Buffered(1):
        # identical kernel, default double-buffered invariant blocks.
        return call(False)


def _reference_mha(q, k, v, mask, params, *, n_heads):
    """Plain-JAX replica of the PyTorch forward (dropout = identity)."""
    B, S, D = q.shape
    d_k = D // n_heads
    Q = q @ params["Wq"] + params["bq"]
    K = k @ params["Wk"] + params["bk"]
    V = v @ params["Wv"] + params["bv"]
    Q = Q.reshape(B, S, n_heads, d_k).transpose(0, 2, 1, 3)
    K = K.reshape(B, S, n_heads, d_k).transpose(0, 2, 1, 3)
    V = V.reshape(B, S, n_heads, d_k).transpose(0, 2, 1, 3)
    scores = jnp.einsum("bhqd,bhkd->bhqk", Q, K) / math.sqrt(d_k)
    if mask is not None:
        scores = jnp.where(mask == 0, -1e9, scores)
    p = jax.nn.softmax(scores, axis=-1)
    ctx = jnp.einsum("bhqk,bhkd->bhqd", p, V)
    ctx = ctx.transpose(0, 2, 1, 3).reshape(B, S, D)
    return ctx @ params["Wo"] + params["bo"]


if __name__ == "__main__":
    B, S, D, H = 4, 8, 32, 4  # batch, seq, d_model, heads

    key = jax.random.PRNGKey(0)
    keys = jax.random.split(key, 12)

    # Deterministic parameter init (Linear(d_model, d_model) x4).
    # Weights stored pre-transposed: (in, out).
    scale = 1.0 / math.sqrt(D)
    params = {
        "Wq": jax.random.uniform(keys[0], (D, D), jnp.float32, -scale, scale),
        "bq": jax.random.uniform(keys[1], (1, D), jnp.float32, -scale, scale),
        "Wk": jax.random.uniform(keys[2], (D, D), jnp.float32, -scale, scale),
        "bk": jax.random.uniform(keys[3], (1, D), jnp.float32, -scale, scale),
        "Wv": jax.random.uniform(keys[4], (D, D), jnp.float32, -scale, scale),
        "bv": jax.random.uniform(keys[5], (1, D), jnp.float32, -scale, scale),
        "Wo": jax.random.uniform(keys[6], (D, D), jnp.float32, -scale, scale),
        "bo": jax.random.uniform(keys[7], (1, D), jnp.float32, -scale, scale),
    }

    q = jax.random.normal(keys[8], (B, S, D), jnp.float32)
    k = jax.random.normal(keys[9], (B, S, D), jnp.float32)
    v = jax.random.normal(keys[10], (B, S, D), jnp.float32)

    # 1) shared causal mask (1 = keep, 0 = masked), broadcast over batch/heads.
    causal = jnp.tril(jnp.ones((S, S), jnp.float32)).reshape(1, 1, S, S)
    ref = _reference_mha(q, k, v, causal, params, n_heads=H)
    out = jax.block_until_ready(
        multi_head_attention(q, k, v, causal, params, n_heads=H))
    assert out.shape == (B, S, D)
    # Tolerance covers the EUP approximate-reciprocal softmax denominator.
    assert jnp.allclose(out, ref, atol=2e-3, rtol=2e-3), "f32/causal mismatch"

    # 2) per-batch padding mask (exercises the per-batch additive-bias path).
    lens = jnp.array([8, 5, 3, 6], jnp.int32)
    pad = (jnp.arange(S)[None, :] < lens[:, None]).astype(jnp.float32)
    pad = pad.reshape(B, 1, 1, S)
    ref_pad = _reference_mha(q, k, v, pad, params, n_heads=H)
    out_pad = jax.block_until_ready(
        multi_head_attention(q, k, v, pad, params, n_heads=H))
    assert jnp.allclose(out_pad, ref_pad, atol=2e-3, rtol=2e-3), \
        "padding-mask mismatch"

    # 3) bf16-MXU path (recommended perf setting on v5e/v6e/v7x):
    #    bf16 operands, f32 accumulation.
    out_bf16 = jax.block_until_ready(
        multi_head_attention(q, k, v, causal, params, n_heads=H,
                             mxu_dtype=jnp.bfloat16))
    assert jnp.allclose(out_bf16, ref, atol=3e-2, rtol=3e-2), "bf16 mismatch"

    print("KERNEL_OK")
</pallas_src>

<mosaic_0001>
module attributes {stable_mosaic.version = 11 : i64} {
  func.func @_mha_kernel(%arg0: i32, %arg1: memref<1x8x32xf32, #tpu.memory_space<vmem>>, %arg2: memref<1x8x32xf32, #tpu.memory_space<vmem>>, %arg3: memref<1x8x32xf32, #tpu.memory_space<vmem>>, %arg4: memref<1x8x8xf32, #tpu.memory_space<vmem>>, %arg5: memref<32x32xf32, #tpu.memory_space<vmem>>, %arg6: memref<1x32xf32, #tpu.memory_space<vmem>>, %arg7: memref<32x32xf32, #tpu.memory_space<vmem>>, %arg8: memref<1x32xf32, #tpu.memory_space<vmem>>, %arg9: memref<32x32xf32, #tpu.memory_space<vmem>>, %arg10: memref<1x32xf32, #tpu.memory_space<vmem>>, %arg11: memref<32x32xf32, #tpu.memory_space<vmem>>, %arg12: memref<1x32xf32, #tpu.memory_space<vmem>>, %arg13: memref<1x8x32xf32, #tpu.memory_space<vmem>>) attributes {dimension_semantics = [#tpu.dimension_semantics<parallel>], iteration_bounds = array<i64: 4>, scalar_prefetch = 0 : i64, scratch_operands = 0 : i64, tpu.core_type = #tpu.core_type<tc>, window_params = [{transform_indices = @transform_0, window_bounds = array<i64: 1, 8, 32>}, {transform_indices = @transform_1, window_bounds = array<i64: 1, 8, 32>}, {transform_indices = @transform_2, window_bounds = array<i64: 1, 8, 32>}, {pipeline_mode = #tpu.pipeline_mode<synchronous>, transform_indices = @transform_3, window_bounds = array<i64: 1, 8, 8>}, {pipeline_mode = #tpu.pipeline_mode<synchronous>, transform_indices = @transform_4, window_bounds = array<i64: 32, 32>}, {pipeline_mode = #tpu.pipeline_mode<synchronous>, transform_indices = @transform_5, window_bounds = array<i64: 1, 32>}, {pipeline_mode = #tpu.pipeline_mode<synchronous>, transform_indices = @transform_6, window_bounds = array<i64: 32, 32>}, {pipeline_mode = #tpu.pipeline_mode<synchronous>, transform_indices = @transform_7, window_bounds = array<i64: 1, 32>}, {pipeline_mode = #tpu.pipeline_mode<synchronous>, transform_indices = @transform_8, window_bounds = array<i64: 32, 32>}, {pipeline_mode = #tpu.pipeline_mode<synchronous>, transform_indices = @transform_9, window_bounds = array<i64: 1, 32>}, {pipeline_mode = #tpu.pipeline_mode<synchronous>, transform_indices = @transform_10, window_bounds = array<i64: 32, 32>}, {pipeline_mode = #tpu.pipeline_mode<synchronous>, transform_indices = @transform_11, window_bounds = array<i64: 1, 32>}, {transform_indices = @transform_12, window_bounds = array<i64: 1, 8, 32>}]} {
    %c0 = arith.constant 0 : index
    %c0_0 = arith.constant 0 : index
    %c0_1 = arith.constant 0 : index
    %0 = vector.load %arg1[%c0, %c0_0, %c0_1] : memref<1x8x32xf32, #tpu.memory_space<vmem>>, vector<1x8x32xf32>
    %1 = vector.shape_cast %0 : vector<1x8x32xf32> to vector<8x32xf32>
    %c0_2 = arith.constant 0 : index
    %c0_3 = arith.constant 0 : index
    %2 = vector.load %arg5[%c0_2, %c0_3] : memref<32x32xf32, #tpu.memory_space<vmem>>, vector<32x32xf32>
    %cst = arith.constant dense<0.000000e+00> : vector<8x32xf32>
    %3 = tpu.matmul %1, %2, %cst {dimension_numbers = #tpu.dot_dimension_numbers<[1], [0], [0], [1], [0, 0, 1, 1], [], []>} : vector<8x32xf32>, vector<32x32xf32>, vector<8x32xf32> -> vector<8x32xf32>
    %c0_4 = arith.constant 0 : index
    %c0_5 = arith.constant 0 : index
    %4 = vector.load %arg6[%c0_4, %c0_5] : memref<1x32xf32, #tpu.memory_space<vmem>>, vector<1x32xf32>
    %5 = vector.broadcast %4 : vector<1x32xf32> to vector<8x32xf32>
    %6 = arith.addf %3, %5 : vector<8x32xf32>
    %cst_6 = arith.constant 0.353553385 : f32
    %7 = vector.broadcast %cst_6 : f32 to vector<8x32xf32>
    %8 = arith.mulf %6, %7 : vector<8x32xf32>
    %9 = vector.shape_cast %8 : vector<8x32xf32> to vector<1x8x32xf32>
    %c0_7 = arith.constant 0 : index
    %c0_8 = arith.constant 0 : index
    %c0_9 = arith.constant 0 : index
    %10 = vector.load %arg2[%c0_7, %c0_8, %c0_9] : memref<1x8x32xf32, #tpu.memory_space<vmem>>, vector<1x8x32xf32>
    %11 = vector.shape_cast %10 : vector<1x8x32xf32> to vector<8x32xf32>
    %c0_10 = arith.constant 0 : index
    %c0_11 = arith.constant 0 : index
    %12 = vector.load %arg7[%c0_10, %c0_11] : memref<32x32xf32, #tpu.memory_space<vmem>>, vector<32x32xf32>
    %cst_12 = arith.constant dense<0.000000e+00> : vector<8x32xf32>
    %13 = tpu.matmul %11, %12, %cst_12 {dimension_numbers = #tpu.dot_dimension_numbers<[1], [0], [0], [1], [0, 0, 1, 1], [], []>} : vector<8x32xf32>, vector<32x32xf32>, vector<8x32xf32> -> vector<8x32xf32>
    %c0_13 = arith.constant 0 : index
    %c0_14 = arith.constant 0 : index
    %14 = vector.load %arg8[%c0_13, %c0_14] : memref<1x32xf32, #tpu.memory_space<vmem>>, vector<1x32xf32>
    %15 = vector.broadcast %14 : vector<1x32xf32> to vector<8x32xf32>
    %16 = arith.addf %13, %15 : vector<8x32xf32>
    %17 = vector.shape_cast %16 : vector<8x32xf32> to vector<1x8x32xf32>
    %c0_15 = arith.constant 0 : index
    %c0_16 = arith.constant 0 : index
    %c0_17 = arith.constant 0 : index
    %18 = vector.load %arg3[%c0_15, %c0_16, %c0_17] : memref<1x8x32xf32, #tpu.memory_space<vmem>>, vector<1x8x32xf32>
    %19 = vector.shape_cast %18 : vector<1x8x32xf32> to vector<8x32xf32>
    %c0_18 = arith.constant 0 : index
    %c0_19 = arith.constant 0 : index
    %20 = vector.load %arg9[%c0_18, %c0_19] : memref<32x32xf32, #tpu.memory_space<vmem>>, vector<32x32xf32>
    %cst_20 = arith.constant dense<0.000000e+00> : vector<8x32xf32>
    %21 = tpu.matmul %19, %20, %cst_20 {dimension_numbers = #tpu.dot_dimension_numbers<[1], [0], [0], [1], [0, 0, 1, 1], [], []>} : vector<8x32xf32>, vector<32x32xf32>, vector<8x32xf32> -> vector<8x32xf32>
    %c0_21 = arith.constant 0 : index
    %c0_22 = arith.constant 0 : index
    %22 = vector.load %arg10[%c0_21, %c0_22] : memref<1x32xf32, #tpu.memory_space<vmem>>, vector<1x32xf32>
    %23 = vector.broadcast %22 : vector<1x32xf32> to vector<8x32xf32>
    %24 = arith.addf %21, %23 : vector<8x32xf32>
    %25 = vector.shape_cast %24 : vector<8x32xf32> to vector<1x8x32xf32>
    %c0_23 = arith.constant 0 : index
    %c0_24 = arith.constant 0 : index
    %c0_25 = arith.constant 0 : index
    %26 = vector.load %arg4[%c0_23, %c0_24, %c0_25] : memref<1x8x8xf32, #tpu.memory_space<vmem>>, vector<1x8x8xf32>
    %27 = vector.extract_strided_slice %9 {offsets = [0, 0, 0], sizes = [1, 8, 8], strides = [1, 1, 1]} : vector<1x8x32xf32> to vector<1x8x8xf32>
    %28 = vector.extract_strided_slice %17 {offsets = [0, 0, 0], sizes = [1, 8, 8], strides = [1, 1, 1]} : vector<1x8x32xf32> to vector<1x8x8xf32>
    %29 = vector.extract_strided_slice %25 {offsets = [0, 0, 0], sizes = [1, 8, 8], strides = [1, 1, 1]} : vector<1x8x32xf32> to vector<1x8x8xf32>
    "tpu.trace_start"() <{level = 10 : i32, message = "bqd,bkd->bqk"}> : () -> ()
    %cst_26 = arith.constant dense<0.000000e+00> : vector<1x8x8xf32>
    %30 = tpu.matmul %27, %28, %cst_26 {dimension_numbers = #tpu.dot_dimension_numbers<[2], [2], [1], [1], [0, 0, 0, 1, 1, 1], [0], [0]>} : vector<1x8x8xf32>, vector<1x8x8xf32>, vector<1x8x8xf32> -> vector<1x8x8xf32>
    "tpu.trace_stop"() : () -> ()
    %31 = arith.addf %30, %26 : vector<1x8x8xf32>
    %cst_27 = arith.constant dense<0xFF800000> : vector<1x8xf32>
    %32 = vector.multi_reduction <maximumf>, %31, %cst_27 [2] : vector<1x8x8xf32> to vector<1x8xf32>
    %33 = vector.shape_cast %32 : vector<1x8xf32> to vector<1x8x1xf32>
    %34 = vector.broadcast %33 : vector<1x8x1xf32> to vector<1x8x8xf32>
    %35 = arith.subf %31, %34 : vector<1x8x8xf32>
    %36 = math.exp %35 : vector<1x8x8xf32>
    %cst_28 = arith.constant dense<0.000000e+00> : vector<1x8xf32>
    %37 = vector.multi_reduction <add>, %36, %cst_28 [2] : vector<1x8x8xf32> to vector<1x8xf32>
    %38 = vector.shape_cast %37 : vector<1x8xf32> to vector<1x8x1xf32>
    %39 = tpu.reciprocal %38 {approx = true} : vector<1x8x1xf32> -> vector<1x8x1xf32>
    %40 = vector.broadcast %39 : vector<1x8x1xf32> to vector<1x8x8xf32>
    %41 = arith.mulf %36, %40 : vector<1x8x8xf32>
    "tpu.trace_start"() <{level = 10 : i32, message = "bqk,bkd->bqd"}> : () -> ()
    %cst_29 = arith.constant dense<0.000000e+00> : vector<1x8x8xf32>
    %42 = tpu.matmul %41, %29, %cst_29 {dimension_numbers = #tpu.dot_dimension_numbers<[2], [1], [1], [2], [0, 0, 0, 1, 1, 2], [0], [0]>} : vector<1x8x8xf32>, vector<1x8x8xf32>, vector<1x8x8xf32> -> vector<1x8x8xf32>
    "tpu.trace_stop"() : () -> ()
    %43 = vector.extract_strided_slice %9 {offsets = [0, 0, 8], sizes = [1, 8, 8], strides = [1, 1, 1]} : vector<1x8x32xf32> to vector<1x8x8xf32>
    %44 = vector.extract_strided_slice %17 {offsets = [0, 0, 8], sizes = [1, 8, 8], strides = [1, 1, 1]} : vector<1x8x32xf32> to vector<1x8x8xf32>
    %45 = vector.extract_strided_slice %25 {offsets = [0, 0, 8], sizes = [1, 8, 8], strides = [1, 1, 1]} : vector<1x8x32xf32> to vector<1x8x8xf32>
    "tpu.trace_start"() <{level = 10 : i32, message = "bqd,bkd->bqk"}> : () -> ()
    %cst_30 = arith.constant dense<0.000000e+00> : vector<1x8x8xf32>
    %46 = tpu.matmul %43, %44, %cst_30 {dimension_numbers = #tpu.dot_dimension_numbers<[2], [2], [1], [1], [0, 0, 0, 1, 1, 1], [0], [0]>} : vector<1x8x8xf32>, vector<1x8x8xf32>, vector<1x8x8xf32> -> vector<1x8x8xf32>
    "tpu.trace_stop"() : () -> ()
    %47 = arith.addf %46, %26 : vector<1x8x8xf32>
    %cst_31 = arith.constant dense<0xFF800000> : vector<1x8xf32>
    %48 = vector.multi_reduction <maximumf>, %47, %cst_31 [2] : vector<1x8x8xf32> to vector<1x8xf32>
    %49 = vector.shape_cast %48 : vector<1x8xf32> to vector<1x8x1xf32>
    %50 = vector.broadcast %49 : vector<1x8x1xf32> to vector<1x8x8xf32>
    %51 = arith.subf %47, %50 : vector<1x8x8xf32>
    %52 = math.exp %51 : vector<1x8x8xf32>
    %cst_32 = arith.constant dense<0.000000e+00> : vector<1x8xf32>
    %53 = vector.multi_reduction <add>, %52, %cst_32 [2] : vector<1x8x8xf32> to vector<1x8xf32>
    %54 = vector.shape_cast %53 : vector<1x8xf32> to vector<1x8x1xf32>
    %55 = tpu.reciprocal %54 {approx = true} : vector<1x8x1xf32> -> vector<1x8x1xf32>
    %56 = vector.broadcast %55 : vector<1x8x1xf32> to vector<1x8x8xf32>
    %57 = arith.mulf %52, %56 : vector<1x8x8xf32>
    "tpu.trace_start"() <{level = 10 : i32, message = "bqk,bkd->bqd"}> : () -> ()
    %cst_33 = arith.constant dense<0.000000e+00> : vector<1x8x8xf32>
    %58 = tpu.matmul %57, %45, %cst_33 {dimension_numbers = #tpu.dot_dimension_numbers<[2], [1], [1], [2], [0, 0, 0, 1, 1, 2], [0], [0]>} : vector<1x8x8xf32>, vector<1x8x8xf32>, vector<1x8x8xf32> -> vector<1x8x8xf32>
    "tpu.trace_stop"() : () -> ()
    %59 = vector.extract_strided_slice %9 {offsets = [0, 0, 16], sizes = [1, 8, 8], strides = [1, 1, 1]} : vector<1x8x32xf32> to vector<1x8x8xf32>
    %60 = vector.extract_strided_slice %17 {offsets = [0, 0, 16], sizes = [1, 8, 8], strides = [1, 1, 1]} : vector<1x8x32xf32> to vector<1x8x8xf32>
    %61 = vector.extract_strided_slice %25 {offsets = [0, 0, 16], sizes = [1, 8, 8], strides = [1, 1, 1]} : vector<1x8x32xf32> to vector<1x8x8xf32>
    "tpu.trace_start"() <{level = 10 : i32, message = "bqd,bkd->bqk"}> : () -> ()
    %cst_34 = arith.constant dense<0.000000e+00> : vector<1x8x8xf32>
    %62 = tpu.matmul %59, %60, %cst_34 {dimension_numbers = #tpu.dot_dimension_numbers<[2], [2], [1], [1], [0, 0, 0, 1, 1, 1], [0], [0]>} : vector<1x8x8xf32>, vector<1x8x8xf32>, vector<1x8x8xf32> -> vector<1x8x8xf32>
    "tpu.trace_stop"() : () -> ()
    %63 = arith.addf %62, %26 : vector<1x8x8xf32>
    %cst_35 = arith.constant dense<0xFF800000> : vector<1x8xf32>
    %64 = vector.multi_reduction <maximumf>, %63, %cst_35 [2] : vector<1x8x8xf32> to vector<1x8xf32>
    %65 = vector.shape_cast %64 : vector<1x8xf32> to vector<1x8x1xf32>
    %66 = vector.broadcast %65 : vector<1x8x1xf32> to vector<1x8x8xf32>
    %67 = arith.subf %63, %66 : vector<1x8x8xf32>
    %68 = math.exp %67 : vector<1x8x8xf32>
    %cst_36 = arith.constant dense<0.000000e+00> : vector<1x8xf32>
    %69 = vector.multi_reduction <add>, %68, %cst_36 [2] : vector<1x8x8xf32> to vector<1x8xf32>
    %70 = vector.shape_cast %69 : vector<1x8xf32> to vector<1x8x1xf32>
    %71 = tpu.reciprocal %70 {approx = true} : vector<1x8x1xf32> -> vector<1x8x1xf32>
    %72 = vector.broadcast %71 : vector<1x8x1xf32> to vector<1x8x8xf32>
    %73 = arith.mulf %68, %72 : vector<1x8x8xf32>
    "tpu.trace_start"() <{level = 10 : i32, message = "bqk,bkd->bqd"}> : () -> ()
    %cst_37 = arith.constant dense<0.000000e+00> : vector<1x8x8xf32>
    %74 = tpu.matmul %73, %61, %cst_37 {dimension_numbers = #tpu.dot_dimension_numbers<[2], [1], [1], [2], [0, 0, 0, 1, 1, 2], [0], [0]>} : vector<1x8x8xf32>, vector<1x8x8xf32>, vector<1x8x8xf32> -> vector<1x8x8xf32>
    "tpu.trace_stop"() : () -> ()
    %75 = vector.extract_strided_slice %9 {offsets = [0, 0, 24], sizes = [1, 8, 8], strides = [1, 1, 1]} : vector<1x8x32xf32> to vector<1x8x8xf32>
    %76 = vector.extract_strided_slice %17 {offsets = [0, 0, 24], sizes = [1, 8, 8], strides = [1, 1, 1]} : vector<1x8x32xf32> to vector<1x8x8xf32>
    %77 = vector.extract_strided_slice %25 {offsets = [0, 0, 24], sizes = [1, 8, 8], strides = [1, 1, 1]} : vector<1x8x32xf32> to vector<1x8x8xf32>
    "tpu.trace_start"() <{level = 10 : i32, message = "bqd,bkd->bqk"}> : () -> ()
    %cst_38 = arith.constant dense<0.000000e+00> : vector<1x8x8xf32>
    %78 = tpu.matmul %75, %76, %cst_38 {dimension_numbers = #tpu.dot_dimension_numbers<[2], [2], [1], [1], [0, 0, 0, 1, 1, 1], [0], [0]>} : vector<1x8x8xf32>, vector<1x8x8xf32>, vector<1x8x8xf32> -> vector<1x8x8xf32>
    "tpu.trace_stop"() : () -> ()
    %79 = arith.addf %78, %26 : vector<1x8x8xf32>
    %cst_39 = arith.constant dense<0xFF800000> : vector<1x8xf32>
    %80 = vector.multi_reduction <maximumf>, %79, %cst_39 [2] : vector<1x8x8xf32> to vector<1x8xf32>
    %81 = vector.shape_cast %80 : vector<1x8xf32> to vector<1x8x1xf32>
    %82 = vector.broadcast %81 : vector<1x8x1xf32> to vector<1x8x8xf32>
    %83 = arith.subf %79, %82 : vector<1x8x8xf32>
    %84 = math.exp %83 : vector<1x8x8xf32>
    %cst_40 = arith.constant dense<0.000000e+00> : vector<1x8xf32>
    %85 = vector.multi_reduction <add>, %84, %cst_40 [2] : vector<1x8x8xf32> to vector<1x8xf32>
    %86 = vector.shape_cast %85 : vector<1x8xf32> to vector<1x8x1xf32>
    %87 = tpu.reciprocal %86 {approx = true} : vector<1x8x1xf32> -> vector<1x8x1xf32>
    %88 = vector.broadcast %87 : vector<1x8x1xf32> to vector<1x8x8xf32>
    %89 = arith.mulf %84, %88 : vector<1x8x8xf32>
    "tpu.trace_start"() <{level = 10 : i32, message = "bqk,bkd->bqd"}> : () -> ()
    %cst_41 = arith.constant dense<0.000000e+00> : vector<1x8x8xf32>
    %90 = tpu.matmul %89, %77, %cst_41 {dimension_numbers = #tpu.dot_dimension_numbers<[2], [1], [1], [2], [0, 0, 0, 1, 1, 2], [0], [0]>} : vector<1x8x8xf32>, vector<1x8x8xf32>, vector<1x8x8xf32> -> vector<1x8x8xf32>
    "tpu.trace_stop"() : () -> ()
    %91 = tpu.concatenate %42, %58, %74, %90 in 2 : vector<1x8x8xf32>, vector<1x8x8xf32>, vector<1x8x8xf32>, vector<1x8x8xf32> -> vector<1x8x32xf32>
    %92 = vector.shape_cast %91 : vector<1x8x32xf32> to vector<8x32xf32>
    %c0_42 = arith.constant 0 : index
    %c0_43 = arith.constant 0 : index
    %93 = vector.load %arg11[%c0_42, %c0_43] : memref<32x32xf32, #tpu.memory_space<vmem>>, vector<32x32xf32>
    %cst_44 = arith.constant dense<0.000000e+00> : vector<8x32xf32>
    %94 = tpu.matmul %92, %93, %cst_44 {dimension_numbers = #tpu.dot_dimension_numbers<[1], [0], [0], [1], [0, 0, 1, 1], [], []>} : vector<8x32xf32>, vector<32x32xf32>, vector<8x32xf32> -> vector<8x32xf32>
    %c0_45 = arith.constant 0 : index
    %c0_46 = arith.constant 0 : index
    %95 = vector.load %arg12[%c0_45, %c0_46] : memref<1x32xf32, #tpu.memory_space<vmem>>, vector<1x32xf32>
    %96 = vector.broadcast %95 : vector<1x32xf32> to vector<8x32xf32>
    %97 = arith.addf %94, %96 : vector<8x32xf32>
    %98 = vector.shape_cast %97 : vector<8x32xf32> to vector<1x8x32xf32>
    %c0_47 = arith.constant 0 : index
    %c0_48 = arith.constant 0 : index
    %c0_49 = arith.constant 0 : index
    %99 = vector.load %arg13[%c0_47, %c0_48, %c0_49] : memref<1x8x32xf32, #tpu.memory_space<vmem>>, vector<1x8x32xf32>
    tpu.vector_store %arg13[%c0_47, %c0_48, %c0_49], %98 {strides = array<i32>} : memref<1x8x32xf32, #tpu.memory_space<vmem>>, vector<1x8x32xf32>,
    return
  }
  func.func @transform_0(%arg0: i32) -> (i32, i32, i32) {
    %c0_i32 = arith.constant 0 : i32
    %c0_i32_0 = arith.constant 0 : i32
    %c0_i32_1 = arith.constant 0 : i32
    return %arg0, %c0_i32, %c0_i32_0 : i32, i32, i32
  }
  func.func @transform_1(%arg0: i32) -> (i32, i32, i32) {
    %c0_i32 = arith.constant 0 : i32
    %c0_i32_0 = arith.constant 0 : i32
    %c0_i32_1 = arith.constant 0 : i32
    return %arg0, %c0_i32, %c0_i32_0 : i32, i32, i32
  }
  func.func @transform_2(%arg0: i32) -> (i32, i32, i32) {
    %c0_i32 = arith.constant 0 : i32
    %c0_i32_0 = arith.constant 0 : i32
    %c0_i32_1 = arith.constant 0 : i32
    return %arg0, %c0_i32, %c0_i32_0 : i32, i32, i32
  }
  func.func @transform_3(%arg0: i32) -> (i32, i32, i32) {
    %c0_i32 = arith.constant 0 : i32
    %c0_i32_0 = arith.constant 0 : i32
    %c0_i32_1 = arith.constant 0 : i32
    %c0_i32_2 = arith.constant 0 : i32
    return %c0_i32, %c0_i32_0, %c0_i32_1 : i32, i32, i32
  }
  func.func @transform_4(%arg0: i32) -> (i32, i32) {
    %c0_i32 = arith.constant 0 : i32
    %c0_i32_0 = arith.constant 0 : i32
    %c0_i32_1 = arith.constant 0 : i32
    return %c0_i32, %c0_i32_0 : i32, i32
  }
  func.func @transform_5(%arg0: i32) -> (i32, i32) {
    %c0_i32 = arith.constant 0 : i32
    %c0_i32_0 = arith.constant 0 : i32
    %c0_i32_1 = arith.constant 0 : i32
    return %c0_i32, %c0_i32_0 : i32, i32
  }
  func.func @transform_6(%arg0: i32) -> (i32, i32) {
    %c0_i32 = arith.constant 0 : i32
    %c0_i32_0 = arith.constant 0 : i32
    %c0_i32_1 = arith.constant 0 : i32
    return %c0_i32, %c0_i32_0 : i32, i32
  }
  func.func @transform_7(%arg0: i32) -> (i32, i32) {
    %c0_i32 = arith.constant 0 : i32
    %c0_i32_0 = arith.constant 0 : i32
    %c0_i32_1 = arith.constant 0 : i32
    return %c0_i32, %c0_i32_0 : i32, i32
  }
  func.func @transform_8(%arg0: i32) -> (i32, i32) {
    %c0_i32 = arith.constant 0 : i32
    %c0_i32_0 = arith.constant 0 : i32
    %c0_i32_1 = arith.constant 0 : i32
    return %c0_i32, %c0_i32_0 : i32, i32
  }
  func.func @transform_9(%arg0: i32) -> (i32, i32) {
    %c0_i32 = arith.constant 0 : i32
    %c0_i32_0 = arith.constant 0 : i32
    %c0_i32_1 = arith.constant 0 : i32
    return %c0_i32, %c0_i32_0 : i32, i32
  }
  func.func @transform_10(%arg0: i32) -> (i32, i32) {
    %c0_i32 = arith.constant 0 : i32
    %c0_i32_0 = arith.constant 0 : i32
    %c0_i32_1 = arith.constant 0 : i32
    return %c0_i32, %c0_i32_0 : i32, i32
  }
  func.func @transform_11(%arg0: i32) -> (i32, i32) {
    %c0_i32 = arith.constant 0 : i32
    %c0_i32_0 = arith.constant 0 : i32
    %c0_i32_1 = arith.constant 0 : i32
    return %c0_i32, %c0_i32_0 : i32, i32
  }
  func.func @transform_12(%arg0: i32) -> (i32, i32, i32) {
    %c0_i32 = arith.constant 0 : i32
    %c0_i32_0 = arith.constant 0 : i32
    %c0_i32_1 = arith.constant 0 : i32
    return %arg0, %c0_i32, %c0_i32_0 : i32, i32, i32
  }
}

module attributes {stable_mosaic.version = 11 : i64} {
  func.func @_mha_kernel(%arg0: i32, %arg1: memref<1x8x32xf32, #tpu.memory_space<vmem>>, %arg2: memref<1x8x32xf32, #tpu.memory_space<vmem>>, %arg3: memref<1x8x32xf32, #tpu.memory_space<vmem>>, %arg4: memref<1x8x8xf32, #tpu.memory_space<vmem>>, %arg5: memref<32x32xf32, #tpu.memory_space<vmem>>, %arg6: memref<1x32xf32, #tpu.memory_space<vmem>>, %arg7: memref<32x32xf32, #tpu.memory_space<vmem>>, %arg8: memref<1x32xf32, #tpu.memory_space<vmem>>, %arg9: memref<32x32xf32, #tpu.memory_space<vmem>>, %arg10: memref<1x32xf32, #tpu.memory_space<vmem>>, %arg11: memref<32x32xf32, #tpu.memory_space<vmem>>, %arg12: memref<1x32xf32, #tpu.memory_space<vmem>>, %arg13: memref<1x8x32xf32, #tpu.memory_space<vmem>>) attributes {dimension_semantics = [#tpu.dimension_semantics<parallel>], iteration_bounds = array<i64: 4>, scalar_prefetch = 0 : i64, scratch_operands = 0 : i64, tpu.core_type = #tpu.core_type<tc>, window_params = [{transform_indices = @transform_0, window_bounds = array<i64: 1, 8, 32>}, {transform_indices = @transform_1, window_bounds = array<i64: 1, 8, 32>}, {transform_indices = @transform_2, window_bounds = array<i64: 1, 8, 32>}, {pipeline_mode = #tpu.pipeline_mode<synchronous>, transform_indices = @transform_3, window_bounds = array<i64: 1, 8, 8>}, {pipeline_mode = #tpu.pipeline_mode<synchronous>, transform_indices = @transform_4, window_bounds = array<i64: 32, 32>}, {pipeline_mode = #tpu.pipeline_mode<synchronous>, transform_indices = @transform_5, window_bounds = array<i64: 1, 32>}, {pipeline_mode = #tpu.pipeline_mode<synchronous>, transform_indices = @transform_6, window_bounds = array<i64: 32, 32>}, {pipeline_mode = #tpu.pipeline_mode<synchronous>, transform_indices = @transform_7, window_bounds = array<i64: 1, 32>}, {pipeline_mode = #tpu.pipeline_mode<synchronous>, transform_indices = @transform_8, window_bounds = array<i64: 32, 32>}, {pipeline_mode = #tpu.pipeline_mode<synchronous>, transform_indices = @transform_9, window_bounds = array<i64: 1, 32>}, {pipeline_mode = #tpu.pipeline_mode<synchronous>, transform_indices = @transform_10, window_bounds = array<i64: 32, 32>}, {pipeline_mode = #tpu.pipeline_mode<synchronous>, transform_indices = @transform_11, window_bounds = array<i64: 1, 32>}, {transform_indices = @transform_12, window_bounds = array<i64: 1, 8, 32>}]} {
    %c0 = arith.constant 0 : index
    %c0_0 = arith.constant 0 : index
    %c0_1 = arith.constant 0 : index
    %0 = vector.load %arg1[%c0, %c0_0, %c0_1] : memref<1x8x32xf32, #tpu.memory_space<vmem>>, vector<1x8x32xf32>
    %1 = vector.shape_cast %0 : vector<1x8x32xf32> to vector<8x32xf32>
    %c0_2 = arith.constant 0 : index
    %c0_3 = arith.constant 0 : index
    %2 = vector.load %arg5[%c0_2, %c0_3] : memref<32x32xf32, #tpu.memory_space<vmem>>, vector<32x32xf32>
    %cst = arith.constant dense<0.000000e+00> : vector<8x32xf32>
    %3 = tpu.matmul %1, %2, %cst {dimension_numbers = #tpu.dot_dimension_numbers<[1], [0], [0], [1], [0, 0, 1, 1], [], []>} : vector<8x32xf32>, vector<32x32xf32>, vector<8x32xf32> -> vector<8x32xf32>
    %c0_4 = arith.constant 0 : index
    %c0_5 = arith.constant 0 : index
    %4 = vector.load %arg6[%c0_4, %c0_5] : memref<1x32xf32, #tpu.memory_space<vmem>>, vector<1x32xf32>
    %5 = vector.broadcast %4 : vector<1x32xf32> to vector<8x32xf32>
    %6 = arith.addf %3, %5 : vector<8x32xf32>
    %cst_6 = arith.constant 0.353553385 : f32
    %7 = vector.broadcast %cst_6 : f32 to vector<8x32xf32>
    %8 = arith.mulf %6, %7 : vector<8x32xf32>
    %9 = vector.shape_cast %8 : vector<8x32xf32> to vector<1x8x32xf32>
    %c0_7 = arith.constant 0 : index
    %c0_8 = arith.constant 0 : index
    %c0_9 = arith.constant 0 : index
    %10 = vector.load %arg2[%c0_7, %c0_8, %c0_9] : memref<1x8x32xf32, #tpu.memory_space<vmem>>, vector<1x8x32xf32>
    %11 = vector.shape_cast %10 : vector<1x8x32xf32> to vector<8x32xf32>
    %c0_10 = arith.constant 0 : index
    %c0_11 = arith.constant 0 : index
    %12 = vector.load %arg7[%c0_10, %c0_11] : memref<32x32xf32, #tpu.memory_space<vmem>>, vector<32x32xf32>
    %cst_12 = arith.constant dense<0.000000e+00> : vector<8x32xf32>
    %13 = tpu.matmul %11, %12, %cst_12 {dimension_numbers = #tpu.dot_dimension_numbers<[1], [0], [0], [1], [0, 0, 1, 1], [], []>} : vector<8x32xf32>, vector<32x32xf32>, vector<8x32xf32> -> vector<8x32xf32>
    %c0_13 = arith.constant 0 : index
    %c0_14 = arith.constant 0 : index
    %14 = vector.load %arg8[%c0_13, %c0_14] : memref<1x32xf32, #tpu.memory_space<vmem>>, vector<1x32xf32>
    %15 = vector.broadcast %14 : vector<1x32xf32> to vector<8x32xf32>
    %16 = arith.addf %13, %15 : vector<8x32xf32>
    %17 = vector.shape_cast %16 : vector<8x32xf32> to vector<1x8x32xf32>
    %c0_15 = arith.constant 0 : index
    %c0_16 = arith.constant 0 : index
    %c0_17 = arith.constant 0 : index
    %18 = vector.load %arg3[%c0_15, %c0_16, %c0_17] : memref<1x8x32xf32, #tpu.memory_space<vmem>>, vector<1x8x32xf32>
    %19 = vector.shape_cast %18 : vector<1x8x32xf32> to vector<8x32xf32>
    %c0_18 = arith.constant 0 : index
    %c0_19 = arith.constant 0 : index
    %20 = vector.load %arg9[%c0_18, %c0_19] : memref<32x32xf32, #tpu.memory_space<vmem>>, vector<32x32xf32>
    %cst_20 = arith.constant dense<0.000000e+00> : vector<8x32xf32>
    %21 = tpu.matmul %19, %20, %cst_20 {dimension_numbers = #tpu.dot_dimension_numbers<[1], [0], [0], [1], [0, 0, 1, 1], [], []>} : vector<8x32xf32>, vector<32x32xf32>, vector<8x32xf32> -> vector<8x32xf32>
    %c0_21 = arith.constant 0 : index
    %c0_22 = arith.constant 0 : index
    %22 = vector.load %arg10[%c0_21, %c0_22] : memref<1x32xf32, #tpu.memory_space<vmem>>, vector<1x32xf32>
    %23 = vector.broadcast %22 : vector<1x32xf32> to vector<8x32xf32>
    %24 = arith.addf %21, %23 : vector<8x32xf32>
    %25 = vector.shape_cast %24 : vector<8x32xf32> to vector<1x8x32xf32>
    %c0_23 = arith.constant 0 : index
    %c0_24 = arith.constant 0 : index
    %c0_25 = arith.constant 0 : index
    %26 = vector.load %arg4[%c0_23, %c0_24, %c0_25] : memref<1x8x8xf32, #tpu.memory_space<vmem>>, vector<1x8x8xf32>
    %27 = vector.extract_strided_slice %9 {offsets = [0, 0, 0], sizes = [1, 8, 8], strides = [1, 1, 1]} : vector<1x8x32xf32> to vector<1x8x8xf32>
    %28 = vector.extract_strided_slice %17 {offsets = [0, 0, 0], sizes = [1, 8, 8], strides = [1, 1, 1]} : vector<1x8x32xf32> to vector<1x8x8xf32>
    %29 = vector.extract_strided_slice %25 {offsets = [0, 0, 0], sizes = [1, 8, 8], strides = [1, 1, 1]} : vector<1x8x32xf32> to vector<1x8x8xf32>
    "tpu.trace_start"() <{level = 10 : i32, message = "bqd,bkd->bqk"}> : () -> ()
    %cst_26 = arith.constant dense<0.000000e+00> : vector<1x8x8xf32>
    %30 = tpu.matmul %27, %28, %cst_26 {dimension_numbers = #tpu.dot_dimension_numbers<[2], [2], [1], [1], [0, 0, 0, 1, 1, 1], [0], [0]>} : vector<1x8x8xf32>, vector<1x8x8xf32>, vector<1x8x8xf32> -> vector<1x8x8xf32>
    "tpu.trace_stop"() : () -> ()
    %31 = arith.addf %30, %26 : vector<1x8x8xf32>
    %cst_27 = arith.constant dense<0xFF800000> : vector<1x8xf32>
    %32 = vector.multi_reduction <maximumf>, %31, %cst_27 [2] : vector<1x8x8xf32> to vector<1x8xf32>
    %33 = vector.shape_cast %32 : vector<1x8xf32> to vector<1x8x1xf32>
    %34 = vector.broadcast %33 : vector<1x8x1xf32> to vector<1x8x8xf32>
    %35 = arith.subf %31, %34 : vector<1x8x8xf32>
    %36 = math.exp %35 : vector<1x8x8xf32>
    %cst_28 = arith.constant dense<0.000000e+00> : vector<1x8xf32>
    %37 = vector.multi_reduction <add>, %36, %cst_28 [2] : vector<1x8x8xf32> to vector<1x8xf32>
    %38 = vector.shape_cast %37 : vector<1x8xf32> to vector<1x8x1xf32>
    %39 = tpu.reciprocal %38 {approx = true} : vector<1x8x1xf32> -> vector<1x8x1xf32>
    %40 = vector.broadcast %39 : vector<1x8x1xf32> to vector<1x8x8xf32>
    %41 = arith.mulf %36, %40 : vector<1x8x8xf32>
    "tpu.trace_start"() <{level = 10 : i32, message = "bqk,bkd->bqd"}> : () -> ()
    %cst_29 = arith.constant dense<0.000000e+00> : vector<1x8x8xf32>
    %42 = tpu.matmul %41, %29, %cst_29 {dimension_numbers = #tpu.dot_dimension_numbers<[2], [1], [1], [2], [0, 0, 0, 1, 1, 2], [0], [0]>} : vector<1x8x8xf32>, vector<1x8x8xf32>, vector<1x8x8xf32> -> vector<1x8x8xf32>
    "tpu.trace_stop"() : () -> ()
    %43 = vector.extract_strided_slice %9 {offsets = [0, 0, 8], sizes = [1, 8, 8], strides = [1, 1, 1]} : vector<1x8x32xf32> to vector<1x8x8xf32>
    %44 = vector.extract_strided_slice %17 {offsets = [0, 0, 8], sizes = [1, 8, 8], strides = [1, 1, 1]} : vector<1x8x32xf32> to vector<1x8x8xf32>
    %45 = vector.extract_strided_slice %25 {offsets = [0, 0, 8], sizes = [1, 8, 8], strides = [1, 1, 1]} : vector<1x8x32xf32> to vector<1x8x8xf32>
    "tpu.trace_start"() <{level = 10 : i32, message = "bqd,bkd->bqk"}> : () -> ()
    %cst_30 = arith.constant dense<0.000000e+00> : vector<1x8x8xf32>
    %46 = tpu.matmul %43, %44, %cst_30 {dimension_numbers = #tpu.dot_dimension_numbers<[2], [2], [1], [1], [0, 0, 0, 1, 1, 1], [0], [0]>} : vector<1x8x8xf32>, vector<1x8x8xf32>, vector<1x8x8xf32> -> vector<1x8x8xf32>
    "tpu.trace_stop"() : () -> ()
    %47 = arith.addf %46, %26 : vector<1x8x8xf32>
    %cst_31 = arith.constant dense<0xFF800000> : vector<1x8xf32>
    %48 = vector.multi_reduction <maximumf>, %47, %cst_31 [2] : vector<1x8x8xf32> to vector<1x8xf32>
    %49 = vector.shape_cast %48 : vector<1x8xf32> to vector<1x8x1xf32>
    %50 = vector.broadcast %49 : vector<1x8x1xf32> to vector<1x8x8xf32>
    %51 = arith.subf %47, %50 : vector<1x8x8xf32>
    %52 = math.exp %51 : vector<1x8x8xf32>
    %cst_32 = arith.constant dense<0.000000e+00> : vector<1x8xf32>
    %53 = vector.multi_reduction <add>, %52, %cst_32 [2] : vector<1x8x8xf32> to vector<1x8xf32>
    %54 = vector.shape_cast %53 : vector<1x8xf32> to vector<1x8x1xf32>
    %55 = tpu.reciprocal %54 {approx = true} : vector<1x8x1xf32> -> vector<1x8x1xf32>
    %56 = vector.broadcast %55 : vector<1x8x1xf32> to vector<1x8x8xf32>
    %57 = arith.mulf %52, %56 : vector<1x8x8xf32>
    "tpu.trace_start"() <{level = 10 : i32, message = "bqk,bkd->bqd"}> : () -> ()
    %cst_33 = arith.constant dense<0.000000e+00> : vector<1x8x8xf32>
    %58 = tpu.matmul %57, %45, %cst_33 {dimension_numbers = #tpu.dot_dimension_numbers<[2], [1], [1], [2], [0, 0, 0, 1, 1, 2], [0], [0]>} : vector<1x8x8xf32>, vector<1x8x8xf32>, vector<1x8x8xf32> -> vector<1x8x8xf32>
    "tpu.trace_stop"() : () -> ()
    %59 = vector.extract_strided_slice %9 {offsets = [0, 0, 16], sizes = [1, 8, 8], strides = [1, 1, 1]} : vector<1x8x32xf32> to vector<1x8x8xf32>
    %60 = vector.extract_strided_slice %17 {offsets = [0, 0, 16], sizes = [1, 8, 8], strides = [1, 1, 1]} : vector<1x8x32xf32> to vector<1x8x8xf32>
    %61 = vector.extract_strided_slice %25 {offsets = [0, 0, 16], sizes = [1, 8, 8], strides = [1, 1, 1]} : vector<1x8x32xf32> to vector<1x8x8xf32>
    "tpu.trace_start"() <{level = 10 : i32, message = "bqd,bkd->bqk"}> : () -> ()
    %cst_34 = arith.constant dense<0.000000e+00> : vector<1x8x8xf32>
    %62 = tpu.matmul %59, %60, %cst_34 {dimension_numbers = #tpu.dot_dimension_numbers<[2], [2], [1], [1], [0, 0, 0, 1, 1, 1], [0], [0]>} : vector<1x8x8xf32>, vector<1x8x8xf32>, vector<1x8x8xf32> -> vector<1x8x8xf32>
    "tpu.trace_stop"() : () -> ()
    %63 = arith.addf %62, %26 : vector<1x8x8xf32>
    %cst_35 = arith.constant dense<0xFF800000> : vector<1x8xf32>
    %64 = vector.multi_reduction <maximumf>, %63, %cst_35 [2] : vector<1x8x8xf32> to vector<1x8xf32>
    %65 = vector.shape_cast %64 : vector<1x8xf32> to vector<1x8x1xf32>
    %66 = vector.broadcast %65 : vector<1x8x1xf32> to vector<1x8x8xf32>
    %67 = arith.subf %63, %66 : vector<1x8x8xf32>
    %68 = math.exp %67 : vector<1x8x8xf32>
    %cst_36 = arith.constant dense<0.000000e+00> : vector<1x8xf32>
    %69 = vector.multi_reduction <add>, %68, %cst_36 [2] : vector<1x8x8xf32> to vector<1x8xf32>
    %70 = vector.shape_cast %69 : vector<1x8xf32> to vector<1x8x1xf32>
    %71 = tpu.reciprocal %70 {approx = true} : vector<1x8x1xf32> -> vector<1x8x1xf32>
    %72 = vector.broadcast %71 : vector<1x8x1xf32> to vector<1x8x8xf32>
    %73 = arith.mulf %68, %72 : vector<1x8x8xf32>
    "tpu.trace_start"() <{level = 10 : i32, message = "bqk,bkd->bqd"}> : () -> ()
    %cst_37 = arith.constant dense<0.000000e+00> : vector<1x8x8xf32>
    %74 = tpu.matmul %73, %61, %cst_37 {dimension_numbers = #tpu.dot_dimension_numbers<[2], [1], [1], [2], [0, 0, 0, 1, 1, 2], [0], [0]>} : vector<1x8x8xf32>, vector<1x8x8xf32>, vector<1x8x8xf32> -> vector<1x8x8xf32>
    "tpu.trace_stop"() : () -> ()
    %75 = vector.extract_strided_slice %9 {offsets = [0, 0, 24], sizes = [1, 8, 8], strides = [1, 1, 1]} : vector<1x8x32xf32> to vector<1x8x8xf32>
    %76 = vector.extract_strided_slice %17 {offsets = [0, 0, 24], sizes = [1, 8, 8], strides = [1, 1, 1]} : vector<1x8x32xf32> to vector<1x8x8xf32>
    %77 = vector.extract_strided_slice %25 {offsets = [0, 0, 24], sizes = [1, 8, 8], strides = [1, 1, 1]} : vector<1x8x32xf32> to vector<1x8x8xf32>
    "tpu.trace_start"() <{level = 10 : i32, message = "bqd,bkd->bqk"}> : () -> ()
    %cst_38 = arith.constant dense<0.000000e+00> : vector<1x8x8xf32>
    %78 = tpu.matmul %75, %76, %cst_38 {dimension_numbers = #tpu.dot_dimension_numbers<[2], [2], [1], [1], [0, 0, 0, 1, 1, 1], [0], [0]>} : vector<1x8x8xf32>, vector<1x8x8xf32>, vector<1x8x8xf32> -> vector<1x8x8xf32>
    "tpu.trace_stop"() : () -> ()
    %79 = arith.addf %78, %26 : vector<1x8x8xf32>
    %cst_39 = arith.constant dense<0xFF800000> : vector<1x8xf32>
    %80 = vector.multi_reduction <maximumf>, %79, %cst_39 [2] : vector<1x8x8xf32> to vector<1x8xf32>
    %81 = vector.shape_cast %80 : vector<1x8xf32> to vector<1x8x1xf32>
    %82 = vector.broadcast %81 : vector<1x8x1xf32> to vector<1x8x8xf32>
    %83 = arith.subf %79, %82 : vector<1x8x8xf32>
    %84 = math.exp %83 : vector<1x8x8xf32>
    %cst_40 = arith.constant dense<0.000000e+00> : vector<1x8xf32>
    %85 = vector.multi_reduction <add>, %84, %cst_40 [2] : vector<1x8x8xf32> to vector<1x8xf32>
    %86 = vector.shape_cast %85 : vector<1x8xf32> to vector<1x8x1xf32>
    %87 = tpu.reciprocal %86 {approx = true} : vector<1x8x1xf32> -> vector<1x8x1xf32>
    %88 = vector.broadcast %87 : vector<1x8x1xf32> to vector<1x8x8xf32>
    %89 = arith.mulf %84, %88 : vector<1x8x8xf32>
    "tpu.trace_start"() <{level = 10 : i32, message = "bqk,bkd->bqd"}> : () -> ()
    %cst_41 = arith.constant dense<0.000000e+00> : vector<1x8x8xf32>
    %90 = tpu.matmul %89, %77, %cst_41 {dimension_numbers = #tpu.dot_dimension_numbers<[2], [1], [1], [2], [0, 0, 0, 1, 1, 2], [0], [0]>} : vector<1x8x8xf32>, vector<1x8x8xf32>, vector<1x8x8xf32> -> vector<1x8x8xf32>
    "tpu.trace_stop"() : () -> ()
    %91 = tpu.concatenate %42, %58, %74, %90 in 2 : vector<1x8x8xf32>, vector<1x8x8xf32>, vector<1x8x8xf32>, vector<1x8x8xf32> -> vector<1x8x32xf32>
    %92 = vector.shape_cast %91 : vector<1x8x32xf32> to vector<8x32xf32>
    %c0_42 = arith.constant 0 : index
    %c0_43 = arith.constant 0 : index
    %93 = vector.load %arg11[%c0_42, %c0_43] : memref<32x32xf32, #tpu.memory_space<vmem>>, vector<32x32xf32>
    %cst_44 = arith.constant dense<0.000000e+00> : vector<8x32xf32>
    %94 = tpu.matmul %92, %93, %cst_44 {dimension_numbers = #tpu.dot_dimension_numbers<[1], [0], [0], [1], [0, 0, 1, 1], [], []>} : vector<8x32xf32>, vector<32x32xf32>, vector<8x32xf32> -> vector<8x32xf32>
    %c0_45 = arith.constant 0 : index
    %c0_46 = arith.constant 0 : index
    %95 = vector.load %arg12[%c0_45, %c0_46] : memref<1x32xf32, #tpu.memory_space<vmem>>, vector<1x32xf32>
    %96 = vector.broadcast %95 : vector<1x32xf32> to vector<8x32xf32>
    %97 = arith.addf %94, %96 : vector<8x32xf32>
    %98 = vector.shape_cast %97 : vector<8x32xf32> to vector<1x8x32xf32>
    %c0_47 = arith.constant 0 : index
    %c0_48 = arith.constant 0 : index
    %c0_49 = arith.constant 0 : index
    %99 = vector.load %arg13[%c0_47, %c0_48, %c0_49] : memref<1x8x32xf32, #tpu.memory_space<vmem>>, vector<1x8x32xf32>
    tpu.vector_store %arg13[%c0_47, %c0_48, %c0_49], %98 {strides = array<i32>} : memref<1x8x32xf32, #tpu.memory_space<vmem>>, vector<1x8x32xf32>,
    return
  }
  func.func @transform_0(%arg0: i32) -> (i32, i32, i32) {
    %c0_i32 = arith.constant 0 : i32
    %c0_i32_0 = arith.constant 0 : i32
    %c0_i32_1 = arith.constant 0 : i32
    return %arg0, %c0_i32, %c0_i32_0 : i32, i32, i32
  }
  func.func @transform_1(%arg0: i32) -> (i32, i32, i32) {
    %c0_i32 = arith.constant 0 : i32
    %c0_i32_0 = arith.constant 0 : i32
    %c0_i32_1 = arith.constant 0 : i32
    return %arg0, %c0_i32, %c0_i32_0 : i32, i32, i32
  }
  func.func @transform_2(%arg0: i32) -> (i32, i32, i32) {
    %c0_i32 = arith.constant 0 : i32
    %c0_i32_0 = arith.constant 0 : i32
    %c0_i32_1 = arith.constant 0 : i32
    return %arg0, %c0_i32, %c0_i32_0 : i32, i32, i32
  }
  func.func @transform_3(%arg0: i32) -> (i32, i32, i32) {
    %c0_i32 = arith.constant 0 : i32
    %c0_i32_0 = arith.constant 0 : i32
    %c0_i32_1 = arith.constant 0 : i32
    %c0_i32_2 = arith.constant 0 : i32
    return %c0_i32, %c0_i32_0, %c0_i32_1 : i32, i32, i32
  }
  func.func @transform_4(%arg0: i32) -> (i32, i32) {
    %c0_i32 = arith.constant 0 : i32
    %c0_i32_0 = arith.constant 0 : i32
    %c0_i32_1 = arith.constant 0 : i32
    return %c0_i32, %c0_i32_0 : i32, i32
  }
  func.func @transform_5(%arg0: i32) -> (i32, i32) {
    %c0_i32 = arith.constant 0 : i32
    %c0_i32_0 = arith.constant 0 : i32
    %c0_i32_1 = arith.constant 0 : i32
    return %c0_i32, %c0_i32_0 : i32, i32
  }
  func.func @transform_6(%arg0: i32) -> (i32, i32) {
    %c0_i32 = arith.constant 0 : i32
    %c0_i32_0 = arith.constant 0 : i32
    %c0_i32_1 = arith.constant 0 : i32
    return %c0_i32, %c0_i32_0 : i32, i32
  }
  func.func @transform_7(%arg0: i32) -> (i32, i32) {
    %c0_i32 = arith.constant 0 : i32
    %c0_i32_0 = arith.constant 0 : i32
    %c0_i32_1 = arith.constant 0 : i32
    return %c0_i32, %c0_i32_0 : i32, i32
  }
  func.func @transform_8(%arg0: i32) -> (i32, i32) {
    %c0_i32 = arith.constant 0 : i32
    %c0_i32_0 = arith.constant 0 : i32
    %c0_i32_1 = arith.constant 0 : i32
    return %c0_i32, %c0_i32_0 : i32, i32
  }
  func.func @transform_9(%arg0: i32) -> (i32, i32) {
    %c0_i32 = arith.constant 0 : i32
    %c0_i32_0 = arith.constant 0 : i32
    %c0_i32_1 = arith.constant 0 : i32
    return %c0_i32, %c0_i32_0 : i32, i32
  }
  func.func @transform_10(%arg0: i32) -> (i32, i32) {
    %c0_i32 = arith.constant 0 : i32
    %c0_i32_0 = arith.constant 0 : i32
    %c0_i32_1 = arith.constant 0 : i32
    return %c0_i32, %c0_i32_0 : i32, i32
  }
  func.func @transform_11(%arg0: i32) -> (i32, i32) {
    %c0_i32 = arith.constant 0 : i32
    %c0_i32_0 = arith.constant 0 : i32
    %c0_i32_1 = arith.constant 0 : i32
    return %c0_i32, %c0_i32_0 : i32, i32
  }
  func.func @transform_12(%arg0: i32) -> (i32, i32, i32) {
    %c0_i32 = arith.constant 0 : i32
    %c0_i32_0 = arith.constant 0 : i32
    %c0_i32_1 = arith.constant 0 : i32
    return %arg0, %c0_i32, %c0_i32_0 : i32, i32, i32
  }
}

</mosaic_0001>

<llo_original>
// kernel: tpu_custom_call.1
$region0: #{tpu_custom_call.1}
  #allocation0 [shape = 'u32[]', space=smem, size = 0x4, offset = 0x4, fixed_abs, tag = 'smem constant byte address 0x4 - core index']
  #allocation1 [shape = 'u32[144,128]{1,0:T(1,128)}', space=vmem, size = 0x12000, scoped, tag = 'internal scratch']
  %s0 = inlined_call_operand.hbm [shape: f32[4,8,32], index: 0, kind: input, shape index: {}]
  %s1 = inlined_call_operand.hbm [shape: f32[4,8,32], index: 1, kind: input, shape index: {}]
  %s2 = inlined_call_operand.hbm [shape: f32[4,8,32], index: 2, kind: input, shape index: {}]
  %s3 = inlined_call_operand.hbm [shape: f32[1,8,8], index: 3, kind: input, shape index: {}]
  %s4 = inlined_call_operand.hbm [shape: f32[32,32], index: 4, kind: input, shape index: {}]
  %s5 = inlined_call_operand.vmem [shape: f32[1,32], index: 5, kind: input, shape index: {}]
  %s6 = inlined_call_operand.hbm [shape: f32[32,32], index: 6, kind: input, shape index: {}]
  %s7 = inlined_call_operand.vmem [shape: f32[1,32], index: 7, kind: input, shape index: {}]
  %s8 = inlined_call_operand.hbm [shape: f32[32,32], index: 8, kind: input, shape index: {}]
  %s9 = inlined_call_operand.vmem [shape: f32[1,32], index: 9, kind: input, shape index: {}]
  %s10 = inlined_call_operand.vmem [shape: f32[32,32], index: 10, kind: input, shape index: {}]
  %s11 = inlined_call_operand.vmem [shape: f32[1,32], index: 11, kind: input, shape index: {}]
  %s12 = inlined_call_operand.hbm [shape: f32[4,8,32], index: 12, kind: output, shape index: {}]
  %s13 = sld [smem:[#allocation0]]
  $region109: #{tpu_custom_call.1} parent=0
    _
  %s15 = ssub.s32 1, %s13
  %s16 = scalar_select 0, %s15, %s13
  $region1: #{tpu_custom_call.1} parent=0
    #allocation2 [shape = 'u8[8192]{0}', space=vmem, size = 0x2000, scoped, tag = 'input window, operand 0']
    #allocation3 [shape = 's32[2]{0}', space=sflag, size = 0x8, scoped, tag = 'scoped memory for tpu_custom_call.1']
    #allocation4 [shape = 's32[2]{0}', space=sflag, size = 0x8, scoped, tag = 'scoped memory for tpu_custom_call.1']
    #allocation5 [shape = 'u8[8192]{0}', space=vmem, size = 0x2000, scoped, tag = 'input window, operand 1']
    #allocation6 [shape = 's32[2]{0}', space=sflag, size = 0x8, scoped, tag = 'scoped memory for tpu_custom_call.1']
    #allocation7 [shape = 'u8[8192]{0}', space=vmem, size = 0x2000, scoped, tag = 'input window, operand 2']
    #allocation8 [shape = 'u8[4096]{0}', space=vmem, size = 0x1000, scoped, tag = 'input window, operand 3, single buffered']
    #allocation9 [shape = 's32[1]{0}', space=sflag, size = 0x4, scoped, tag = 'scoped memory for tpu_custom_call.1']
    #allocation10 [shape = 'u8[16384]{0}', space=vmem, size = 0x4000, scoped, tag = 'input window, operand 4, single buffered']
    #allocation11 [shape = 'u8[16384]{0}', space=vmem, size = 0x4000, scoped, tag = 'input window, operand 6, single buffered']
    #allocation12 [shape = 's32[1]{0}', space=sflag, size = 0x4, scoped, tag = 'scoped memory for tpu_custom_call.1']
    #allocation13 [shape = 'u8[16384]{0}', space=vmem, size = 0x4000, scoped, tag = 'input window, operand 8, single buffered']
    #allocation14 [shape = 'u8[8192]{0}', space=vmem, size = 0x2000, scoped, tag = 'output window, operand 0']
    %17 = vsyncpa [#allocation3], 0
    %s18 = scalar_lea.sflag [#allocation3], 1
    %19 = vsyncpa %s18, 0
    %20 = vsyncpa [#allocation6], 0
    %s21 = scalar_lea.sflag [#allocation6], 1
    %22 = vsyncpa %s21, 0
    %23 = vsyncpa [#allocation9], 0
    %24 = vsyncpa [#allocation12], 0
    %25 = vsyncpa [#allocation4], 0
    %s26 = scalar_lea.sflag [#allocation4], 1
    %27 = vsyncpa %s26, 0
    loop: start=0, step=1, limit=6
    $region2: #{tpu_custom_call.1} parent=1 // loop_pre_header
      _
    $region3: #{tpu_custom_call.1} parent=1 // loop_header
      %s29 = sphi 0, %s33
      %p30 = scmp.ge.s32.totalorder %s29, 6
      %s39 = sphi 0, %s41
      %s42 = sphi 0, %s39
      %s43 = sphi 0, %s42
      %s59 = sphi 0, %s43
      %s65 = sphi 0, %s67
      %s68 = sphi 0, %s65
      %s69 = sphi 0, %s68
      %s85 = sphi 0, %s69
      %s91 = sphi 0, %s93
      %s94 = sphi 0, %s91
      %s95 = sphi 0, %s94
      %s111 = sphi 0, %s95
      %s115 = sphi 0, %s115
      %s117 = sphi 0, %s115
      %s118 = sphi 0, %s117
      %s132 = sphi 0, %s118
      %s136 = sphi 0, %s136
      %s138 = sphi 0, %s136
      %s139 = sphi 0, %s138
      %s153 = sphi 0, %s139
      %s157 = sphi 0, %s157
      %s159 = sphi 0, %s157
      %s160 = sphi 0, %s159
      %s174 = sphi 0, %s160
      %s178 = sphi 0, %s178
      %s180 = sphi 0, %s178
      %s181 = sphi 0, %s180
      %s195 = sphi 0, %s181
      %s199 = sphi 0, %s199
      %s201 = sphi 0, %s199
      %s202 = sphi 0, %s201
      %s216 = sphi 0, %s202
      %s220 = sphi 0, %s220
      %s222 = sphi 0, %s220
      %s223 = sphi 0, %s222
      %s237 = sphi 0, %s223
      %s241 = sphi 0, %s241
      %s243 = sphi 0, %s241
      %s244 = sphi 0, %s243
      %s258 = sphi 0, %s244
      %s262 = sphi 0, %s262
      %s264 = sphi 0, %s262
      %s265 = sphi 0, %s264
      %s279 = sphi 0, %s265
      %s283 = sphi 0, %s283
      %s285 = sphi 0, %s283
      %s286 = sphi 0, %s285
      %s300 = sphi 0, %s286
      %s306 = sphi 0, %s308
      %s309 = sphi 0, %s306
      %s310 = sphi 0, %s309
      %s326 = sphi 0, %s310
    $region4: #{tpu_custom_call.1} parent=1 // loop_header_branch
      %32 = sbr.rel (%p30) target = $region8
    $region5: #{tpu_custom_call.1} parent=1 // loop_body
      %s34 = ssub.s32 %s29, 1
      %s35 = ssub.s32 %s29, 2
      %s36 = sadd.s32 %s29, 1
      %s37 = ssub.s32 %s29, %s36
      %p38 = scmp.eq.s32.totalorder %s37, 0
      %s40 = sadd.s32 %s39, 1
      %s41 = scalar_select %p38, %s39, %s40
      %p44 = pneg %p38
      %p45 = scmp.eq.s32.totalorder %s29, 3
      %p46 = por %p44, %p45
      %p47 = scmp.ne.s32.totalorder %s39, %s42
      %p48 = scmp.eq.s32.totalorder %s29, 0
      %p49 = por %p47, %p48
      %p50 = scmp.ne.s32.totalorder %s39, %s42
      %p51 = scmp.eq.s32.totalorder %s34, 3
      %p52 = por %p50, %p51
      %p53 = scmp.ne.s32.totalorder %s42, %s43
      %p54 = scmp.eq.s32.totalorder %s34, 0
      %p55 = por %p53, %p54
      %p56 = scmp.ne.s32.totalorder %s42, %s43
      %p57 = scmp.eq.s32.totalorder %s35, 3
      %p58 = por %p56, %p57
      %p60 = scmp.ne.s32.totalorder %s43, %s59
      %p61 = scmp.eq.s32.totalorder %s35, 0
      %p62 = por %p60, %p61
      %s63 = ssub.s32 %s29, %s36
      %p64 = scmp.eq.s32.totalorder %s63, 0
      %s66 = sadd.s32 %s65, 1
      %s67 = scalar_select %p64, %s65, %s66
      %p70 = pneg %p64
      %p71 = scmp.eq.s32.totalorder %s29, 3
      %p72 = por %p70, %p71
      %p73 = scmp.ne.s32.totalorder %s65, %s68
      %p74 = scmp.eq.s32.totalorder %s29, 0
      %p75 = por %p73, %p74
      %p76 = scmp.ne.s32.totalorder %s65, %s68
      %p77 = scmp.eq.s32.totalorder %s34, 3
      %p78 = por %p76, %p77
      %p79 = scmp.ne.s32.totalorder %s68, %s69
      %p80 = scmp.eq.s32.totalorder %s34, 0
      %p81 = por %p79, %p80
      %p82 = scmp.ne.s32.totalorder %s68, %s69
      %p83 = scmp.eq.s32.totalorder %s35, 3
      %p84 = por %p82, %p83
      %p86 = scmp.ne.s32.totalorder %s69, %s85
      %p87 = scmp.eq.s32.totalorder %s35, 0
      %p88 = por %p86, %p87
      %s89 = ssub.s32 %s29, %s36
      %p90 = scmp.eq.s32.totalorder %s89, 0
      %s92 = sadd.s32 %s91, 1
      %s93 = scalar_select %p90, %s91, %s92
      %p96 = pneg %p90
      %p97 = scmp.eq.s32.totalorder %s29, 3
      %p98 = por %p96, %p97
      %p99 = scmp.ne.s32.totalorder %s91, %s94
      %p100 = scmp.eq.s32.totalorder %s29, 0
      %p101 = por %p99, %p100
      %p102 = scmp.ne.s32.totalorder %s91, %s94
      %p103 = scmp.eq.s32.totalorder %s34, 3
      %p104 = por %p102, %p103
      %p105 = scmp.ne.s32.totalorder %s94, %s95
      %p106 = scmp.eq.s32.totalorder %s34, 0
      %p107 = por %p105, %p106
      %p108 = scmp.ne.s32.totalorder %s94, %s95
      %p109 = scmp.eq.s32.totalorder %s35, 3
      %p110 = por %p108, %p109
      %p112 = scmp.ne.s32.totalorder %s95, %s111
      %p113 = scmp.eq.s32.totalorder %s35, 0
      %p114 = por %p112, %p113
      %s116 = sadd.s32 %s115, 1
      %p119 = scmp.eq.s32.totalorder %s29, 3
      %p120 = scmp.ne.s32.totalorder %s115, %s117
      %p121 = scmp.eq.s32.totalorder %s29, 0
      %p122 = por %p120, %p121
      %p123 = scmp.ne.s32.totalorder %s115, %s117
      %p124 = scmp.eq.s32.totalorder %s34, 3
      %p125 = por %p123, %p124
      %p126 = scmp.ne.s32.totalorder %s117, %s118
      %p127 = scmp.eq.s32.totalorder %s34, 0
      %p128 = por %p126, %p127
      %p129 = scmp.ne.s32.totalorder %s117, %s118
      %p130 = scmp.eq.s32.totalorder %s35, 3
      %p131 = por %p129, %p130
      %p133 = scmp.ne.s32.totalorder %s118, %s132
      %p134 = scmp.eq.s32.totalorder %s35, 0
      %p135 = por %p133, %p134
      %s137 = sadd.s32 %s136, 1
      %p140 = scmp.eq.s32.totalorder %s29, 3
      %p141 = scmp.ne.s32.totalorder %s136, %s138
      %p142 = scmp.eq.s32.totalorder %s29, 0
      %p143 = por %p141, %p142
      %p144 = scmp.ne.s32.totalorder %s136, %s138
      %p145 = scmp.eq.s32.totalorder %s34, 3
      %p146 = por %p144, %p145
      %p147 = scmp.ne.s32.totalorder %s138, %s139
      %p148 = scmp.eq.s32.totalorder %s34, 0
      %p149 = por %p147, %p148
      %p150 = scmp.ne.s32.totalorder %s138, %s139
      %p151 = scmp.eq.s32.totalorder %s35, 3
      %p152 = por %p150, %p151
      %p154 = scmp.ne.s32.totalorder %s139, %s153
      %p155 = scmp.eq.s32.totalorder %s35, 0
      %p156 = por %p154, %p155
      %s158 = sadd.s32 %s157, 1
      %p161 = scmp.eq.s32.totalorder %s29, 3
      %p162 = scmp.ne.s32.totalorder %s157, %s159
      %p163 = scmp.eq.s32.totalorder %s29, 0
      %p164 = por %p162, %p163
      %p165 = scmp.ne.s32.totalorder %s157, %s159
      %p166 = scmp.eq.s32.totalorder %s34, 3
      %p167 = por %p165, %p166
      %p168 = scmp.ne.s32.totalorder %s159, %s160
      %p169 = scmp.eq.s32.totalorder %s34, 0
      %p170 = por %p168, %p169
      %p171 = scmp.ne.s32.totalorder %s159, %s160
      %p172 = scmp.eq.s32.totalorder %s35, 3
      %p173 = por %p171, %p172
      %p175 = scmp.ne.s32.totalorder %s160, %s174
      %p176 = scmp.eq.s32.totalorder %s35, 0
      %p177 = por %p175, %p176
      %s179 = sadd.s32 %s178, 1
      %p182 = scmp.eq.s32.totalorder %s29, 3
      %p183 = scmp.ne.s32.totalorder %s178, %s180
      %p184 = scmp.eq.s32.totalorder %s29, 0
      %p185 = por %p183, %p184
      %p186 = scmp.ne.s32.totalorder %s178, %s180
      %p187 = scmp.eq.s32.totalorder %s34, 3
      %p188 = por %p186, %p187
      %p189 = scmp.ne.s32.totalorder %s180, %s181
      %p190 = scmp.eq.s32.totalorder %s34, 0
      %p191 = por %p189, %p190
      %p192 = scmp.ne.s32.totalorder %s180, %s181
      %p193 = scmp.eq.s32.totalorder %s35, 3
      %p194 = por %p192, %p193
      %p196 = scmp.ne.s32.totalorder %s181, %s195
      %p197 = scmp.eq.s32.totalorder %s35, 0
      %p198 = por %p196, %p197
      %s200 = sadd.s32 %s199, 1
      %p203 = scmp.eq.s32.totalorder %s29, 3
      %p204 = scmp.ne.s32.totalorder %s199, %s201
      %p205 = scmp.eq.s32.totalorder %s29, 0
      %p206 = por %p204, %p205
      %p207 = scmp.ne.s32.totalorder %s199, %s201
      %p208 = scmp.eq.s32.totalorder %s34, 3
      %p209 = por %p207, %p208
      %p210 = scmp.ne.s32.totalorder %s201, %s202
      %p211 = scmp.eq.s32.totalorder %s34, 0
      %p212 = por %p210, %p211
      %p213 = scmp.ne.s32.totalorder %s201, %s202
      %p214 = scmp.eq.s32.totalorder %s35, 3
      %p215 = por %p213, %p214
      %p217 = scmp.ne.s32.totalorder %s202, %s216
      %p218 = scmp.eq.s32.totalorder %s35, 0
      %p219 = por %p217, %p218
      %s221 = sadd.s32 %s220, 1
      %p224 = scmp.eq.s32.totalorder %s29, 3
      %p225 = scmp.ne.s32.totalorder %s220, %s222
      %p226 = scmp.eq.s32.totalorder %s29, 0
      %p227 = por %p225, %p226
      %p228 = scmp.ne.s32.totalorder %s220, %s222
      %p229 = scmp.eq.s32.totalorder %s34, 3
      %p230 = por %p228, %p229
      %p231 = scmp.ne.s32.totalorder %s222, %s223
      %p232 = scmp.eq.s32.totalorder %s34, 0
      %p233 = por %p231, %p232
      %p234 = scmp.ne.s32.totalorder %s222, %s223
      %p235 = scmp.eq.s32.totalorder %s35, 3
      %p236 = por %p234, %p235
      %p238 = scmp.ne.s32.totalorder %s223, %s237
      %p239 = scmp.eq.s32.totalorder %s35, 0
      %p240 = por %p238, %p239
      %s242 = sadd.s32 %s241, 1
      %p245 = scmp.eq.s32.totalorder %s29, 3
      %p246 = scmp.ne.s32.totalorder %s241, %s243
      %p247 = scmp.eq.s32.totalorder %s29, 0
      %p248 = por %p246, %p247
      %p249 = scmp.ne.s32.totalorder %s241, %s243
      %p250 = scmp.eq.s32.totalorder %s34, 3
      %p251 = por %p249, %p250
      %p252 = scmp.ne.s32.totalorder %s243, %s244
      %p253 = scmp.eq.s32.totalorder %s34, 0
      %p254 = por %p252, %p253
      %p255 = scmp.ne.s32.totalorder %s243, %s244
      %p256 = scmp.eq.s32.totalorder %s35, 3
      %p257 = por %p255, %p256
      %p259 = scmp.ne.s32.totalorder %s244, %s258
      %p260 = scmp.eq.s32.totalorder %s35, 0
      %p261 = por %p259, %p260
      %s263 = sadd.s32 %s262, 1
      %p266 = scmp.eq.s32.totalorder %s29, 3
      %p267 = scmp.ne.s32.totalorder %s262, %s264
      %p268 = scmp.eq.s32.totalorder %s29, 0
      %p269 = por %p267, %p268
      %p270 = scmp.ne.s32.totalorder %s262, %s264
      %p271 = scmp.eq.s32.totalorder %s34, 3
      %p272 = por %p270, %p271
      %p273 = scmp.ne.s32.totalorder %s264, %s265
      %p274 = scmp.eq.s32.totalorder %s34, 0
      %p275 = por %p273, %p274
      %p276 = scmp.ne.s32.totalorder %s264, %s265
      %p277 = scmp.eq.s32.totalorder %s35, 3
      %p278 = por %p276, %p277
      %p280 = scmp.ne.s32.totalorder %s265, %s279
      %p281 = scmp.eq.s32.totalorder %s35, 0
      %p282 = por %p280, %p281
      %s284 = sadd.s32 %s283, 1
      %p287 = scmp.eq.s32.totalorder %s29, 3
      %p288 = scmp.ne.s32.totalorder %s283, %s285
      %p289 = scmp.eq.s32.totalorder %s29, 0
      %p290 = por %p288, %p289
      %p291 = scmp.ne.s32.totalorder %s283, %s285
      %p292 = scmp.eq.s32.totalorder %s34, 3
      %p293 = por %p291, %p292
      %p294 = scmp.ne.s32.totalorder %s285, %s286
      %p295 = scmp.eq.s32.totalorder %s34, 0
      %p296 = por %p294, %p295
      %p297 = scmp.ne.s32.totalorder %s285, %s286
      %p298 = scmp.eq.s32.totalorder %s35, 3
      %p299 = por %p297, %p298
      %p301 = scmp.ne.s32.totalorder %s286, %s300
      %p302 = scmp.eq.s32.totalorder %s35, 0
      %p303 = por %p301, %p302
      %s304 = ssub.s32 %s29, %s36
      %p305 = scmp.eq.s32.totalorder %s304, 0
      %s307 = sadd.s32 %s306, 1
      %s308 = scalar_select %p305, %s306, %s307
      %p311 = pneg %p305
      %p312 = scmp.eq.s32.totalorder %s29, 3
      %p313 = por %p311, %p312
      %p314 = scmp.ne.s32.totalorder %s306, %s309
      %p315 = scmp.eq.s32.totalorder %s29, 0
      %p316 = por %p314, %p315
      %p317 = scmp.ne.s32.totalorder %s306, %s309
      %p318 = scmp.eq.s32.totalorder %s34, 3
      %p319 = por %p317, %p318
      %p320 = scmp.ne.s32.totalorder %s309, %s310
      %p321 = scmp.eq.s32.totalorder %s34, 0
      %p322 = por %p320, %p321
      %p323 = scmp.ne.s32.totalorder %s309, %s310
      %p324 = scmp.eq.s32.totalorder %s35, 3
      %p325 = por %p323, %p324
      %p327 = scmp.ne.s32.totalorder %s310, %s326
      %p328 = scmp.eq.s32.totalorder %s35, 0
      %p329 = por %p327, %p328
      %p330 = scmp.le.s32.totalorder 1, %s29
      %p331 = scmp.lt.s32.totalorder %s29, 5
      %p332 = pnand %p330, %p331
      %p333 = pneg %p332
      // Predicated region
      $region9: #{tpu_custom_call.1} parent=5 // pred_check
        _
      $region10: #{tpu_custom_call.1} parent=5 // pred_check_branch
        %335 = sbr.rel (%p332) target = $region12
      $region11: #{tpu_custom_call.1} parent=5 // pred_region
        %s336 = ssub.s32 %s29, 1
        // Predicated region
        $region13: #{tpu_custom_call.1} parent=11 // pred_check
          %p337 = pneg %p128
        $region14: #{tpu_custom_call.1} parent=11 // pred_check_branch
          %339 = sbr.rel (%p337) target = $region16
        $region15: #{tpu_custom_call.1} parent=11 // pred_region
          %s341 = ssub.s32 128, 128
          %342 = vsyncadd [#allocation9], %s341
          %s344 = sshll.u32 [#allocation8], 4
          %s345 = int_to_ptr.vmem [resolvable:$true] %s344
          %347 = dma.hbm_to_vmem [thread:$0]  %s3, 128, %s345, [#allocation9]
        $region16: #{tpu_custom_call.1} parent=11 // pred_fallthru
          _
        // Predicated region
        $region17: #{tpu_custom_call.1} parent=11 // pred_check
          %p348 = pneg %p149
        $region18: #{tpu_custom_call.1} parent=11 // pred_check_branch
          %350 = sbr.rel (%p348) target = $region20
        $region19: #{tpu_custom_call.1} parent=11 // pred_region
          %s352 = ssub.s32 512, 512
          %353 = vsyncadd [#allocation9], %s352
          %s354 = sshll.u32 [#allocation10], 4
          %s355 = int_to_ptr.vmem [resolvable:$true] %s354
          %360 = dma.hbm_to_vmem [thread:$0]  %s4, 512, %s355, [#allocation9], 128, 128, 8
        $region20: #{tpu_custom_call.1} parent=11 // pred_fallthru
          _
        // Predicated region
        $region21: #{tpu_custom_call.1} parent=11 // pred_check
          %p361 = pneg %p170
        $region22: #{tpu_custom_call.1} parent=11 // pred_check_branch
          %363 = sbr.rel (%p361) target = $region24
        $region23: #{tpu_custom_call.1} parent=11 // pred_region
          _
        $region24: #{tpu_custom_call.1} parent=11 // pred_fallthru
          _
        // Predicated region
        $region25: #{tpu_custom_call.1} parent=11 // pred_check
          %p364 = pneg %p191
        $region26: #{tpu_custom_call.1} parent=11 // pred_check_branch
          %366 = sbr.rel (%p364) target = $region28
        $region27: #{tpu_custom_call.1} parent=11 // pred_region
          %s368 = ssub.s32 512, 512
          %369 = vsyncadd [#allocation12], %s368
          %s370 = sshll.u32 [#allocation11], 4
          %s371 = int_to_ptr.vmem [resolvable:$true] %s370
          %376 = dma.hbm_to_vmem [thread:$0]  %s6, 512, %s371, [#allocation12], 128, 128, 8
        $region28: #{tpu_custom_call.1} parent=11 // pred_fallthru
          _
        // Predicated region
        $region29: #{tpu_custom_call.1} parent=11 // pred_check
          %p377 = pneg %p212
        $region30: #{tpu_custom_call.1} parent=11 // pred_check_branch
          %379 = sbr.rel (%p377) target = $region32
        $region31: #{tpu_custom_call.1} parent=11 // pred_region
          _
        $region32: #{tpu_custom_call.1} parent=11 // pred_fallthru
          _
        // Predicated region
        $region33: #{tpu_custom_call.1} parent=11 // pred_check
          %p380 = pneg %p233
        $region34: #{tpu_custom_call.1} parent=11 // pred_check_branch
          %382 = sbr.rel (%p380) target = $region36
        $region35: #{tpu_custom_call.1} parent=11 // pred_region
          %s384 = ssub.s32 512, 512
          %385 = vsyncadd [#allocation12], %s384
          %s386 = sshll.u32 [#allocation13], 4
          %s387 = int_to_ptr.vmem [resolvable:$true] %s386
          %392 = dma.hbm_to_vmem [thread:$0]  %s8, 512, %s387, [#allocation12], 128, 128, 8
        $region36: #{tpu_custom_call.1} parent=11 // pred_fallthru
          _
        // Predicated region
        $region37: #{tpu_custom_call.1} parent=11 // pred_check
          %p393 = pneg %p254
        $region38: #{tpu_custom_call.1} parent=11 // pred_check_branch
          %395 = sbr.rel (%p393) target = $region40
        $region39: #{tpu_custom_call.1} parent=11 // pred_region
          _
        $region40: #{tpu_custom_call.1} parent=11 // pred_fallthru
          _
        // Predicated region
        $region41: #{tpu_custom_call.1} parent=11 // pred_check
          %p396 = pneg %p275
        $region42: #{tpu_custom_call.1} parent=11 // pred_check_branch
          %398 = sbr.rel (%p396) target = $region44
        $region43: #{tpu_custom_call.1} parent=11 // pred_region
          _
        $region44: #{tpu_custom_call.1} parent=11 // pred_fallthru
          _
        // Predicated region
        $region45: #{tpu_custom_call.1} parent=11 // pred_check
          %p399 = pneg %p296
        $region46: #{tpu_custom_call.1} parent=11 // pred_check_branch
          %401 = sbr.rel (%p399) target = $region48
        $region47: #{tpu_custom_call.1} parent=11 // pred_region
          _
        $region48: #{tpu_custom_call.1} parent=11 // pred_fallthru
          _
      $region12: #{tpu_custom_call.1} parent=5 // pred_fallthru
        _
      %p402 = scmp.lt.s32.totalorder %s29, 4
      // Predicated region
      $region49: #{tpu_custom_call.1} parent=5 // pred_check
        %p403 = pneg %p402
      $region50: #{tpu_custom_call.1} parent=5 // pred_check_branch
        %405 = sbr.rel (%p403) target = $region52
      $region51: #{tpu_custom_call.1} parent=5 // pred_region
        // Predicated region
        $region53: #{tpu_custom_call.1} parent=51 // pred_check
          %p406 = pneg %p49
        $region54: #{tpu_custom_call.1} parent=51 // pred_check_branch
          %408 = sbr.rel (%p406) target = $region56
        $region55: #{tpu_custom_call.1} parent=51 // pred_region
          %s409 = sand.u32 %s39, 1
          %s410 = scalar_lea.sflag [#allocation3], %s409
          %s411 = sand.u32 %s39, 1
          %s412 = smul.addr %s411, 8
          %s413 = scalar_lea.vmem [#allocation2], %s412
          %s415 = ssub.s32 128, 128
          %416 = vsyncadd %s410, %s415
          %s417 = smul.addr %s29, 128
          %s418 = scalar_lea.hbm %s0, %s417
          %s420 = sshll.u32 %s413, 4
          %s421 = int_to_ptr.vmem [resolvable:$true] %s420
          %423 = dma.hbm_to_vmem [thread:$0]  %s418, 128, %s421, %s410
        $region56: #{tpu_custom_call.1} parent=51 // pred_fallthru
          _
        // Predicated region
        $region57: #{tpu_custom_call.1} parent=51 // pred_check
          %p424 = pneg %p75
        $region58: #{tpu_custom_call.1} parent=51 // pred_check_branch
          %426 = sbr.rel (%p424) target = $region60
        $region59: #{tpu_custom_call.1} parent=51 // pred_region
          %s427 = sand.u32 %s29, 1
          %s428 = scalar_lea.sflag [#allocation6], %s427
          %s429 = sand.u32 %s65, 1
          %s430 = smul.addr %s429, 8
          %s431 = scalar_lea.vmem [#allocation5], %s430
          %s433 = ssub.s32 128, 128
          %434 = vsyncadd %s428, %s433
          %s435 = smul.addr %s29, 128
          %s436 = scalar_lea.hbm %s1, %s435
          %s438 = sshll.u32 %s431, 4
          %s439 = int_to_ptr.vmem [resolvable:$true] %s438
          %441 = dma.hbm_to_vmem [thread:$0]  %s436, 128, %s439, %s428
        $region60: #{tpu_custom_call.1} parent=51 // pred_fallthru
          _
        // Predicated region
        $region61: #{tpu_custom_call.1} parent=51 // pred_check
          %p442 = pneg %p101
        $region62: #{tpu_custom_call.1} parent=51 // pred_check_branch
          %444 = sbr.rel (%p442) target = $region64
        $region63: #{tpu_custom_call.1} parent=51 // pred_region
          %s445 = sand.u32 %s29, 1
          %s446 = scalar_lea.sflag [#allocation6], %s445
          %s447 = sand.u32 %s91, 1
          %s448 = smul.addr %s447, 8
          %s449 = scalar_lea.vmem [#allocation7], %s448
          %s451 = ssub.s32 128, 128
          %452 = vsyncadd %s446, %s451
          %s453 = smul.addr %s29, 128
          %s454 = scalar_lea.hbm %s2, %s453
          %s456 = sshll.u32 %s449, 4
          %s457 = int_to_ptr.vmem [resolvable:$true] %s456
          %459 = dma.hbm_to_vmem [thread:$0]  %s454, 128, %s457, %s446
        $region64: #{tpu_custom_call.1} parent=51 // pred_fallthru
          _
      $region52: #{tpu_custom_call.1} parent=5 // pred_fallthru
        _
      %p460 = scmp.le.s32.totalorder 1, %s29
      %p461 = scmp.lt.s32.totalorder %s29, 5
      %p462 = pnand %p460, %p461
      %p463 = pneg %p462
      // Predicated region
      $region65: #{tpu_custom_call.1} parent=5 // pred_check
        _
      $region66: #{tpu_custom_call.1} parent=5 // pred_check_branch
        %465 = sbr.rel (%p462) target = $region68
      $region67: #{tpu_custom_call.1} parent=5 // pred_region
        %s466 = ssub.s32 %s29, 1
        %s467 = sand.u32 %s42, 1
        %s468 = scalar_lea.sflag [#allocation3], %s467
        %s469 = sand.u32 %s42, 1
        %s470 = smul.addr %s469, 8
        %s471 = scalar_lea.vmem [#allocation2], %s470
        // Predicated region
        $region69: #{tpu_custom_call.1} parent=67 // pred_check
          %p472 = pneg %p55
        $region70: #{tpu_custom_call.1} parent=67 // pred_check_branch
          %474 = sbr.rel (%p472) target = $region72
        $region71: #{tpu_custom_call.1} parent=67 // pred_region
          %475 = dma.done %s468, 128
        $region72: #{tpu_custom_call.1} parent=67 // pred_fallthru
          _
        %s476 = sand.u32 %s34, 1
        %s477 = scalar_lea.sflag [#allocation6], %s476
        %s478 = sand.u32 %s68, 1
        %s479 = smul.addr %s478, 8
        %s480 = scalar_lea.vmem [#allocation5], %s479
        // Predicated region
        $region73: #{tpu_custom_call.1} parent=67 // pred_check
          %p481 = pneg %p81
        $region74: #{tpu_custom_call.1} parent=67 // pred_check_branch
          %483 = sbr.rel (%p481) target = $region76
        $region75: #{tpu_custom_call.1} parent=67 // pred_region
          %484 = dma.done %s477, 128
        $region76: #{tpu_custom_call.1} parent=67 // pred_fallthru
          _
        %s485 = sand.u32 %s34, 1
        %s486 = scalar_lea.sflag [#allocation6], %s485
        %s487 = sand.u32 %s94, 1
        %s488 = smul.addr %s487, 8
        %s489 = scalar_lea.vmem [#allocation7], %s488
        // Predicated region
        $region77: #{tpu_custom_call.1} parent=67 // pred_check
          %p490 = pneg %p107
        $region78: #{tpu_custom_call.1} parent=67 // pred_check_branch
          %492 = sbr.rel (%p490) target = $region80
        $region79: #{tpu_custom_call.1} parent=67 // pred_region
          %493 = dma.done %s486, 128
        $region80: #{tpu_custom_call.1} parent=67 // pred_fallthru
          _
        // Predicated region
        $region81: #{tpu_custom_call.1} parent=67 // pred_check
          %p494 = pneg %p128
        $region82: #{tpu_custom_call.1} parent=67 // pred_check_branch
          %496 = sbr.rel (%p494) target = $region84
        $region83: #{tpu_custom_call.1} parent=67 // pred_region
          %497 = dma.done [#allocation9], 128
        $region84: #{tpu_custom_call.1} parent=67 // pred_fallthru
          _
        // Predicated region
        $region85: #{tpu_custom_call.1} parent=67 // pred_check
          %p498 = pneg %p149
        $region86: #{tpu_custom_call.1} parent=67 // pred_check_branch
          %500 = sbr.rel (%p498) target = $region88
        $region87: #{tpu_custom_call.1} parent=67 // pred_region
          %501 = dma.done [#allocation9], 512
        $region88: #{tpu_custom_call.1} parent=67 // pred_fallthru
          _
        // Predicated region
        $region89: #{tpu_custom_call.1} parent=67 // pred_check
          %p502 = pneg %p191
        $region90: #{tpu_custom_call.1} parent=67 // pred_check_branch
          %504 = sbr.rel (%p502) target = $region92
        $region91: #{tpu_custom_call.1} parent=67 // pred_region
          %505 = dma.done [#allocation12], 512
        $region92: #{tpu_custom_call.1} parent=67 // pred_fallthru
          _
        // Predicated region
        $region93: #{tpu_custom_call.1} parent=67 // pred_check
          %p506 = pneg %p233
        $region94: #{tpu_custom_call.1} parent=67 // pred_check_branch
          %508 = sbr.rel (%p506) target = $region96
        $region95: #{tpu_custom_call.1} parent=67 // pred_region
          %509 = dma.done [#allocation12], 512
        $region96: #{tpu_custom_call.1} parent=67 // pred_fallthru
          _
        %s510 = sand.u32 %s42, 1
        %s511 = scalar_lea.sflag [#allocation3], %s510
        %s512 = sand.u32 %s42, 1
        %s513 = smul.addr %s512, 8
        %s514 = scalar_lea.vmem [#allocation2], %s513
        %p515 = pneg %p55
        %p516 = pneg %p52
        %s517 = sand.u32 %s34, 1
        %s518 = scalar_lea.sflag [#allocation6], %s517
        %s519 = sand.u32 %s68, 1
        %s520 = smul.addr %s519, 8
        %s521 = scalar_lea.vmem [#allocation5], %s520
        %p522 = pneg %p81
        %p523 = pneg %p78
        %s524 = sand.u32 %s34, 1
        %s525 = scalar_lea.sflag [#allocation6], %s524
        %s526 = sand.u32 %s94, 1
        %s527 = smul.addr %s526, 8
        %s528 = scalar_lea.vmem [#allocation7], %s527
        %p529 = pneg %p107
        %p530 = pneg %p104
        %p531 = pneg %p128
        %p532 = pneg %p125
        %p533 = pneg %p149
        %p534 = pneg %p146
        %p535 = pneg %p170
        %p536 = pneg %p167
        %p537 = pneg %p191
        %p538 = pneg %p188
        %p539 = pneg %p212
        %p540 = pneg %p209
        %p541 = pneg %p233
        %p542 = pneg %p230
        %p543 = pneg %p254
        %p544 = pneg %p251
        %p545 = pneg %p275
        %p546 = pneg %p272
        %p547 = pneg %p296
        %p548 = pneg %p293
        %p549 = pneg %p322
        %p550 = pneg %p319
        %s551 = sand.u32 %s309, 1
        %s552 = scalar_lea.sflag [#allocation4], %s551
        %s553 = sand.u32 %s309, 1
        %s554 = smul.addr %s553, 8
        %s555 = scalar_lea.vmem [#allocation14], %s554
        %v556 = vld [vmem:[%s471] sm:$0xff]
        %v557 = vld [vmem:[#allocation10] sm:$0xff]
        %v558 = vld [vmem:[#allocation10 + $0x8] sm:$0xff]
        %v559 = vld [vmem:[#allocation10 + $0x10] sm:$0xff]
        %v560 = vld [vmem:[#allocation10 + $0x18] sm:$0xff]
        %v561 = vld [vmem:[%s5] sm:$0x1]
        %v563 = vlaneseq
        %v564 = vshrl.u32 %v563, 7
        %v565 = vsub.s32 0, %v564
        %v566 = vrot.slane %v561, %v565
        %vm568 = vcmask 261120
        %v570 = vsel %vm568, %v556, 0
        %572 = vmatprep.subr.mxu0 0.0
        %573 = vmatpush1.msra.mxu0 %v557
        %574 = vmatprep.subr.mxu0 0.0
        %575 = vmatpush1.msra.mxu0 %v558
        %576 = vmatprep.subr.mxu0 0.0
        %577 = vmatpush1.msra.mxu0 %v559
        %578 = vmatprep.subr.mxu0 0.0
        %579 = vmatpush1.msra.mxu0 %v560
        %580 = vmatprep.subr.mxu0 0.0
        %581 = vmatpush1.msra.mxu0 0.0
        %582 = vmatprep.subr.mxu0 0.0
        %583 = vmatpush1.msra.mxu0 0.0
        %584 = vmatprep.subr.mxu0 0.0
        %585 = vmatpush1.msra.mxu0 0.0
        %586 = vmatprep.subr.mxu0 0.0
        %587 = vmatpush1.msra.mxu0 0.0
        %588 = vmatprep.subr.mxu0 0.0
        %589 = vmatpush1.msra.mxu0 0.0
        %590 = vmatprep.subr.mxu0 0.0
        %591 = vmatpush1.msra.mxu0 0.0
        %592 = vmatprep.subr.mxu0 0.0
        %593 = vmatpush1.msra.mxu0 0.0
        %594 = vmatprep.subr.mxu0 0.0
        %595 = vmatpush1.msra.mxu0 0.0
        %596 = vmatprep.subr.mxu0 0.0
        %597 = vmatpush1.msra.mxu0 0.0
        %598 = vmatprep.subr.mxu0 0.0
        %599 = vmatpush1.msra.mxu0 0.0
        %600 = vmatprep.subr.mxu0 0.0
        %601 = vmatpush1.msra.mxu0 0.0
        %602 = vmatprep.subr.mxu0 0.0
        %603 = vmatpush1.msra.mxu0 0.0
        %604 = vmatprep.subr.mxu0 0.0
        %605 = vmatpush1.msra.mxu0 0.0
        %606 = vmatprep.subr.mxu0 0.0
        %607 = vmatpush1.msra.mxu0 0.0
        %608 = vmatprep.subr.mxu0 0.0
        %609 = vmatpush1.msra.mxu0 0.0
        %610 = vmatprep.subr.mxu0 0.0
        %611 = vmatpush1.msra.mxu0 0.0
        %612 = vmatprep.subr.mxu0 0.0
        %613 = vmatpush1.msra.mxu0 0.0
        %614 = vmatprep.subr.mxu0 0.0
        %615 = vmatpush1.msra.mxu0 0.0
        %616 = vmatprep.subr.mxu0 0.0
        %617 = vmatpush1.msra.mxu0 0.0
        %618 = vmatprep.subr.mxu0 0.0
        %619 = vmatpush1.msra.mxu0 0.0
        %620 = vmatprep.subr.mxu0 0.0
        %621 = vmatpush1.msra.mxu0 0.0
        %622 = vmatprep.subr.mxu0 0.0
        %623 = vmatpush1.msra.mxu0 0.0
        %624 = vmatprep.subr.mxu0 0.0
        %625 = vmatpush1.msra.mxu0 0.0
        %626 = vmatprep.subr.mxu0 0.0
        %627 = vmatpush1.msra.mxu0 0.0
        %628 = vmatprep.subr.mxu0 0.0
        %629 = vmatpush1.msra.mxu0 0.0
        %630 = vmatprep.subr.mxu0 0.0
        %631 = vmatpush1.msra.mxu0 0.0
        %632 = vmatprep.subr.mxu0 0.0
        %633 = vmatpush1.msra.mxu0 0.0
        %634 = vmatprep.subr.mxu0 0.0
        %635 = vmatpush1.msra.mxu0 0.0
        %636 = vmatprep.mubr.f32.mxu0 0.0
        %637 = vmatmul.mubr.f32.gmra.mrb[0].mxu0 %v570
        %v638 = vpop.f32.mrb[0].mxu0
        %v639 = vadd.f32 %v566, %v638
        %v640 = vpop.f32.mrb[0].mxu0
        %641 = vdwg.mxu0
        %v642 = vmul.f32 %v639, 0.35355338
        %v643 = vld [vmem:[%s480] sm:$0xff]
        %v644 = vld [vmem:[#allocation11] sm:$0xff]
        %v645 = vld [vmem:[#allocation11 + $0x8] sm:$0xff]
        %v646 = vld [vmem:[#allocation11 + $0x10] sm:$0xff]
        %v647 = vld [vmem:[#allocation11 + $0x18] sm:$0xff]
        %v648 = vld [vmem:[%s7] sm:$0x1]
        %v650 = vlaneseq
        %v651 = vshrl.u32 %v650, 7
        %v652 = vsub.s32 0, %v651
        %v653 = vrot.slane %v648, %v652
        %v656 = vsel %vm568, %v643, 0
        %658 = vmatprep.subr.mxu0 0.0
        %659 = vmatpush1.msra.mxu0 %v644
        %660 = vmatprep.subr.mxu0 0.0
        %661 = vmatpush1.msra.mxu0 %v645
        %662 = vmatprep.subr.mxu0 0.0
        %663 = vmatpush1.msra.mxu0 %v646
        %664 = vmatprep.subr.mxu0 0.0
        %665 = vmatpush1.msra.mxu0 %v647
        %666 = vmatprep.subr.mxu0 0.0
        %667 = vmatpush1.msra.mxu0 0.0
        %668 = vmatprep.subr.mxu0 0.0
        %669 = vmatpush1.msra.mxu0 0.0
        %670 = vmatprep.subr.mxu0 0.0
        %671 = vmatpush1.msra.mxu0 0.0
        %672 = vmatprep.subr.mxu0 0.0
        %673 = vmatpush1.msra.mxu0 0.0
        %674 = vmatprep.subr.mxu0 0.0
        %675 = vmatpush1.msra.mxu0 0.0
        %676 = vmatprep.subr.mxu0 0.0
        %677 = vmatpush1.msra.mxu0 0.0
        %678 = vmatprep.subr.mxu0 0.0
        %679 = vmatpush1.msra.mxu0 0.0
        %680 = vmatprep.subr.mxu0 0.0
        %681 = vmatpush1.msra.mxu0 0.0
        %682 = vmatprep.subr.mxu0 0.0
        %683 = vmatpush1.msra.mxu0 0.0
        %684 = vmatprep.subr.mxu0 0.0
        %685 = vmatpush1.msra.mxu0 0.0
        %686 = vmatprep.subr.mxu0 0.0
        %687 = vmatpush1.msra.mxu0 0.0
        %688 = vmatprep.subr.mxu0 0.0
        %689 = vmatpush1.msra.mxu0 0.0
        %690 = vmatprep.subr.mxu0 0.0
        %691 = vmatpush1.msra.mxu0 0.0
        %692 = vmatprep.subr.mxu0 0.0
        %693 = vmatpush1.msra.mxu0 0.0
        %694 = vmatprep.subr.mxu0 0.0
        %695 = vmatpush1.msra.mxu0 0.0
        %696 = vmatprep.subr.mxu0 0.0
        %697 = vmatpush1.msra.mxu0 0.0
        %698 = vmatprep.subr.mxu0 0.0
        %699 = vmatpush1.msra.mxu0 0.0
        %700 = vmatprep.subr.mxu0 0.0
        %701 = vmatpush1.msra.mxu0 0.0
        %702 = vmatprep.subr.mxu0 0.0
        %703 = vmatpush1.msra.mxu0 0.0
        %704 = vmatprep.subr.mxu0 0.0
        %705 = vmatpush1.msra.mxu0 0.0
        %706 = vmatprep.subr.mxu0 0.0
        %707 = vmatpush1.msra.mxu0 0.0
        %708 = vmatprep.subr.mxu0 0.0
        %709 = vmatpush1.msra.mxu0 0.0
        %710 = vmatprep.subr.mxu0 0.0
        %711 = vmatpush1.msra.mxu0 0.0
        %712 = vmatprep.subr.mxu0 0.0
        %713 = vmatpush1.msra.mxu0 0.0
        %714 = vmatprep.subr.mxu0 0.0
        %715 = vmatpush1.msra.mxu0 0.0
        %716 = vmatprep.subr.mxu0 0.0
        %717 = vmatpush1.msra.mxu0 0.0
        %718 = vmatprep.subr.mxu0 0.0
        %719 = vmatpush1.msra.mxu0 0.0
        %720 = vmatprep.subr.mxu0 0.0
        %721 = vmatpush1.msra.mxu0 0.0
        %722 = vmatprep.mubr.f32.mxu0 0.0
        %723 = vmatmul.mubr.f32.gmra.mrb[0].mxu0 %v656
        %v724 = vpop.f32.mrb[0].mxu0
        %v725 = vadd.f32 %v653, %v724
        %v726 = vpop.f32.mrb[0].mxu0
        %727 = vdwg.mxu0
        %v728 = vld [vmem:[%s489] sm:$0xff]
        %v729 = vld [vmem:[#allocation13] sm:$0xff]
        %v730 = vld [vmem:[#allocation13 + $0x8] sm:$0xff]
        %v731 = vld [vmem:[#allocation13 + $0x10] sm:$0xff]
        %v732 = vld [vmem:[#allocation13 + $0x18] sm:$0xff]
        %v733 = vld [vmem:[%s9] sm:$0x1]
        %v735 = vlaneseq
        %v736 = vshrl.u32 %v735, 7
        %v737 = vsub.s32 0, %v736
        %v738 = vrot.slane %v733, %v737
        %v741 = vsel %vm568, %v728, 0
        %743 = vmatprep.subr.mxu0 0.0
        %744 = vmatpush1.msra.mxu0 %v729
        %745 = vmatprep.subr.mxu0 0.0
        %746 = vmatpush1.msra.mxu0 %v730
        %747 = vmatprep.subr.mxu0 0.0
        %748 = vmatpush1.msra.mxu0 %v731
        %749 = vmatprep.subr.mxu0 0.0
        %750 = vmatpush1.msra.mxu0 %v732
        %751 = vmatprep.subr.mxu0 0.0
        %752 = vmatpush1.msra.mxu0 0.0
        %753 = vmatprep.subr.mxu0 0.0
        %754 = vmatpush1.msra.mxu0 0.0
        %755 = vmatprep.subr.mxu0 0.0
        %756 = vmatpush1.msra.mxu0 0.0
        %757 = vmatprep.subr.mxu0 0.0
        %758 = vmatpush1.msra.mxu0 0.0
        %759 = vmatprep.subr.mxu0 0.0
        %760 = vmatpush1.msra.mxu0 0.0
        %761 = vmatprep.subr.mxu0 0.0
        %762 = vmatpush1.msra.mxu0 0.0
        %763 = vmatprep.subr.mxu0 0.0
        %764 = vmatpush1.msra.mxu0 0.0
        %765 = vmatprep.subr.mxu0 0.0
        %766 = vmatpush1.msra.mxu0 0.0
        %767 = vmatprep.subr.mxu0 0.0
        %768 = vmatpush1.msra.mxu0 0.0
        %769 = vmatprep.subr.mxu0 0.0
        %770 = vmatpush1.msra.mxu0 0.0
        %771 = vmatprep.subr.mxu0 0.0
        %772 = vmatpush1.msra.mxu0 0.0
        %773 = vmatprep.subr.mxu0 0.0
        %774 = vmatpush1.msra.mxu0 0.0
        %775 = vmatprep.subr.mxu0 0.0
        %776 = vmatpush1.msra.mxu0 0.0
        %777 = vmatprep.subr.mxu0 0.0
        %778 = vmatpush1.msra.mxu0 0.0
        %779 = vmatprep.subr.mxu0 0.0
        %780 = vmatpush1.msra.mxu0 0.0
        %781 = vmatprep.subr.mxu0 0.0
        %782 = vmatpush1.msra.mxu0 0.0
        %783 = vmatprep.subr.mxu0 0.0
        %784 = vmatpush1.msra.mxu0 0.0
        %785 = vmatprep.subr.mxu0 0.0
        %786 = vmatpush1.msra.mxu0 0.0
        %787 = vmatprep.subr.mxu0 0.0
        %788 = vmatpush1.msra.mxu0 0.0
        %789 = vmatprep.subr.mxu0 0.0
        %790 = vmatpush1.msra.mxu0 0.0
        %791 = vmatprep.subr.mxu0 0.0
        %792 = vmatpush1.msra.mxu0 0.0
        %793 = vmatprep.subr.mxu0 0.0
        %794 = vmatpush1.msra.mxu0 0.0
        %795 = vmatprep.subr.mxu0 0.0
        %796 = vmatpush1.msra.mxu0 0.0
        %797 = vmatprep.subr.mxu0 0.0
        %798 = vmatpush1.msra.mxu0 0.0
        %799 = vmatprep.subr.mxu0 0.0
        %800 = vmatpush1.msra.mxu0 0.0
        %801 = vmatprep.subr.mxu0 0.0
        %802 = vmatpush1.msra.mxu0 0.0
        %803 = vmatprep.subr.mxu0 0.0
        %804 = vmatpush1.msra.mxu0 0.0
        %805 = vmatprep.subr.mxu0 0.0
        %806 = vmatpush1.msra.mxu0 0.0
        %807 = vmatprep.mubr.f32.mxu0 0.0
        %808 = vmatmul.mubr.f32.gmra.mrb[0].mxu0 %v741
        %v809 = vpop.f32.mrb[0].mxu0
        %v810 = vadd.f32 %v738, %v809
        %v811 = vpop.f32.mrb[0].mxu0
        %812 = vdwg.mxu0
        %v813 = vld [vmem:[#allocation8] sm:$0xff]
        %vm814 = vcmask 64512
        %v816 = vsel %vm814, %v642, 0
        %v819 = vsel %vm814, %v725, 0
        %821 = vmatprep.subr.mxu0 0.0
        %822 = vmatpush1.xpose.msra.mxu0 %v819
        %823 = vmatprep.subr.mxu0 0.0
        %824 = vmatpush1.xpose.msra.mxu0 0.0
        %825 = vmatprep.subr.mxu0 0.0
        %826 = vmatpush1.xpose.msra.mxu0 0.0
        %827 = vmatprep.subr.mxu0 0.0
        %828 = vmatpush1.xpose.msra.mxu0 0.0
        %829 = vmatprep.subr.mxu0 0.0
        %830 = vmatpush1.xpose.msra.mxu0 0.0
        %831 = vmatprep.subr.mxu0 0.0
        %832 = vmatpush1.xpose.msra.mxu0 0.0
        %833 = vmatprep.subr.mxu0 0.0
        %834 = vmatpush1.xpose.msra.mxu0 0.0
        %835 = vmatprep.subr.mxu0 0.0
        %836 = vmatpush1.xpose.msra.mxu0 0.0
        %837 = vmatprep.subr.mxu0 0.0
        %838 = vmatpush1.xpose.msra.mxu0 0.0
        %839 = vmatprep.subr.mxu0 0.0
        %840 = vmatpush1.xpose.msra.mxu0 0.0
        %841 = vmatprep.subr.mxu0 0.0
        %842 = vmatpush1.xpose.msra.mxu0 0.0
        %843 = vmatprep.subr.mxu0 0.0
        %844 = vmatpush1.xpose.msra.mxu0 0.0
        %845 = vmatprep.subr.mxu0 0.0
        %846 = vmatpush1.xpose.msra.mxu0 0.0
        %847 = vmatprep.subr.mxu0 0.0
        %848 = vmatpush1.xpose.msra.mxu0 0.0
        %849 = vmatprep.subr.mxu0 0.0
        %850 = vmatpush1.xpose.msra.mxu0 0.0
        %851 = vmatprep.subr.mxu0 0.0
        %852 = vmatpush1.xpose.msra.mxu0 0.0
        %853 = vmatprep.subr.mxu0 0.0
        %854 = vmatpush1.xpose.msra.mxu0 0.0
        %855 = vmatprep.subr.mxu0 0.0
        %856 = vmatpush1.xpose.msra.mxu0 0.0
        %857 = vmatprep.subr.mxu0 0.0
        %858 = vmatpush1.xpose.msra.mxu0 0.0
        %859 = vmatprep.subr.mxu0 0.0
        %860 = vmatpush1.xpose.msra.mxu0 0.0
        %861 = vmatprep.subr.mxu0 0.0
        %862 = vmatpush1.xpose.msra.mxu0 0.0
        %863 = vmatprep.subr.mxu0 0.0
        %864 = vmatpush1.xpose.msra.mxu0 0.0
        %865 = vmatprep.subr.mxu0 0.0
        %866 = vmatpush1.xpose.msra.mxu0 0.0
        %867 = vmatprep.subr.mxu0 0.0
        %868 = vmatpush1.xpose.msra.mxu0 0.0
        %869 = vmatprep.subr.mxu0 0.0
        %870 = vmatpush1.xpose.msra.mxu0 0.0
        %871 = vmatprep.subr.mxu0 0.0
        %872 = vmatpush1.xpose.msra.mxu0 0.0
        %873 = vmatprep.subr.mxu0 0.0
        %874 = vmatpush1.xpose.msra.mxu0 0.0
        %875 = vmatprep.subr.mxu0 0.0
        %876 = vmatpush1.xpose.msra.mxu0 0.0
        %877 = vmatprep.subr.mxu0 0.0
        %878 = vmatpush1.xpose.msra.mxu0 0.0
        %879 = vmatprep.subr.mxu0 0.0
        %880 = vmatpush1.xpose.msra.mxu0 0.0
        %881 = vmatprep.subr.mxu0 0.0
        %882 = vmatpush1.xpose.msra.mxu0 0.0
        %883 = vmatprep.subr.mxu0 0.0
        %884 = vmatpush1.xpose.msra.mxu0 0.0
        %885 = vmatprep.mubr.f32.mxu0 0.0
        %886 = vmatmul.mubr.f32.gmra.mrb[0].mxu0 %v816
        %v887 = vpop.f32.mrb[0].mxu0
        %v888 = vadd.f32 %v813, %v887
        %v889 = vpop.f32.mrb[0].mxu0
        %890 = vdwg.mxu0
        %v891 = vsel %vm814, %v888, -inf
        %892 = vmax.xlane.f32.xlu0 %v891
        %v893 = vpop.xlane.xlu0 %892
        %v894 = vsub.f32 %v888, %v893
        %v895 = vmul.f32 %v894, 1.442695
        %v896 = vpow.pop %v895
        %v897 = vsel %vm814, %v896, 0.0
        %898 = vadd.xlane.f32.xlu0 %v897
        %v899 = vpop.xlane.xlu0 %898
        %v900 = vrcp.pop %v899
        %v901 = vmul.f32 %v896, %v900
        %v903 = vsel %vm814, %v901, 0
        %905 = vmatprep.subr.mxu0 0.0
        %906 = vmatpush1.msra.mxu0 %v810
        %907 = vmatprep.subr.mxu0 0.0
        %908 = vmatpush1.msra.mxu0 0.0
        %909 = vmatprep.subr.mxu0 0.0
        %910 = vmatpush1.msra.mxu0 0.0
        %911 = vmatprep.subr.mxu0 0.0
        %912 = vmatpush1.msra.mxu0 0.0
        %913 = vmatprep.subr.mxu0 0.0
        %914 = vmatpush1.msra.mxu0 0.0
        %915 = vmatprep.subr.mxu0 0.0
        %916 = vmatpush1.msra.mxu0 0.0
        %917 = vmatprep.subr.mxu0 0.0
        %918 = vmatpush1.msra.mxu0 0.0
        %919 = vmatprep.subr.mxu0 0.0
        %920 = vmatpush1.msra.mxu0 0.0
        %921 = vmatprep.subr.mxu0 0.0
        %922 = vmatpush1.msra.mxu0 0.0
        %923 = vmatprep.subr.mxu0 0.0
        %924 = vmatpush1.msra.mxu0 0.0
        %925 = vmatprep.subr.mxu0 0.0
        %926 = vmatpush1.msra.mxu0 0.0
        %927 = vmatprep.subr.mxu0 0.0
        %928 = vmatpush1.msra.mxu0 0.0
        %929 = vmatprep.subr.mxu0 0.0
        %930 = vmatpush1.msra.mxu0 0.0
        %931 = vmatprep.subr.mxu0 0.0
        %932 = vmatpush1.msra.mxu0 0.0
        %933 = vmatprep.subr.mxu0 0.0
        %934 = vmatpush1.msra.mxu0 0.0
        %935 = vmatprep.subr.mxu0 0.0
        %936 = vmatpush1.msra.mxu0 0.0
        %937 = vmatprep.subr.mxu0 0.0
        %938 = vmatpush1.msra.mxu0 0.0
        %939 = vmatprep.subr.mxu0 0.0
        %940 = vmatpush1.msra.mxu0 0.0
        %941 = vmatprep.subr.mxu0 0.0
        %942 = vmatpush1.msra.mxu0 0.0
        %943 = vmatprep.subr.mxu0 0.0
        %944 = vmatpush1.msra.mxu0 0.0
        %945 = vmatprep.subr.mxu0 0.0
        %946 = vmatpush1.msra.mxu0 0.0
        %947 = vmatprep.subr.mxu0 0.0
        %948 = vmatpush1.msra.mxu0 0.0
        %949 = vmatprep.subr.mxu0 0.0
        %950 = vmatpush1.msra.mxu0 0.0
        %951 = vmatprep.subr.mxu0 0.0
        %952 = vmatpush1.msra.mxu0 0.0
        %953 = vmatprep.subr.mxu0 0.0
        %954 = vmatpush1.msra.mxu0 0.0
        %955 = vmatprep.subr.mxu0 0.0
        %956 = vmatpush1.msra.mxu0 0.0
        %957 = vmatprep.subr.mxu0 0.0
        %958 = vmatpush1.msra.mxu0 0.0
        %959 = vmatprep.subr.mxu0 0.0
        %960 = vmatpush1.msra.mxu0 0.0
        %961 = vmatprep.subr.mxu0 0.0
        %962 = vmatpush1.msra.mxu0 0.0
        %963 = vmatprep.subr.mxu0 0.0
        %964 = vmatpush1.msra.mxu0 0.0
        %965 = vmatprep.subr.mxu0 0.0
        %966 = vmatpush1.msra.mxu0 0.0
        %967 = vmatprep.subr.mxu0 0.0
        %968 = vmatpush1.msra.mxu0 0.0
        %969 = vmatprep.mubr.f32.mxu0 0.0
        %970 = vmatmul.mubr.f32.gmra.mrb[0].mxu0 %v903
        %v971 = vpop.f32.mrb[0].mxu0
        %v972 = vadd.f32 0.0, %v971
        %v973 = vpop.f32.mrb[0].mxu0
        %974 = vdwg.mxu0
        %975 = vrot.lane.b32.xlu0 %v642, 120
        %v976 = vpop.permute.xlu0 %975
        %977 = vrot.lane.b32.xlu0 %v725, 120
        %v978 = vpop.permute.xlu0 %977
        %v979 = vsel %vm814, %v976, 0
        %v981 = vsel %vm814, %v978, 0
        %983 = vmatprep.subr.mxu0 0.0
        %984 = vmatpush1.xpose.msra.mxu0 %v981
        %985 = vmatprep.subr.mxu0 0.0
        %986 = vmatpush1.xpose.msra.mxu0 0.0
        %987 = vmatprep.subr.mxu0 0.0
        %988 = vmatpush1.xpose.msra.mxu0 0.0
        %989 = vmatprep.subr.mxu0 0.0
        %990 = vmatpush1.xpose.msra.mxu0 0.0
        %991 = vmatprep.subr.mxu0 0.0
        %992 = vmatpush1.xpose.msra.mxu0 0.0
        %993 = vmatprep.subr.mxu0 0.0
        %994 = vmatpush1.xpose.msra.mxu0 0.0
        %995 = vmatprep.subr.mxu0 0.0
        %996 = vmatpush1.xpose.msra.mxu0 0.0
        %997 = vmatprep.subr.mxu0 0.0
        %998 = vmatpush1.xpose.msra.mxu0 0.0
        %999 = vmatprep.subr.mxu0 0.0
        %1000 = vmatpush1.xpose.msra.mxu0 0.0
        %1001 = vmatprep.subr.mxu0 0.0
        %1002 = vmatpush1.xpose.msra.mxu0 0.0
        %1003 = vmatprep.subr.mxu0 0.0
        %1004 = vmatpush1.xpose.msra.mxu0 0.0
        %1005 = vmatprep.subr.mxu0 0.0
        %1006 = vmatpush1.xpose.msra.mxu0 0.0
        %1007 = vmatprep.subr.mxu0 0.0
        %1008 = vmatpush1.xpose.msra.mxu0 0.0
        %1009 = vmatprep.subr.mxu0 0.0
        %1010 = vmatpush1.xpose.msra.mxu0 0.0
        %1011 = vmatprep.subr.mxu0 0.0
        %1012 = vmatpush1.xpose.msra.mxu0 0.0
        %1013 = vmatprep.subr.mxu0 0.0
        %1014 = vmatpush1.xpose.msra.mxu0 0.0
        %1015 = vmatprep.subr.mxu0 0.0
        %1016 = vmatpush1.xpose.msra.mxu0 0.0
        %1017 = vmatprep.subr.mxu0 0.0
        %1018 = vmatpush1.xpose.msra.mxu0 0.0
        %1019 = vmatprep.subr.mxu0 0.0
        %1020 = vmatpush1.xpose.msra.mxu0 0.0
        %1021 = vmatprep.subr.mxu0 0.0
        %1022 = vmatpush1.xpose.msra.mxu0 0.0
        %1023 = vmatprep.subr.mxu0 0.0
        %1024 = vmatpush1.xpose.msra.mxu0 0.0
        %1025 = vmatprep.subr.mxu0 0.0
        %1026 = vmatpush1.xpose.msra.mxu0 0.0
        %1027 = vmatprep.subr.mxu0 0.0
        %1028 = vmatpush1.xpose.msra.mxu0 0.0
        %1029 = vmatprep.subr.mxu0 0.0
        %1030 = vmatpush1.xpose.msra.mxu0 0.0
        %1031 = vmatprep.subr.mxu0 0.0
        %1032 = vmatpush1.xpose.msra.mxu0 0.0
        %1033 = vmatprep.subr.mxu0 0.0
        %1034 = vmatpush1.xpose.msra.mxu0 0.0
        %1035 = vmatprep.subr.mxu0 0.0
        %1036 = vmatpush1.xpose.msra.mxu0 0.0
        %1037 = vmatprep.subr.mxu0 0.0
        %1038 = vmatpush1.xpose.msra.mxu0 0.0
        %1039 = vmatprep.subr.mxu0 0.0
        %1040 = vmatpush1.xpose.msra.mxu0 0.0
        %1041 = vmatprep.subr.mxu0 0.0
        %1042 = vmatpush1.xpose.msra.mxu0 0.0
        %1043 = vmatprep.subr.mxu0 0.0
        %1044 = vmatpush1.xpose.msra.mxu0 0.0
        %1045 = vmatprep.subr.mxu0 0.0
        %1046 = vmatpush1.xpose.msra.mxu0 0.0
        %1047 = vmatprep.mubr.f32.mxu0 0.0
        %1048 = vmatmul.mubr.f32.gmra.mrb[0].mxu0 %v979
        %v1049 = vpop.f32.mrb[0].mxu0
        %v1050 = vadd.f32 %v813, %v1049
        %v1051 = vpop.f32.mrb[0].mxu0
        %1052 = vdwg.mxu0
        %v1053 = vsel %vm814, %v1050, -inf
        %1054 = vmax.xlane.f32.xlu0 %v1053
        %v1055 = vpop.xlane.xlu0 %1054
        %v1056 = vsub.f32 %v1050, %v1055
        %v1057 = vmul.f32 %v1056, 1.442695
        %v1058 = vpow.pop %v1057
        %v1059 = vsel %vm814, %v1058, 0.0
        %1060 = vadd.xlane.f32.xlu0 %v1059
        %v1061 = vpop.xlane.xlu0 %1060
        %v1062 = vrcp.pop %v1061
        %v1063 = vmul.f32 %v1058, %v1062
        %1065 = vrot.lane.b32.xlu0 %v810, 120
        %v1066 = vpop.permute.xlu0 %1065
        %v1069 = vsel %vm814, %v1063, 0
        %1071 = vmatprep.subr.mxu0 0.0
        %1072 = vmatpush1.msra.mxu0 %v1066
        %1073 = vmatprep.subr.mxu0 0.0
        %1074 = vmatpush1.msra.mxu0 0.0
        %1075 = vmatprep.subr.mxu0 0.0
        %1076 = vmatpush1.msra.mxu0 0.0
        %1077 = vmatprep.subr.mxu0 0.0
        %1078 = vmatpush1.msra.mxu0 0.0
        %1079 = vmatprep.subr.mxu0 0.0
        %1080 = vmatpush1.msra.mxu0 0.0
        %1081 = vmatprep.subr.mxu0 0.0
        %1082 = vmatpush1.msra.mxu0 0.0
        %1083 = vmatprep.subr.mxu0 0.0
        %1084 = vmatpush1.msra.mxu0 0.0
        %1085 = vmatprep.subr.mxu0 0.0
        %1086 = vmatpush1.msra.mxu0 0.0
        %1087 = vmatprep.subr.mxu0 0.0
        %1088 = vmatpush1.msra.mxu0 0.0
        %1089 = vmatprep.subr.mxu0 0.0
        %1090 = vmatpush1.msra.mxu0 0.0
        %1091 = vmatprep.subr.mxu0 0.0
        %1092 = vmatpush1.msra.mxu0 0.0
        %1093 = vmatprep.subr.mxu0 0.0
        %1094 = vmatpush1.msra.mxu0 0.0
        %1095 = vmatprep.subr.mxu0 0.0
        %1096 = vmatpush1.msra.mxu0 0.0
        %1097 = vmatprep.subr.mxu0 0.0
        %1098 = vmatpush1.msra.mxu0 0.0
        %1099 = vmatprep.subr.mxu0 0.0
        %1100 = vmatpush1.msra.mxu0 0.0
        %1101 = vmatprep.subr.mxu0 0.0
        %1102 = vmatpush1.msra.mxu0 0.0
        %1103 = vmatprep.subr.mxu0 0.0
        %1104 = vmatpush1.msra.mxu0 0.0
        %1105 = vmatprep.subr.mxu0 0.0
        %1106 = vmatpush1.msra.mxu0 0.0
        %1107 = vmatprep.subr.mxu0 0.0
        %1108 = vmatpush1.msra.mxu0 0.0
        %1109 = vmatprep.subr.mxu0 0.0
        %1110 = vmatpush1.msra.mxu0 0.0
        %1111 = vmatprep.subr.mxu0 0.0
        %1112 = vmatpush1.msra.mxu0 0.0
        %1113 = vmatprep.subr.mxu0 0.0
        %1114 = vmatpush1.msra.mxu0 0.0
        %1115 = vmatprep.subr.mxu0 0.0
        %1116 = vmatpush1.msra.mxu0 0.0
        %1117 = vmatprep.subr.mxu0 0.0
        %1118 = vmatpush1.msra.mxu0 0.0
        %1119 = vmatprep.subr.mxu0 0.0
        %1120 = vmatpush1.msra.mxu0 0.0
        %1121 = vmatprep.subr.mxu0 0.0
        %1122 = vmatpush1.msra.mxu0 0.0
        %1123 = vmatprep.subr.mxu0 0.0
        %1124 = vmatpush1.msra.mxu0 0.0
        %1125 = vmatprep.subr.mxu0 0.0
        %1126 = vmatpush1.msra.mxu0 0.0
        %1127 = vmatprep.subr.mxu0 0.0
        %1128 = vmatpush1.msra.mxu0 0.0
        %1129 = vmatprep.subr.mxu0 0.0
        %1130 = vmatpush1.msra.mxu0 0.0
        %1131 = vmatprep.subr.mxu0 0.0
        %1132 = vmatpush1.msra.mxu0 0.0
        %1133 = vmatprep.subr.mxu0 0.0
        %1134 = vmatpush1.msra.mxu0 0.0
        %1135 = vmatprep.mubr.f32.mxu0 0.0
        %1136 = vmatmul.mubr.f32.gmra.mrb[0].mxu0 %v1069
        %v1137 = vpop.f32.mrb[0].mxu0
        %v1138 = vadd.f32 0.0, %v1137
        %v1139 = vpop.f32.mrb[0].mxu0
        %1140 = vdwg.mxu0
        %1141 = vrot.lane.b32.xlu0 %v642, 112
        %v1142 = vpop.permute.xlu0 %1141
        %1143 = vrot.lane.b32.xlu0 %v725, 112
        %v1144 = vpop.permute.xlu0 %1143
        %v1145 = vsel %vm814, %v1142, 0
        %v1147 = vsel %vm814, %v1144, 0
        %1149 = vmatprep.subr.mxu0 0.0
        %1150 = vmatpush1.xpose.msra.mxu0 %v1147
        %1151 = vmatprep.subr.mxu0 0.0
        %1152 = vmatpush1.xpose.msra.mxu0 0.0
        %1153 = vmatprep.subr.mxu0 0.0
        %1154 = vmatpush1.xpose.msra.mxu0 0.0
        %1155 = vmatprep.subr.mxu0 0.0
        %1156 = vmatpush1.xpose.msra.mxu0 0.0
        %1157 = vmatprep.subr.mxu0 0.0
        %1158 = vmatpush1.xpose.msra.mxu0 0.0
        %1159 = vmatprep.subr.mxu0 0.0
        %1160 = vmatpush1.xpose.msra.mxu0 0.0
        %1161 = vmatprep.subr.mxu0 0.0
        %1162 = vmatpush1.xpose.msra.mxu0 0.0
        %1163 = vmatprep.subr.mxu0 0.0
        %1164 = vmatpush1.xpose.msra.mxu0 0.0
        %1165 = vmatprep.subr.mxu0 0.0
        %1166 = vmatpush1.xpose.msra.mxu0 0.0
        %1167 = vmatprep.subr.mxu0 0.0
        %1168 = vmatpush1.xpose.msra.mxu0 0.0
        %1169 = vmatprep.subr.mxu0 0.0
        %1170 = vmatpush1.xpose.msra.mxu0 0.0
        %1171 = vmatprep.subr.mxu0 0.0
        %1172 = vmatpush1.xpose.msra.mxu0 0.0
        %1173 = vmatprep.subr.mxu0 0.0
        %1174 = vmatpush1.xpose.msra.mxu0 0.0
        %1175 = vmatprep.subr.mxu0 0.0
        %1176 = vmatpush1.xpose.msra.mxu0 0.0
        %1177 = vmatprep.subr.mxu0 0.0
        %1178 = vmatpush1.xpose.msra.mxu0 0.0
        %1179 = vmatprep.subr.mxu0 0.0
        %1180 = vmatpush1.xpose.msra.mxu0 0.0
        %1181 = vmatprep.subr.mxu0 0.0
        %1182 = vmatpush1.xpose.msra.mxu0 0.0
        %1183 = vmatprep.subr.mxu0 0.0
        %1184 = vmatpush1.xpose.msra.mxu0 0.0
        %1185 = vmatprep.subr.mxu0 0.0
        %1186 = vmatpush1.xpose.msra.mxu0 0.0
        %1187 = vmatprep.subr.mxu0 0.0
        %1188 = vmatpush1.xpose.msra.mxu0 0.0
        %1189 = vmatprep.subr.mxu0 0.0
        %1190 = vmatpush1.xpose.msra.mxu0 0.0
        %1191 = vmatprep.subr.mxu0 0.0
        %1192 = vmatpush1.xpose.msra.mxu0 0.0
        %1193 = vmatprep.subr.mxu0 0.0
        %1194 = vmatpush1.xpose.msra.mxu0 0.0
        %1195 = vmatprep.subr.mxu0 0.0
        %1196 = vmatpush1.xpose.msra.mxu0 0.0
        %1197 = vmatprep.subr.mxu0 0.0
        %1198 = vmatpush1.xpose.msra.mxu0 0.0
        %1199 = vmatprep.subr.mxu0 0.0
        %1200 = vmatpush1.xpose.msra.mxu0 0.0
        %1201 = vmatprep.subr.mxu0 0.0
        %1202 = vmatpush1.xpose.msra.mxu0 0.0
        %1203 = vmatprep.subr.mxu0 0.0
        %1204 = vmatpush1.xpose.msra.mxu0 0.0
        %1205 = vmatprep.subr.mxu0 0.0
        %1206 = vmatpush1.xpose.msra.mxu0 0.0
        %1207 = vmatprep.subr.mxu0 0.0
        %1208 = vmatpush1.xpose.msra.mxu0 0.0
        %1209 = vmatprep.subr.mxu0 0.0
        %1210 = vmatpush1.xpose.msra.mxu0 0.0
        %1211 = vmatprep.subr.mxu0 0.0
        %1212 = vmatpush1.xpose.msra.mxu0 0.0
        %1213 = vmatprep.mubr.f32.mxu0 0.0
        %1214 = vmatmul.mubr.f32.gmra.mrb[0].mxu0 %v1145
        %v1215 = vpop.f32.mrb[0].mxu0
        %v1216 = vadd.f32 %v813, %v1215
        %v1217 = vpop.f32.mrb[0].mxu0
        %1218 = vdwg.mxu0
        %v1219 = vsel %vm814, %v1216, -inf
        %1220 = vmax.xlane.f32.xlu0 %v1219
        %v1221 = vpop.xlane.xlu0 %1220
        %v1222 = vsub.f32 %v1216, %v1221
        %v1223 = vmul.f32 %v1222, 1.442695
        %v1224 = vpow.pop %v1223
        %v1225 = vsel %vm814, %v1224, 0.0
        %1226 = vadd.xlane.f32.xlu0 %v1225
        %v1227 = vpop.xlane.xlu0 %1226
        %v1228 = vrcp.pop %v1227
        %v1229 = vmul.f32 %v1224, %v1228
        %1230 = vrot.lane.b32.xlu0 %v810, 112
        %v1231 = vpop.permute.xlu0 %1230
        %v1234 = vsel %vm814, %v1229, 0
        %1236 = vmatprep.subr.mxu0 0.0
        %1237 = vmatpush1.msra.mxu0 %v1231
        %1238 = vmatprep.subr.mxu0 0.0
        %1239 = vmatpush1.msra.mxu0 0.0
        %1240 = vmatprep.subr.mxu0 0.0
        %1241 = vmatpush1.msra.mxu0 0.0
        %1242 = vmatprep.subr.mxu0 0.0
        %1243 = vmatpush1.msra.mxu0 0.0
        %1244 = vmatprep.subr.mxu0 0.0
        %1245 = vmatpush1.msra.mxu0 0.0
        %1246 = vmatprep.subr.mxu0 0.0
        %1247 = vmatpush1.msra.mxu0 0.0
        %1248 = vmatprep.subr.mxu0 0.0
        %1249 = vmatpush1.msra.mxu0 0.0
        %1250 = vmatprep.subr.mxu0 0.0
        %1251 = vmatpush1.msra.mxu0 0.0
        %1252 = vmatprep.subr.mxu0 0.0
        %1253 = vmatpush1.msra.mxu0 0.0
        %1254 = vmatprep.subr.mxu0 0.0
        %1255 = vmatpush1.msra.mxu0 0.0
        %1256 = vmatprep.subr.mxu0 0.0
        %1257 = vmatpush1.msra.mxu0 0.0
        %1258 = vmatprep.subr.mxu0 0.0
        %1259 = vmatpush1.msra.mxu0 0.0
        %1260 = vmatprep.subr.mxu0 0.0
        %1261 = vmatpush1.msra.mxu0 0.0
        %1262 = vmatprep.subr.mxu0 0.0
        %1263 = vmatpush1.msra.mxu0 0.0
        %1264 = vmatprep.subr.mxu0 0.0
        %1265 = vmatpush1.msra.mxu0 0.0
        %1266 = vmatprep.subr.mxu0 0.0
        %1267 = vmatpush1.msra.mxu0 0.0
        %1268 = vmatprep.subr.mxu0 0.0
        %1269 = vmatpush1.msra.mxu0 0.0
        %1270 = vmatprep.subr.mxu0 0.0
        %1271 = vmatpush1.msra.mxu0 0.0
        %1272 = vmatprep.subr.mxu0 0.0
        %1273 = vmatpush1.msra.mxu0 0.0
        %1274 = vmatprep.subr.mxu0 0.0
        %1275 = vmatpush1.msra.mxu0 0.0
        %1276 = vmatprep.subr.mxu0 0.0
        %1277 = vmatpush1.msra.mxu0 0.0
        %1278 = vmatprep.subr.mxu0 0.0
        %1279 = vmatpush1.msra.mxu0 0.0
        %1280 = vmatprep.subr.mxu0 0.0
        %1281 = vmatpush1.msra.mxu0 0.0
        %1282 = vmatprep.subr.mxu0 0.0
        %1283 = vmatpush1.msra.mxu0 0.0
        %1284 = vmatprep.subr.mxu0 0.0
        %1285 = vmatpush1.msra.mxu0 0.0
        %1286 = vmatprep.subr.mxu0 0.0
        %1287 = vmatpush1.msra.mxu0 0.0
        %1288 = vmatprep.subr.mxu0 0.0
        %1289 = vmatpush1.msra.mxu0 0.0
        %1290 = vmatprep.subr.mxu0 0.0
        %1291 = vmatpush1.msra.mxu0 0.0
        %1292 = vmatprep.subr.mxu0 0.0
        %1293 = vmatpush1.msra.mxu0 0.0
        %1294 = vmatprep.subr.mxu0 0.0
        %1295 = vmatpush1.msra.mxu0 0.0
        %1296 = vmatprep.subr.mxu0 0.0
        %1297 = vmatpush1.msra.mxu0 0.0
        %1298 = vmatprep.subr.mxu0 0.0
        %1299 = vmatpush1.msra.mxu0 0.0
        %1300 = vmatprep.mubr.f32.mxu0 0.0
        %1301 = vmatmul.mubr.f32.gmra.mrb[0].mxu0 %v1234
        %v1302 = vpop.f32.mrb[0].mxu0
        %v1303 = vadd.f32 0.0, %v1302
        %v1304 = vpop.f32.mrb[0].mxu0
        %1305 = vdwg.mxu0
        %1306 = vrot.lane.b32.xlu0 %v642, 104
        %v1307 = vpop.permute.xlu0 %1306
        %1308 = vrot.lane.b32.xlu0 %v725, 104
        %v1309 = vpop.permute.xlu0 %1308
        %v1310 = vsel %vm814, %v1307, 0
        %v1312 = vsel %vm814, %v1309, 0
        %1314 = vmatprep.subr.mxu0 0.0
        %1315 = vmatpush1.xpose.msra.mxu0 %v1312
        %1316 = vmatprep.subr.mxu0 0.0
        %1317 = vmatpush1.xpose.msra.mxu0 0.0
        %1318 = vmatprep.subr.mxu0 0.0
        %1319 = vmatpush1.xpose.msra.mxu0 0.0
        %1320 = vmatprep.subr.mxu0 0.0
        %1321 = vmatpush1.xpose.msra.mxu0 0.0
        %1322 = vmatprep.subr.mxu0 0.0
        %1323 = vmatpush1.xpose.msra.mxu0 0.0
        %1324 = vmatprep.subr.mxu0 0.0
        %1325 = vmatpush1.xpose.msra.mxu0 0.0
        %1326 = vmatprep.subr.mxu0 0.0
        %1327 = vmatpush1.xpose.msra.mxu0 0.0
        %1328 = vmatprep.subr.mxu0 0.0
        %1329 = vmatpush1.xpose.msra.mxu0 0.0
        %1330 = vmatprep.subr.mxu0 0.0
        %1331 = vmatpush1.xpose.msra.mxu0 0.0
        %1332 = vmatprep.subr.mxu0 0.0
        %1333 = vmatpush1.xpose.msra.mxu0 0.0
        %1334 = vmatprep.subr.mxu0 0.0
        %1335 = vmatpush1.xpose.msra.mxu0 0.0
        %1336 = vmatprep.subr.mxu0 0.0
        %1337 = vmatpush1.xpose.msra.mxu0 0.0
        %1338 = vmatprep.subr.mxu0 0.0
        %1339 = vmatpush1.xpose.msra.mxu0 0.0
        %1340 = vmatprep.subr.mxu0 0.0
        %1341 = vmatpush1.xpose.msra.mxu0 0.0
        %1342 = vmatprep.subr.mxu0 0.0
        %1343 = vmatpush1.xpose.msra.mxu0 0.0
        %1344 = vmatprep.subr.mxu0 0.0
        %1345 = vmatpush1.xpose.msra.mxu0 0.0
        %1346 = vmatprep.subr.mxu0 0.0
        %1347 = vmatpush1.xpose.msra.mxu0 0.0
        %1348 = vmatprep.subr.mxu0 0.0
        %1349 = vmatpush1.xpose.msra.mxu0 0.0
        %1350 = vmatprep.subr.mxu0 0.0
        %1351 = vmatpush1.xpose.msra.mxu0 0.0
        %1352 = vmatprep.subr.mxu0 0.0
        %1353 = vmatpush1.xpose.msra.mxu0 0.0
        %1354 = vmatprep.subr.mxu0 0.0
        %1355 = vmatpush1.xpose.msra.mxu0 0.0
        %1356 = vmatprep.subr.mxu0 0.0
        %1357 = vmatpush1.xpose.msra.mxu0 0.0
        %1358 = vmatprep.subr.mxu0 0.0
        %1359 = vmatpush1.xpose.msra.mxu0 0.0
        %1360 = vmatprep.subr.mxu0 0.0
        %1361 = vmatpush1.xpose.msra.mxu0 0.0
        %1362 = vmatprep.subr.mxu0 0.0
        %1363 = vmatpush1.xpose.msra.mxu0 0.0
        %1364 = vmatprep.subr.mxu0 0.0
        %1365 = vmatpush1.xpose.msra.mxu0 0.0
        %1366 = vmatprep.subr.mxu0 0.0
        %1367 = vmatpush1.xpose.msra.mxu0 0.0
        %1368 = vmatprep.subr.mxu0 0.0
        %1369 = vmatpush1.xpose.msra.mxu0 0.0
        %1370 = vmatprep.subr.mxu0 0.0
        %1371 = vmatpush1.xpose.msra.mxu0 0.0
        %1372 = vmatprep.subr.mxu0 0.0
        %1373 = vmatpush1.xpose.msra.mxu0 0.0
        %1374 = vmatprep.subr.mxu0 0.0
        %1375 = vmatpush1.xpose.msra.mxu0 0.0
        %1376 = vmatprep.subr.mxu0 0.0
        %1377 = vmatpush1.xpose.msra.mxu0 0.0
        %1378 = vmatprep.mubr.f32.mxu0 0.0
        %1379 = vmatmul.mubr.f32.gmra.mrb[0].mxu0 %v1310
        %v1380 = vpop.f32.mrb[0].mxu0
        %v1381 = vadd.f32 %v813, %v1380
        %v1382 = vpop.f32.mrb[0].mxu0
        %1383 = vdwg.mxu0
        %v1384 = vsel %vm814, %v1381, -inf
        %1385 = vmax.xlane.f32.xlu0 %v1384
        %v1386 = vpop.xlane.xlu0 %1385
        %v1387 = vsub.f32 %v1381, %v1386
        %v1388 = vmul.f32 %v1387, 1.442695
        %v1389 = vpow.pop %v1388
        %v1390 = vsel %vm814, %v1389, 0.0
        %1391 = vadd.xlane.f32.xlu0 %v1390
        %v1392 = vpop.xlane.xlu0 %1391
        %v1393 = vrcp.pop %v1392
        %v1394 = vmul.f32 %v1389, %v1393
        %1395 = vrot.lane.b32.xlu0 %v810, 104
        %v1396 = vpop.permute.xlu0 %1395
        %v1399 = vsel %vm814, %v1394, 0
        %1401 = vmatprep.subr.mxu0 0.0
        %1402 = vmatpush1.msra.mxu0 %v1396
        %1403 = vmatprep.subr.mxu0 0.0
        %1404 = vmatpush1.msra.mxu0 0.0
        %1405 = vmatprep.subr.mxu0 0.0
        %1406 = vmatpush1.msra.mxu0 0.0
        %1407 = vmatprep.subr.mxu0 0.0
        %1408 = vmatpush1.msra.mxu0 0.0
        %1409 = vmatprep.subr.mxu0 0.0
        %1410 = vmatpush1.msra.mxu0 0.0
        %1411 = vmatprep.subr.mxu0 0.0
        %1412 = vmatpush1.msra.mxu0 0.0
        %1413 = vmatprep.subr.mxu0 0.0
        %1414 = vmatpush1.msra.mxu0 0.0
        %1415 = vmatprep.subr.mxu0 0.0
        %1416 = vmatpush1.msra.mxu0 0.0
        %1417 = vmatprep.subr.mxu0 0.0
        %1418 = vmatpush1.msra.mxu0 0.0
        %1419 = vmatprep.subr.mxu0 0.0
        %1420 = vmatpush1.msra.mxu0 0.0
        %1421 = vmatprep.subr.mxu0 0.0
        %1422 = vmatpush1.msra.mxu0 0.0
        %1423 = vmatprep.subr.mxu0 0.0
        %1424 = vmatpush1.msra.mxu0 0.0
        %1425 = vmatprep.subr.mxu0 0.0
        %1426 = vmatpush1.msra.mxu0 0.0
        %1427 = vmatprep.subr.mxu0 0.0
        %1428 = vmatpush1.msra.mxu0 0.0
        %1429 = vmatprep.subr.mxu0 0.0
        %1430 = vmatpush1.msra.mxu0 0.0
        %1431 = vmatprep.subr.mxu0 0.0
        %1432 = vmatpush1.msra.mxu0 0.0
        %1433 = vmatprep.subr.mxu0 0.0
        %1434 = vmatpush1.msra.mxu0 0.0
        %1435 = vmatprep.subr.mxu0 0.0
        %1436 = vmatpush1.msra.mxu0 0.0
        %1437 = vmatprep.subr.mxu0 0.0
        %1438 = vmatpush1.msra.mxu0 0.0
        %1439 = vmatprep.subr.mxu0 0.0
        %1440 = vmatpush1.msra.mxu0 0.0
        %1441 = vmatprep.subr.mxu0 0.0
        %1442 = vmatpush1.msra.mxu0 0.0
        %1443 = vmatprep.subr.mxu0 0.0
        %1444 = vmatpush1.msra.mxu0 0.0
        %1445 = vmatprep.subr.mxu0 0.0
        %1446 = vmatpush1.msra.mxu0 0.0
        %1447 = vmatprep.subr.mxu0 0.0
        %1448 = vmatpush1.msra.mxu0 0.0
        %1449 = vmatprep.subr.mxu0 0.0
        %1450 = vmatpush1.msra.mxu0 0.0
        %1451 = vmatprep.subr.mxu0 0.0
        %1452 = vmatpush1.msra.mxu0 0.0
        %1453 = vmatprep.subr.mxu0 0.0
        %1454 = vmatpush1.msra.mxu0 0.0
        %1455 = vmatprep.subr.mxu0 0.0
        %1456 = vmatpush1.msra.mxu0 0.0
        %1457 = vmatprep.subr.mxu0 0.0
        %1458 = vmatpush1.msra.mxu0 0.0
        %1459 = vmatprep.subr.mxu0 0.0
        %1460 = vmatpush1.msra.mxu0 0.0
        %1461 = vmatprep.subr.mxu0 0.0
        %1462 = vmatpush1.msra.mxu0 0.0
        %1463 = vmatprep.subr.mxu0 0.0
        %1464 = vmatpush1.msra.mxu0 0.0
        %1465 = vmatprep.mubr.f32.mxu0 0.0
        %1466 = vmatmul.mubr.f32.gmra.mrb[0].mxu0 %v1399
        %v1467 = vpop.f32.mrb[0].mxu0
        %v1468 = vadd.f32 0.0, %v1467
        %v1469 = vpop.f32.mrb[0].mxu0
        %1470 = vdwg.mxu0
        %1472 = vrot.lane.b32.xlu0 %v1138, 8
        %v1473 = vpop.permute.xlu0 %1472
        %1476 = vrot.lane.b32.xlu0 %v1303, 16
        %v1477 = vpop.permute.xlu0 %1476
        %1480 = vrot.lane.b32.xlu0 %v1468, 24
        %v1481 = vpop.permute.xlu0 %1480
        %v1483 = vsel %vm814, %v972, %v1473
        %vm1484 = vcmask 130048
        %v1485 = vsel %vm1484, %v1483, %v1477
        %vm1486 = vcmask 195584
        %v1487 = vsel %vm1486, %v1485, %v1481
        %v1488 = vld [vmem:[%s10] sm:$0xff]
        %v1489 = vld [vmem:[%s10 + $0x8] sm:$0xff]
        %v1490 = vld [vmem:[%s10 + $0x10] sm:$0xff]
        %v1491 = vld [vmem:[%s10 + $0x18] sm:$0xff]
        %v1492 = vld [vmem:[%s11] sm:$0x1]
        %v1494 = vlaneseq
        %v1495 = vshrl.u32 %v1494, 7
        %v1496 = vsub.s32 0, %v1495
        %v1497 = vrot.slane %v1492, %v1496
        %v1500 = vsel %vm568, %v1487, 0
        %1502 = vmatprep.subr.mxu0 0.0
        %1503 = vmatpush1.msra.mxu0 %v1488
        %1504 = vmatprep.subr.mxu0 0.0
        %1505 = vmatpush1.msra.mxu0 %v1489
        %1506 = vmatprep.subr.mxu0 0.0
        %1507 = vmatpush1.msra.mxu0 %v1490
        %1508 = vmatprep.subr.mxu0 0.0
        %1509 = vmatpush1.msra.mxu0 %v1491
        %1510 = vmatprep.subr.mxu0 0.0
        %1511 = vmatpush1.msra.mxu0 0.0
        %1512 = vmatprep.subr.mxu0 0.0
        %1513 = vmatpush1.msra.mxu0 0.0
        %1514 = vmatprep.subr.mxu0 0.0
        %1515 = vmatpush1.msra.mxu0 0.0
        %1516 = vmatprep.subr.mxu0 0.0
        %1517 = vmatpush1.msra.mxu0 0.0
        %1518 = vmatprep.subr.mxu0 0.0
        %1519 = vmatpush1.msra.mxu0 0.0
        %1520 = vmatprep.subr.mxu0 0.0
        %1521 = vmatpush1.msra.mxu0 0.0
        %1522 = vmatprep.subr.mxu0 0.0
        %1523 = vmatpush1.msra.mxu0 0.0
        %1524 = vmatprep.subr.mxu0 0.0
        %1525 = vmatpush1.msra.mxu0 0.0
        %1526 = vmatprep.subr.mxu0 0.0
        %1527 = vmatpush1.msra.mxu0 0.0
        %1528 = vmatprep.subr.mxu0 0.0
        %1529 = vmatpush1.msra.mxu0 0.0
        %1530 = vmatprep.subr.mxu0 0.0
        %1531 = vmatpush1.msra.mxu0 0.0
        %1532 = vmatprep.subr.mxu0 0.0
        %1533 = vmatpush1.msra.mxu0 0.0
        %1534 = vmatprep.subr.mxu0 0.0
        %1535 = vmatpush1.msra.mxu0 0.0
        %1536 = vmatprep.subr.mxu0 0.0
        %1537 = vmatpush1.msra.mxu0 0.0
        %1538 = vmatprep.subr.mxu0 0.0
        %1539 = vmatpush1.msra.mxu0 0.0
        %1540 = vmatprep.subr.mxu0 0.0
        %1541 = vmatpush1.msra.mxu0 0.0
        %1542 = vmatprep.subr.mxu0 0.0
        %1543 = vmatpush1.msra.mxu0 0.0
        %1544 = vmatprep.subr.mxu0 0.0
        %1545 = vmatpush1.msra.mxu0 0.0
        %1546 = vmatprep.subr.mxu0 0.0
        %1547 = vmatpush1.msra.mxu0 0.0
        %1548 = vmatprep.subr.mxu0 0.0
        %1549 = vmatpush1.msra.mxu0 0.0
        %1550 = vmatprep.subr.mxu0 0.0
        %1551 = vmatpush1.msra.mxu0 0.0
        %1552 = vmatprep.subr.mxu0 0.0
        %1553 = vmatpush1.msra.mxu0 0.0
        %1554 = vmatprep.subr.mxu0 0.0
        %1555 = vmatpush1.msra.mxu0 0.0
        %1556 = vmatprep.subr.mxu0 0.0
        %1557 = vmatpush1.msra.mxu0 0.0
        %1558 = vmatprep.subr.mxu0 0.0
        %1559 = vmatpush1.msra.mxu0 0.0
        %1560 = vmatprep.subr.mxu0 0.0
        %1561 = vmatpush1.msra.mxu0 0.0
        %1562 = vmatprep.subr.mxu0 0.0
        %1563 = vmatpush1.msra.mxu0 0.0
        %1564 = vmatprep.subr.mxu0 0.0
        %1565 = vmatpush1.msra.mxu0 0.0
        %1566 = vmatprep.mubr.f32.mxu0 0.0
        %1567 = vmatmul.mubr.f32.gmra.mrb[0].mxu0 %v1500
        %v1568 = vpop.f32.mrb[0].mxu0
        %v1569 = vadd.f32 %v1497, %v1568
        %v1570 = vpop.f32.mrb[0].mxu0
        %1571 = vdwg.mxu0
        %1572 = vst.msk [vmem:[%s555] sm:$0xff] %vm568, %v1569
        %s1573 = sand.u32 %s309, 1
        %s1574 = scalar_lea.sflag [#allocation4], %s1573
        %s1575 = sand.u32 %s309, 1
        %s1576 = smul.addr %s1575, 8
        %s1577 = scalar_lea.vmem [#allocation14], %s1576
        // Predicated region
        $region97: #{tpu_custom_call.1} parent=67 // pred_check
          %p1578 = pneg %p319
        $region98: #{tpu_custom_call.1} parent=67 // pred_check_branch
          %1580 = sbr.rel (%p1578) target = $region100
        $region99: #{tpu_custom_call.1} parent=67 // pred_region
          %s1582 = ssub.s32 128, 128
          %1583 = vsyncadd %s1574, %s1582
          %s1584 = smul.addr %s34, 128
          %s1585 = scalar_lea.hbm %s12, %s1584
          %s1587 = sshll.u32 %s1577, 4
          %s1588 = int_to_ptr.vmem [resolvable:$true] %s1587
          %1590 = dma.vmem_to_hbm [thread:$0]  %s1588, 128, %s1585, %s1574
        $region100: #{tpu_custom_call.1} parent=67 // pred_fallthru
          _
      $region68: #{tpu_custom_call.1} parent=5 // pred_fallthru
        _
      %p1591 = scmp.le.s32.totalorder 2, %s29
      // Predicated region
      $region101: #{tpu_custom_call.1} parent=5 // pred_check
        %p1592 = pneg %p1591
      $region102: #{tpu_custom_call.1} parent=5 // pred_check_branch
        %1594 = sbr.rel (%p1592) target = $region104
      $region103: #{tpu_custom_call.1} parent=5 // pred_region
        %s1595 = ssub.s32 %s29, 2
        // Predicated region
        $region105: #{tpu_custom_call.1} parent=103 // pred_check
          %p1596 = pneg %p325
        $region106: #{tpu_custom_call.1} parent=103 // pred_check_branch
          %1598 = sbr.rel (%p1596) target = $region108
        $region107: #{tpu_custom_call.1} parent=103 // pred_region
          %s1599 = sand.u32 %s310, 1
          %s1600 = scalar_lea.sflag [#allocation4], %s1599
          %s1601 = sand.u32 %s310, 1
          %s1602 = smul.addr %s1601, 8
          %s1603 = scalar_lea.vmem [#allocation14], %s1602
          %1604 = dma.done %s1600, 128
        $region108: #{tpu_custom_call.1} parent=103 // pred_fallthru
          _
      $region104: #{tpu_custom_call.1} parent=5 // pred_fallthru
        _
    $region6: #{tpu_custom_call.1} parent=1 // loop_footer
      %s33 = sadd.s32 1, %s29
    $region7: #{tpu_custom_call.1} parent=1 // loop_footer_branch
      %28 = sbr.rel target = $region3
    $region8: #{tpu_custom_call.1} parent=1 // loop_exit
      _
    %1605 = vsyncpa [#allocation3], 1
    %s1606 = scalar_lea.sflag [#allocation3], 1
    %1607 = vsyncpa %s1606, 1
    %1608 = vsyncpa [#allocation6], 1
    %s1609 = scalar_lea.sflag [#allocation6], 1
    %1610 = vsyncpa %s1609, 1
    %1611 = vsyncpa [#allocation9], 1
    %1612 = vsyncpa [#allocation12], 1
    %1613 = vsyncpa [#allocation4], 1
    %s1614 = scalar_lea.sflag [#allocation4], 1
    %1615 = vsyncpa %s1614, 1

// kernel: tpu_custom_call.1
$region0: #{tpu_custom_call.1}
  #allocation0 [shape = 'u32[]', space=smem, size = 0x4, offset = 0x4, fixed_abs, tag = 'smem constant byte address 0x4 - core index']
  #allocation1 [shape = 'u32[144,128]{1,0:T(1,128)}', space=vmem, size = 0x12000, scoped, tag = 'internal scratch']
  %s0 = inlined_call_operand.hbm [shape: f32[4,8,32], index: 0, kind: input, shape index: {}]
  %s1 = inlined_call_operand.hbm [shape: f32[4,8,32], index: 1, kind: input, shape index: {}]
  %s2 = inlined_call_operand.hbm [shape: f32[4,8,32], index: 2, kind: input, shape index: {}]
  %s3 = inlined_call_operand.hbm [shape: f32[1,8,8], index: 3, kind: input, shape index: {}]
  %s4 = inlined_call_operand.hbm [shape: f32[32,32], index: 4, kind: input, shape index: {}]
  %s5 = inlined_call_operand.vmem [shape: f32[1,32], index: 5, kind: input, shape index: {}]
  %s6 = inlined_call_operand.hbm [shape: f32[32,32], index: 6, kind: input, shape index: {}]
  %s7 = inlined_call_operand.vmem [shape: f32[1,32], index: 7, kind: input, shape index: {}]
  %s8 = inlined_call_operand.hbm [shape: f32[32,32], index: 8, kind: input, shape index: {}]
  %s9 = inlined_call_operand.vmem [shape: f32[1,32], index: 9, kind: input, shape index: {}]
  %s10 = inlined_call_operand.vmem [shape: f32[32,32], index: 10, kind: input, shape index: {}]
  %s11 = inlined_call_operand.vmem [shape: f32[1,32], index: 11, kind: input, shape index: {}]
  %s12 = inlined_call_operand.hbm [shape: f32[4,8,32], index: 12, kind: output, shape index: {}]
  %s13 = sld [smem:[#allocation0]]
  $region109: #{tpu_custom_call.1} parent=0
    _
  %s15 = ssub.s32 1, %s13
  %s16 = scalar_select 0, %s15, %s13
  $region1: #{tpu_custom_call.1} parent=0
    #allocation2 [shape = 'u8[8192]{0}', space=vmem, size = 0x2000, scoped, tag = 'input window, operand 0']
    #allocation3 [shape = 's32[2]{0}', space=sflag, size = 0x8, scoped, tag = 'scoped memory for tpu_custom_call.1']
    #allocation4 [shape = 's32[2]{0}', space=sflag, size = 0x8, scoped, tag = 'scoped memory for tpu_custom_call.1']
    #allocation5 [shape = 'u8[8192]{0}', space=vmem, size = 0x2000, scoped, tag = 'input window, operand 1']
    #allocation6 [shape = 's32[2]{0}', space=sflag, size = 0x8, scoped, tag = 'scoped memory for tpu_custom_call.1']
    #allocation7 [shape = 'u8[8192]{0}', space=vmem, size = 0x2000, scoped, tag = 'input window, operand 2']
    #allocation8 [shape = 'u8[4096]{0}', space=vmem, size = 0x1000, scoped, tag = 'input window, operand 3, single buffered']
    #allocation9 [shape = 's32[1]{0}', space=sflag, size = 0x4, scoped, tag = 'scoped memory for tpu_custom_call.1']
    #allocation10 [shape = 'u8[16384]{0}', space=vmem, size = 0x4000, scoped, tag = 'input window, operand 4, single buffered']
    #allocation11 [shape = 'u8[16384]{0}', space=vmem, size = 0x4000, scoped, tag = 'input window, operand 6, single buffered']
    #allocation12 [shape = 's32[1]{0}', space=sflag, size = 0x4, scoped, tag = 'scoped memory for tpu_custom_call.1']
    #allocation13 [shape = 'u8[16384]{0}', space=vmem, size = 0x4000, scoped, tag = 'input window, operand 8, single buffered']
    #allocation14 [shape = 'u8[8192]{0}', space=vmem, size = 0x2000, scoped, tag = 'output window, operand 0']
    %17 = vsyncpa [#allocation3], 0
    %s18 = scalar_lea.sflag [#allocation3], 1
    %19 = vsyncpa %s18, 0
    %20 = vsyncpa [#allocation6], 0
    %s21 = scalar_lea.sflag [#allocation6], 1
    %22 = vsyncpa %s21, 0
    %23 = vsyncpa [#allocation9], 0
    %24 = vsyncpa [#allocation12], 0
    %25 = vsyncpa [#allocation4], 0
    %s26 = scalar_lea.sflag [#allocation4], 1
    %27 = vsyncpa %s26, 0
    loop: start=0, step=1, limit=6
    $region2: #{tpu_custom_call.1} parent=1 // loop_pre_header
      _
    $region3: #{tpu_custom_call.1} parent=1 // loop_header
      %s29 = sphi 0, %s33
      %p30 = scmp.ge.s32.totalorder %s29, 6
      %s39 = sphi 0, %s41
      %s42 = sphi 0, %s39
      %s43 = sphi 0, %s42
      %s59 = sphi 0, %s43
      %s65 = sphi 0, %s67
      %s68 = sphi 0, %s65
      %s69 = sphi 0, %s68
      %s85 = sphi 0, %s69
      %s91 = sphi 0, %s93
      %s94 = sphi 0, %s91
      %s95 = sphi 0, %s94
      %s111 = sphi 0, %s95
      %s115 = sphi 0, %s115
      %s117 = sphi 0, %s115
      %s118 = sphi 0, %s117
      %s132 = sphi 0, %s118
      %s136 = sphi 0, %s136
      %s138 = sphi 0, %s136
      %s139 = sphi 0, %s138
      %s153 = sphi 0, %s139
      %s157 = sphi 0, %s157
      %s159 = sphi 0, %s157
      %s160 = sphi 0, %s159
      %s174 = sphi 0, %s160
      %s178 = sphi 0, %s178
      %s180 = sphi 0, %s178
      %s181 = sphi 0, %s180
      %s195 = sphi 0, %s181
      %s199 = sphi 0, %s199
      %s201 = sphi 0, %s199
      %s202 = sphi 0, %s201
      %s216 = sphi 0, %s202
      %s220 = sphi 0, %s220
      %s222 = sphi 0, %s220
      %s223 = sphi 0, %s222
      %s237 = sphi 0, %s223
      %s241 = sphi 0, %s241
      %s243 = sphi 0, %s241
      %s244 = sphi 0, %s243
      %s258 = sphi 0, %s244
      %s262 = sphi 0, %s262
      %s264 = sphi 0, %s262
      %s265 = sphi 0, %s264
      %s279 = sphi 0, %s265
      %s283 = sphi 0, %s283
      %s285 = sphi 0, %s283
      %s286 = sphi 0, %s285
      %s300 = sphi 0, %s286
      %s306 = sphi 0, %s308
      %s309 = sphi 0, %s306
      %s310 = sphi 0, %s309
      %s326 = sphi 0, %s310
    $region4: #{tpu_custom_call.1} parent=1 // loop_header_branch
      %32 = sbr.rel (%p30) target = $region8
    $region5: #{tpu_custom_call.1} parent=1 // loop_body
      %s34 = ssub.s32 %s29, 1
      %s35 = ssub.s32 %s29, 2
      %s36 = sadd.s32 %s29, 1
      %s37 = ssub.s32 %s29, %s36
      %p38 = scmp.eq.s32.totalorder %s37, 0
      %s40 = sadd.s32 %s39, 1
      %s41 = scalar_select %p38, %s39, %s40
      %p44 = pneg %p38
      %p45 = scmp.eq.s32.totalorder %s29, 3
      %p46 = por %p44, %p45
      %p47 = scmp.ne.s32.totalorder %s39, %s42
      %p48 = scmp.eq.s32.totalorder %s29, 0
      %p49 = por %p47, %p48
      %p50 = scmp.ne.s32.totalorder %s39, %s42
      %p51 = scmp.eq.s32.totalorder %s34, 3
      %p52 = por %p50, %p51
      %p53 = scmp.ne.s32.totalorder %s42, %s43
      %p54 = scmp.eq.s32.totalorder %s34, 0
      %p55 = por %p53, %p54
      %p56 = scmp.ne.s32.totalorder %s42, %s43
      %p57 = scmp.eq.s32.totalorder %s35, 3
      %p58 = por %p56, %p57
      %p60 = scmp.ne.s32.totalorder %s43, %s59
      %p61 = scmp.eq.s32.totalorder %s35, 0
      %p62 = por %p60, %p61
      %s63 = ssub.s32 %s29, %s36
      %p64 = scmp.eq.s32.totalorder %s63, 0
      %s66 = sadd.s32 %s65, 1
      %s67 = scalar_select %p64, %s65, %s66
      %p70 = pneg %p64
      %p71 = scmp.eq.s32.totalorder %s29, 3
      %p72 = por %p70, %p71
      %p73 = scmp.ne.s32.totalorder %s65, %s68
      %p74 = scmp.eq.s32.totalorder %s29, 0
      %p75 = por %p73, %p74
      %p76 = scmp.ne.s32.totalorder %s65, %s68
      %p77 = scmp.eq.s32.totalorder %s34, 3
      %p78 = por %p76, %p77
      %p79 = scmp.ne.s32.totalorder %s68, %s69
      %p80 = scmp.eq.s32.totalorder %s34, 0
      %p81 = por %p79, %p80
      %p82 = scmp.ne.s32.totalorder %s68, %s69
      %p83 = scmp.eq.s32.totalorder %s35, 3
      %p84 = por %p82, %p83
      %p86 = scmp.ne.s32.totalorder %s69, %s85
      %p87 = scmp.eq.s32.totalorder %s35, 0
      %p88 = por %p86, %p87
      %s89 = ssub.s32 %s29, %s36
      %p90 = scmp.eq.s32.totalorder %s89, 0
      %s92 = sadd.s32 %s91, 1
      %s93 = scalar_select %p90, %s91, %s92
      %p96 = pneg %p90
      %p97 = scmp.eq.s32.totalorder %s29, 3
      %p98 = por %p96, %p97
      %p99 = scmp.ne.s32.totalorder %s91, %s94
      %p100 = scmp.eq.s32.totalorder %s29, 0
      %p101 = por %p99, %p100
      %p102 = scmp.ne.s32.totalorder %s91, %s94
      %p103 = scmp.eq.s32.totalorder %s34, 3
      %p104 = por %p102, %p103
      %p105 = scmp.ne.s32.totalorder %s94, %s95
      %p106 = scmp.eq.s32.totalorder %s34, 0
      %p107 = por %p105, %p106
      %p108 = scmp.ne.s32.totalorder %s94, %s95
      %p109 = scmp.eq.s32.totalorder %s35, 3
      %p110 = por %p108, %p109
      %p112 = scmp.ne.s32.totalorder %s95, %s111
      %p113 = scmp.eq.s32.totalorder %s35, 0
      %p114 = por %p112, %p113
      %s116 = sadd.s32 %s115, 1
      %p119 = scmp.eq.s32.totalorder %s29, 3
      %p120 = scmp.ne.s32.totalorder %s115, %s117
      %p121 = scmp.eq.s32.totalorder %s29, 0
      %p122 = por %p120, %p121
      %p123 = scmp.ne.s32.totalorder %s115, %s117
      %p124 = scmp.eq.s32.totalorder %s34, 3
      %p125 = por %p123, %p124
      %p126 = scmp.ne.s32.totalorder %s117, %s118
      %p127 = scmp.eq.s32.totalorder %s34, 0
      %p128 = por %p126, %p127
      %p129 = scmp.ne.s32.totalorder %s117, %s118
      %p130 = scmp.eq.s32.totalorder %s35, 3
      %p131 = por %p129, %p130
      %p133 = scmp.ne.s32.totalorder %s118, %s132
      %p134 = scmp.eq.s32.totalorder %s35, 0
      %p135 = por %p133, %p134
      %s137 = sadd.s32 %s136, 1
      %p140 = scmp.eq.s32.totalorder %s29, 3
      %p141 = scmp.ne.s32.totalorder %s136, %s138
      %p142 = scmp.eq.s32.totalorder %s29, 0
      %p143 = por %p141, %p142
      %p144 = scmp.ne.s32.totalorder %s136, %s138
      %p145 = scmp.eq.s32.totalorder %s34, 3
      %p146 = por %p144, %p145
      %p147 = scmp.ne.s32.totalorder %s138, %s139
      %p148 = scmp.eq.s32.totalorder %s34, 0
      %p149 = por %p147, %p148
      %p150 = scmp.ne.s32.totalorder %s138, %s139
      %p151 = scmp.eq.s32.totalorder %s35, 3
      %p152 = por %p150, %p151
      %p154 = scmp.ne.s32.totalorder %s139, %s153
      %p155 = scmp.eq.s32.totalorder %s35, 0
      %p156 = por %p154, %p155
      %s158 = sadd.s32 %s157, 1
      %p161 = scmp.eq.s32.totalorder %s29, 3
      %p162 = scmp.ne.s32.totalorder %s157, %s159
      %p163 = scmp.eq.s32.totalorder %s29, 0
      %p164 = por %p162, %p163
      %p165 = scmp.ne.s32.totalorder %s157, %s159
      %p166 = scmp.eq.s32.totalorder %s34, 3
      %p167 = por %p165, %p166
      %p168 = scmp.ne.s32.totalorder %s159, %s160
      %p169 = scmp.eq.s32.totalorder %s34, 0
      %p170 = por %p168, %p169
      %p171 = scmp.ne.s32.totalorder %s159, %s160
      %p172 = scmp.eq.s32.totalorder %s35, 3
      %p173 = por %p171, %p172
      %p175 = scmp.ne.s32.totalorder %s160, %s174
      %p176 = scmp.eq.s32.totalorder %s35, 0
      %p177 = por %p175, %p176
      %s179 = sadd.s32 %s178, 1
      %p182 = scmp.eq.s32.totalorder %s29, 3
      %p183 = scmp.ne.s32.totalorder %s178, %s180
      %p184 = scmp.eq.s32.totalorder %s29, 0
      %p185 = por %p183, %p184
      %p186 = scmp.ne.s32.totalorder %s178, %s180
      %p187 = scmp.eq.s32.totalorder %s34, 3
      %p188 = por %p186, %p187
      %p189 = scmp.ne.s32.totalorder %s180, %s181
      %p190 = scmp.eq.s32.totalorder %s34, 0
      %p191 = por %p189, %p190
      %p192 = scmp.ne.s32.totalorder %s180, %s181
      %p193 = scmp.eq.s32.totalorder %s35, 3
      %p194 = por %p192, %p193
      %p196 = scmp.ne.s32.totalorder %s181, %s195
      %p197 = scmp.eq.s32.totalorder %s35, 0
      %p198 = por %p196, %p197
      %s200 = sadd.s32 %s199, 1
      %p203 = scmp.eq.s32.totalorder %s29, 3
      %p204 = scmp.ne.s32.totalorder %s199, %s201
      %p205 = scmp.eq.s32.totalorder %s29, 0
      %p206 = por %p204, %p205
      %p207 = scmp.ne.s32.totalorder %s199, %s201
      %p208 = scmp.eq.s32.totalorder %s34, 3
      %p209 = por %p207, %p208
      %p210 = scmp.ne.s32.totalorder %s201, %s202
      %p211 = scmp.eq.s32.totalorder %s34, 0
      %p212 = por %p210, %p211
      %p213 = scmp.ne.s32.totalorder %s201, %s202
      %p214 = scmp.eq.s32.totalorder %s35, 3
      %p215 = por %p213, %p214
      %p217 = scmp.ne.s32.totalorder %s202, %s216
      %p218 = scmp.eq.s32.totalorder %s35, 0
      %p219 = por %p217, %p218
      %s221 = sadd.s32 %s220, 1
      %p224 = scmp.eq.s32.totalorder %s29, 3
      %p225 = scmp.ne.s32.totalorder %s220, %s222
      %p226 = scmp.eq.s32.totalorder %s29, 0
      %p227 = por %p225, %p226
      %p228 = scmp.ne.s32.totalorder %s220, %s222
      %p229 = scmp.eq.s32.totalorder %s34, 3
      %p230 = por %p228, %p229
      %p231 = scmp.ne.s32.totalorder %s222, %s223
      %p232 = scmp.eq.s32.totalorder %s34, 0
      %p233 = por %p231, %p232
      %p234 = scmp.ne.s32.totalorder %s222, %s223
      %p235 = scmp.eq.s32.totalorder %s35, 3
      %p236 = por %p234, %p235
      %p238 = scmp.ne.s32.totalorder %s223, %s237
      %p239 = scmp.eq.s32.totalorder %s35, 0
      %p240 = por %p238, %p239
      %s242 = sadd.s32 %s241, 1
      %p245 = scmp.eq.s32.totalorder %s29, 3
      %p246 = scmp.ne.s32.totalorder %s241, %s243
      %p247 = scmp.eq.s32.totalorder %s29, 0
      %p248 = por %p246, %p247
      %p249 = scmp.ne.s32.totalorder %s241, %s243
      %p250 = scmp.eq.s32.totalorder %s34, 3
      %p251 = por %p249, %p250
      %p252 = scmp.ne.s32.totalorder %s243, %s244
      %p253 = scmp.eq.s32.totalorder %s34, 0
      %p254 = por %p252, %p253
      %p255 = scmp.ne.s32.totalorder %s243, %s244
      %p256 = scmp.eq.s32.totalorder %s35, 3
      %p257 = por %p255, %p256
      %p259 = scmp.ne.s32.totalorder %s244, %s258
      %p260 = scmp.eq.s32.totalorder %s35, 0
      %p261 = por %p259, %p260
      %s263 = sadd.s32 %s262, 1
      %p266 = scmp.eq.s32.totalorder %s29, 3
      %p267 = scmp.ne.s32.totalorder %s262, %s264
      %p268 = scmp.eq.s32.totalorder %s29, 0
      %p269 = por %p267, %p268
      %p270 = scmp.ne.s32.totalorder %s262, %s264
      %p271 = scmp.eq.s32.totalorder %s34, 3
      %p272 = por %p270, %p271
      %p273 = scmp.ne.s32.totalorder %s264, %s265
      %p274 = scmp.eq.s32.totalorder %s34, 0
      %p275 = por %p273, %p274
      %p276 = scmp.ne.s32.totalorder %s264, %s265
      %p277 = scmp.eq.s32.totalorder %s35, 3
      %p278 = por %p276, %p277
      %p280 = scmp.ne.s32.totalorder %s265, %s279
      %p281 = scmp.eq.s32.totalorder %s35, 0
      %p282 = por %p280, %p281
      %s284 = sadd.s32 %s283, 1
      %p287 = scmp.eq.s32.totalorder %s29, 3
      %p288 = scmp.ne.s32.totalorder %s283, %s285
      %p289 = scmp.eq.s32.totalorder %s29, 0
      %p290 = por %p288, %p289
      %p291 = scmp.ne.s32.totalorder %s283, %s285
      %p292 = scmp.eq.s32.totalorder %s34, 3
      %p293 = por %p291, %p292
      %p294 = scmp.ne.s32.totalorder %s285, %s286
      %p295 = scmp.eq.s32.totalorder %s34, 0
      %p296 = por %p294, %p295
      %p297 = scmp.ne.s32.totalorder %s285, %s286
      %p298 = scmp.eq.s32.totalorder %s35, 3
      %p299 = por %p297, %p298
      %p301 = scmp.ne.s32.totalorder %s286, %s300
      %p302 = scmp.eq.s32.totalorder %s35, 0
      %p303 = por %p301, %p302
      %s304 = ssub.s32 %s29, %s36
      %p305 = scmp.eq.s32.totalorder %s304, 0
      %s307 = sadd.s32 %s306, 1
      %s308 = scalar_select %p305, %s306, %s307
      %p311 = pneg %p305
      %p312 = scmp.eq.s32.totalorder %s29, 3
      %p313 = por %p311, %p312
      %p314 = scmp.ne.s32.totalorder %s306, %s309
      %p315 = scmp.eq.s32.totalorder %s29, 0
      %p316 = por %p314, %p315
      %p317 = scmp.ne.s32.totalorder %s306, %s309
      %p318 = scmp.eq.s32.totalorder %s34, 3
      %p319 = por %p317, %p318
      %p320 = scmp.ne.s32.totalorder %s309, %s310
      %p321 = scmp.eq.s32.totalorder %s34, 0
      %p322 = por %p320, %p321
      %p323 = scmp.ne.s32.totalorder %s309, %s310
      %p324 = scmp.eq.s32.totalorder %s35, 3
      %p325 = por %p323, %p324
      %p327 = scmp.ne.s32.totalorder %s310, %s326
      %p328 = scmp.eq.s32.totalorder %s35, 0
      %p329 = por %p327, %p328
      %p330 = scmp.le.s32.totalorder 1, %s29
      %p331 = scmp.lt.s32.totalorder %s29, 5
      %p332 = pnand %p330, %p331
      %p333 = pneg %p332
      // Predicated region
      $region9: #{tpu_custom_call.1} parent=5 // pred_check
        _
      $region10: #{tpu_custom_call.1} parent=5 // pred_check_branch
        %335 = sbr.rel (%p332) target = $region12
      $region11: #{tpu_custom_call.1} parent=5 // pred_region
        %s336 = ssub.s32 %s29, 1
        // Predicated region
        $region13: #{tpu_custom_call.1} parent=11 // pred_check
          %p337 = pneg %p128
        $region14: #{tpu_custom_call.1} parent=11 // pred_check_branch
          %339 = sbr.rel (%p337) target = $region16
        $region15: #{tpu_custom_call.1} parent=11 // pred_region
          %s341 = ssub.s32 128, 128
          %342 = vsyncadd [#allocation9], %s341
          %s344 = sshll.u32 [#allocation8], 4
          %s345 = int_to_ptr.vmem [resolvable:$true] %s344
          %347 = dma.hbm_to_vmem [thread:$0]  %s3, 128, %s345, [#allocation9]
        $region16: #{tpu_custom_call.1} parent=11 // pred_fallthru
          _
        // Predicated region
        $region17: #{tpu_custom_call.1} parent=11 // pred_check
          %p348 = pneg %p149
        $region18: #{tpu_custom_call.1} parent=11 // pred_check_branch
          %350 = sbr.rel (%p348) target = $region20
        $region19: #{tpu_custom_call.1} parent=11 // pred_region
          %s352 = ssub.s32 512, 512
          %353 = vsyncadd [#allocation9], %s352
          %s354 = sshll.u32 [#allocation10], 4
          %s355 = int_to_ptr.vmem [resolvable:$true] %s354
          %360 = dma.hbm_to_vmem [thread:$0]  %s4, 512, %s355, [#allocation9], 128, 128, 8
        $region20: #{tpu_custom_call.1} parent=11 // pred_fallthru
          _
        // Predicated region
        $region21: #{tpu_custom_call.1} parent=11 // pred_check
          %p361 = pneg %p170
        $region22: #{tpu_custom_call.1} parent=11 // pred_check_branch
          %363 = sbr.rel (%p361) target = $region24
        $region23: #{tpu_custom_call.1} parent=11 // pred_region
          _
        $region24: #{tpu_custom_call.1} parent=11 // pred_fallthru
          _
        // Predicated region
        $region25: #{tpu_custom_call.1} parent=11 // pred_check
          %p364 = pneg %p191
        $region26: #{tpu_custom_call.1} parent=11 // pred_check_branch
          %366 = sbr.rel (%p364) target = $region28
        $region27: #{tpu_custom_call.1} parent=11 // pred_region
          %s368 = ssub.s32 512, 512
          %369 = vsyncadd [#allocation12], %s368
          %s370 = sshll.u32 [#allocation11], 4
          %s371 = int_to_ptr.vmem [resolvable:$true] %s370
          %376 = dma.hbm_to_vmem [thread:$0]  %s6, 512, %s371, [#allocation12], 128, 128, 8
        $region28: #{tpu_custom_call.1} parent=11 // pred_fallthru
          _
        // Predicated region
        $region29: #{tpu_custom_call.1} parent=11 // pred_check
          %p377 = pneg %p212
        $region30: #{tpu_custom_call.1} parent=11 // pred_check_branch
          %379 = sbr.rel (%p377) target = $region32
        $region31: #{tpu_custom_call.1} parent=11 // pred_region
          _
        $region32: #{tpu_custom_call.1} parent=11 // pred_fallthru
          _
        // Predicated region
        $region33: #{tpu_custom_call.1} parent=11 // pred_check
          %p380 = pneg %p233
        $region34: #{tpu_custom_call.1} parent=11 // pred_check_branch
          %382 = sbr.rel (%p380) target = $region36
        $region35: #{tpu_custom_call.1} parent=11 // pred_region
          %s384 = ssub.s32 512, 512
          %385 = vsyncadd [#allocation12], %s384
          %s386 = sshll.u32 [#allocation13], 4
          %s387 = int_to_ptr.vmem [resolvable:$true] %s386
          %392 = dma.hbm_to_vmem [thread:$0]  %s8, 512, %s387, [#allocation12], 128, 128, 8
        $region36: #{tpu_custom_call.1} parent=11 // pred_fallthru
          _
        // Predicated region
        $region37: #{tpu_custom_call.1} parent=11 // pred_check
          %p393 = pneg %p254
        $region38: #{tpu_custom_call.1} parent=11 // pred_check_branch
          %395 = sbr.rel (%p393) target = $region40
        $region39: #{tpu_custom_call.1} parent=11 // pred_region
          _
        $region40: #{tpu_custom_call.1} parent=11 // pred_fallthru
          _
        // Predicated region
        $region41: #{tpu_custom_call.1} parent=11 // pred_check
          %p396 = pneg %p275
        $region42: #{tpu_custom_call.1} parent=11 // pred_check_branch
          %398 = sbr.rel (%p396) target = $region44
        $region43: #{tpu_custom_call.1} parent=11 // pred_region
          _
        $region44: #{tpu_custom_call.1} parent=11 // pred_fallthru
          _
        // Predicated region
        $region45: #{tpu_custom_call.1} parent=11 // pred_check
          %p399 = pneg %p296
        $region46: #{tpu_custom_call.1} parent=11 // pred_check_branch
          %401 = sbr.rel (%p399) target = $region48
        $region47: #{tpu_custom_call.1} parent=11 // pred_region
          _
        $region48: #{tpu_custom_call.1} parent=11 // pred_fallthru
          _
      $region12: #{tpu_custom_call.1} parent=5 // pred_fallthru
        _
      %p402 = scmp.lt.s32.totalorder %s29, 4
      // Predicated region
      $region49: #{tpu_custom_call.1} parent=5 // pred_check
        %p403 = pneg %p402
      $region50: #{tpu_custom_call.1} parent=5 // pred_check_branch
        %405 = sbr.rel (%p403) target = $region52
      $region51: #{tpu_custom_call.1} parent=5 // pred_region
        // Predicated region
        $region53: #{tpu_custom_call.1} parent=51 // pred_check
          %p406 = pneg %p49
        $region54: #{tpu_custom_call.1} parent=51 // pred_check_branch
          %408 = sbr.rel (%p406) target = $region56
        $region55: #{tpu_custom_call.1} parent=51 // pred_region
          %s409 = sand.u32 %s39, 1
          %s410 = scalar_lea.sflag [#allocation3], %s409
          %s411 = sand.u32 %s39, 1
          %s412 = smul.addr %s411, 8
          %s413 = scalar_lea.vmem [#allocation2], %s412
          %s415 = ssub.s32 128, 128
          %416 = vsyncadd %s410, %s415
          %s417 = smul.addr %s29, 128
          %s418 = scalar_lea.hbm %s0, %s417
          %s420 = sshll.u32 %s413, 4
          %s421 = int_to_ptr.vmem [resolvable:$true] %s420
          %423 = dma.hbm_to_vmem [thread:$0]  %s418, 128, %s421, %s410
        $region56: #{tpu_custom_call.1} parent=51 // pred_fallthru
          _
        // Predicated region
        $region57: #{tpu_custom_call.1} parent=51 // pred_check
          %p424 = pneg %p75
        $region58: #{tpu_custom_call.1} parent=51 // pred_check_branch
          %426 = sbr.rel (%p424) target = $region60
        $region59: #{tpu_custom_call.1} parent=51 // pred_region
          %s427 = sand.u32 %s29, 1
          %s428 = scalar_lea.sflag [#allocation6], %s427
          %s429 = sand.u32 %s65, 1
          %s430 = smul.addr %s429, 8
          %s431 = scalar_lea.vmem [#allocation5], %s430
          %s433 = ssub.s32 128, 128
          %434 = vsyncadd %s428, %s433
          %s435 = smul.addr %s29, 128
          %s436 = scalar_lea.hbm %s1, %s435
          %s438 = sshll.u32 %s431, 4
          %s439 = int_to_ptr.vmem [resolvable:$true] %s438
          %441 = dma.hbm_to_vmem [thread:$0]  %s436, 128, %s439, %s428
        $region60: #{tpu_custom_call.1} parent=51 // pred_fallthru
          _
        // Predicated region
        $region61: #{tpu_custom_call.1} parent=51 // pred_check
          %p442 = pneg %p101
        $region62: #{tpu_custom_call.1} parent=51 // pred_check_branch
          %444 = sbr.rel (%p442) target = $region64
        $region63: #{tpu_custom_call.1} parent=51 // pred_region
          %s445 = sand.u32 %s29, 1
          %s446 = scalar_lea.sflag [#allocation6], %s445
          %s447 = sand.u32 %s91, 1
          %s448 = smul.addr %s447, 8
          %s449 = scalar_lea.vmem [#allocation7], %s448
          %s451 = ssub.s32 128, 128
          %452 = vsyncadd %s446, %s451
          %s453 = smul.addr %s29, 128
          %s454 = scalar_lea.hbm %s2, %s453
          %s456 = sshll.u32 %s449, 4
          %s457 = int_to_ptr.vmem [resolvable:$true] %s456
          %459 = dma.hbm_to_vmem [thread:$0]  %s454, 128, %s457, %s446
        $region64: #{tpu_custom_call.1} parent=51 // pred_fallthru
          _
      $region52: #{tpu_custom_call.1} parent=5 // pred_fallthru
        _
      %p460 = scmp.le.s32.totalorder 1, %s29
      %p461 = scmp.lt.s32.totalorder %s29, 5
      %p462 = pnand %p460, %p461
      %p463 = pneg %p462
      // Predicated region
      $region65: #{tpu_custom_call.1} parent=5 // pred_check
        _
      $region66: #{tpu_custom_call.1} parent=5 // pred_check_branch
        %465 = sbr.rel (%p462) target = $region68
      $region67: #{tpu_custom_call.1} parent=5 // pred_region
        %s466 = ssub.s32 %s29, 1
        %s467 = sand.u32 %s42, 1
        %s468 = scalar_lea.sflag [#allocation3], %s467
        %s469 = sand.u32 %s42, 1
        %s470 = smul.addr %s469, 8
        %s471 = scalar_lea.vmem [#allocation2], %s470
        // Predicated region
        $region69: #{tpu_custom_call.1} parent=67 // pred_check
          %p472 = pneg %p55
        $region70: #{tpu_custom_call.1} parent=67 // pred_check_branch
          %474 = sbr.rel (%p472) target = $region72
        $region71: #{tpu_custom_call.1} parent=67 // pred_region
          %475 = dma.done %s468, 128
        $region72: #{tpu_custom_call.1} parent=67 // pred_fallthru
          _
        %s476 = sand.u32 %s34, 1
        %s477 = scalar_lea.sflag [#allocation6], %s476
        %s478 = sand.u32 %s68, 1
        %s479 = smul.addr %s478, 8
        %s480 = scalar_lea.vmem [#allocation5], %s479
        // Predicated region
        $region73: #{tpu_custom_call.1} parent=67 // pred_check
          %p481 = pneg %p81
        $region74: #{tpu_custom_call.1} parent=67 // pred_check_branch
          %483 = sbr.rel (%p481) target = $region76
        $region75: #{tpu_custom_call.1} parent=67 // pred_region
          %484 = dma.done %s477, 128
        $region76: #{tpu_custom_call.1} parent=67 // pred_fallthru
          _
        %s485 = sand.u32 %s34, 1
        %s486 = scalar_lea.sflag [#allocation6], %s485
        %s487 = sand.u32 %s94, 1
        %s488 = smul.addr %s487, 8
        %s489 = scalar_lea.vmem [#allocation7], %s488
        // Predicated region
        $region77: #{tpu_custom_call.1} parent=67 // pred_check
          %p490 = pneg %p107
        $region78: #{tpu_custom_call.1} parent=67 // pred_check_branch
          %492 = sbr.rel (%p490) target = $region80
        $region79: #{tpu_custom_call.1} parent=67 // pred_region
          %493 = dma.done %s486, 128
        $region80: #{tpu_custom_call.1} parent=67 // pred_fallthru
          _
        // Predicated region
        $region81: #{tpu_custom_call.1} parent=67 // pred_check
          %p494 = pneg %p128
        $region82: #{tpu_custom_call.1} parent=67 // pred_check_branch
          %496 = sbr.rel (%p494) target = $region84
        $region83: #{tpu_custom_call.1} parent=67 // pred_region
          %497 = dma.done [#allocation9], 128
        $region84: #{tpu_custom_call.1} parent=67 // pred_fallthru
          _
        // Predicated region
        $region85: #{tpu_custom_call.1} parent=67 // pred_check
          %p498 = pneg %p149
        $region86: #{tpu_custom_call.1} parent=67 // pred_check_branch
          %500 = sbr.rel (%p498) target = $region88
        $region87: #{tpu_custom_call.1} parent=67 // pred_region
          %501 = dma.done [#allocation9], 512
        $region88: #{tpu_custom_call.1} parent=67 // pred_fallthru
          _
        // Predicated region
        $region89: #{tpu_custom_call.1} parent=67 // pred_check
          %p502 = pneg %p191
        $region90: #{tpu_custom_call.1} parent=67 // pred_check_branch
          %504 = sbr.rel (%p502) target = $region92
        $region91: #{tpu_custom_call.1} parent=67 // pred_region
          %505 = dma.done [#allocation12], 512
        $region92: #{tpu_custom_call.1} parent=67 // pred_fallthru
          _
        // Predicated region
        $region93: #{tpu_custom_call.1} parent=67 // pred_check
          %p506 = pneg %p233
        $region94: #{tpu_custom_call.1} parent=67 // pred_check_branch
          %508 = sbr.rel (%p506) target = $region96
        $region95: #{tpu_custom_call.1} parent=67 // pred_region
          %509 = dma.done [#allocation12], 512
        $region96: #{tpu_custom_call.1} parent=67 // pred_fallthru
          _
        %s510 = sand.u32 %s42, 1
        %s511 = scalar_lea.sflag [#allocation3], %s510
        %s512 = sand.u32 %s42, 1
        %s513 = smul.addr %s512, 8
        %s514 = scalar_lea.vmem [#allocation2], %s513
        %p515 = pneg %p55
        %p516 = pneg %p52
        %s517 = sand.u32 %s34, 1
        %s518 = scalar_lea.sflag [#allocation6], %s517
        %s519 = sand.u32 %s68, 1
        %s520 = smul.addr %s519, 8
        %s521 = scalar_lea.vmem [#allocation5], %s520
        %p522 = pneg %p81
        %p523 = pneg %p78
        %s524 = sand.u32 %s34, 1
        %s525 = scalar_lea.sflag [#allocation6], %s524
        %s526 = sand.u32 %s94, 1
        %s527 = smul.addr %s526, 8
        %s528 = scalar_lea.vmem [#allocation7], %s527
        %p529 = pneg %p107
        %p530 = pneg %p104
        %p531 = pneg %p128
        %p532 = pneg %p125
        %p533 = pneg %p149
        %p534 = pneg %p146
        %p535 = pneg %p170
        %p536 = pneg %p167
        %p537 = pneg %p191
        %p538 = pneg %p188
        %p539 = pneg %p212
        %p540 = pneg %p209
        %p541 = pneg %p233
        %p542 = pneg %p230
        %p543 = pneg %p254
        %p544 = pneg %p251
        %p545 = pneg %p275
        %p546 = pneg %p272
        %p547 = pneg %p296
        %p548 = pneg %p293
        %p549 = pneg %p322
        %p550 = pneg %p319
        %s551 = sand.u32 %s309, 1
        %s552 = scalar_lea.sflag [#allocation4], %s551
        %s553 = sand.u32 %s309, 1
        %s554 = smul.addr %s553, 8
        %s555 = scalar_lea.vmem [#allocation14], %s554
        %v556 = vld [vmem:[%s471] sm:$0xff]
        %v557 = vld [vmem:[#allocation10] sm:$0xff]
        %v558 = vld [vmem:[#allocation10 + $0x8] sm:$0xff]
        %v559 = vld [vmem:[#allocation10 + $0x10] sm:$0xff]
        %v560 = vld [vmem:[#allocation10 + $0x18] sm:$0xff]
        %v561 = vld [vmem:[%s5] sm:$0x1]
        %v563 = vlaneseq
        %v564 = vshrl.u32 %v563, 7
        %v565 = vsub.s32 0, %v564
        %v566 = vrot.slane %v561, %v565
        %vm568 = vcmask 261120
        %v570 = vsel %vm568, %v556, 0
        %572 = vmatprep.subr.mxu0 0.0
        %573 = vmatpush1.msra.mxu0 %v557
        %574 = vmatprep.subr.mxu0 0.0
        %575 = vmatpush1.msra.mxu0 %v558
        %576 = vmatprep.subr.mxu0 0.0
        %577 = vmatpush1.msra.mxu0 %v559
        %578 = vmatprep.subr.mxu0 0.0
        %579 = vmatpush1.msra.mxu0 %v560
        %580 = vmatprep.subr.mxu0 0.0
        %581 = vmatpush1.msra.mxu0 0.0
        %582 = vmatprep.subr.mxu0 0.0
        %583 = vmatpush1.msra.mxu0 0.0
        %584 = vmatprep.subr.mxu0 0.0
        %585 = vmatpush1.msra.mxu0 0.0
        %586 = vmatprep.subr.mxu0 0.0
        %587 = vmatpush1.msra.mxu0 0.0
        %588 = vmatprep.subr.mxu0 0.0
        %589 = vmatpush1.msra.mxu0 0.0
        %590 = vmatprep.subr.mxu0 0.0
        %591 = vmatpush1.msra.mxu0 0.0
        %592 = vmatprep.subr.mxu0 0.0
        %593 = vmatpush1.msra.mxu0 0.0
        %594 = vmatprep.subr.mxu0 0.0
        %595 = vmatpush1.msra.mxu0 0.0
        %596 = vmatprep.subr.mxu0 0.0
        %597 = vmatpush1.msra.mxu0 0.0
        %598 = vmatprep.subr.mxu0 0.0
        %599 = vmatpush1.msra.mxu0 0.0
        %600 = vmatprep.subr.mxu0 0.0
        %601 = vmatpush1.msra.mxu0 0.0
        %602 = vmatprep.subr.mxu0 0.0
        %603 = vmatpush1.msra.mxu0 0.0
        %604 = vmatprep.subr.mxu0 0.0
        %605 = vmatpush1.msra.mxu0 0.0
        %606 = vmatprep.subr.mxu0 0.0
        %607 = vmatpush1.msra.mxu0 0.0
        %608 = vmatprep.subr.mxu0 0.0
        %609 = vmatpush1.msra.mxu0 0.0
        %610 = vmatprep.subr.mxu0 0.0
        %611 = vmatpush1.msra.mxu0 0.0
        %612 = vmatprep.subr.mxu0 0.0
        %613 = vmatpush1.msra.mxu0 0.0
        %614 = vmatprep.subr.mxu0 0.0
        %615 = vmatpush1.msra.mxu0 0.0
        %616 = vmatprep.subr.mxu0 0.0
        %617 = vmatpush1.msra.mxu0 0.0
        %618 = vmatprep.subr.mxu0 0.0
        %619 = vmatpush1.msra.mxu0 0.0
        %620 = vmatprep.subr.mxu0 0.0
        %621 = vmatpush1.msra.mxu0 0.0
        %622 = vmatprep.subr.mxu0 0.0
        %623 = vmatpush1.msra.mxu0 0.0
        %624 = vmatprep.subr.mxu0 0.0
        %625 = vmatpush1.msra.mxu0 0.0
        %626 = vmatprep.subr.mxu0 0.0
        %627 = vmatpush1.msra.mxu0 0.0
        %628 = vmatprep.subr.mxu0 0.0
        %629 = vmatpush1.msra.mxu0 0.0
        %630 = vmatprep.subr.mxu0 0.0
        %631 = vmatpush1.msra.mxu0 0.0
        %632 = vmatprep.subr.mxu0 0.0
        %633 = vmatpush1.msra.mxu0 0.0
        %634 = vmatprep.subr.mxu0 0.0
        %635 = vmatpush1.msra.mxu0 0.0
        %636 = vmatprep.mubr.f32.mxu0 0.0
        %637 = vmatmul.mubr.f32.gmra.mrb[0].mxu0 %v570
        %v638 = vpop.f32.mrb[0].mxu0
        %v639 = vadd.f32 %v566, %v638
        %v640 = vpop.f32.mrb[0].mxu0
        %641 = vdwg.mxu0
        %v642 = vmul.f32 %v639, 0.35355338
        %v643 = vld [vmem:[%s480] sm:$0xff]
        %v644 = vld [vmem:[#allocation11] sm:$0xff]
        %v645 = vld [vmem:[#allocation11 + $0x8] sm:$0xff]
        %v646 = vld [vmem:[#allocation11 + $0x10] sm:$0xff]
        %v647 = vld [vmem:[#allocation11 + $0x18] sm:$0xff]
        %v648 = vld [vmem:[%s7] sm:$0x1]
        %v650 = vlaneseq
        %v651 = vshrl.u32 %v650, 7
        %v652 = vsub.s32 0, %v651
        %v653 = vrot.slane %v648, %v652
        %v656 = vsel %vm568, %v643, 0
        %658 = vmatprep.subr.mxu0 0.0
        %659 = vmatpush1.msra.mxu0 %v644
        %660 = vmatprep.subr.mxu0 0.0
        %661 = vmatpush1.msra.mxu0 %v645
        %662 = vmatprep.subr.mxu0 0.0
        %663 = vmatpush1.msra.mxu0 %v646
        %664 = vmatprep.subr.mxu0 0.0
        %665 = vmatpush1.msra.mxu0 %v647
        %666 = vmatprep.subr.mxu0 0.0
        %667 = vmatpush1.msra.mxu0 0.0
        %668 = vmatprep.subr.mxu0 0.0
        %669 = vmatpush1.msra.mxu0 0.0
        %670 = vmatprep.subr.mxu0 0.0
        %671 = vmatpush1.msra.mxu0 0.0
        %672 = vmatprep.subr.mxu0 0.0
        %673 = vmatpush1.msra.mxu0 0.0
        %674 = vmatprep.subr.mxu0 0.0
        %675 = vmatpush1.msra.mxu0 0.0
        %676 = vmatprep.subr.mxu0 0.0
        %677 = vmatpush1.msra.mxu0 0.0
        %678 = vmatprep.subr.mxu0 0.0
        %679 = vmatpush1.msra.mxu0 0.0
        %680 = vmatprep.subr.mxu0 0.0
        %681 = vmatpush1.msra.mxu0 0.0
        %682 = vmatprep.subr.mxu0 0.0
        %683 = vmatpush1.msra.mxu0 0.0
        %684 = vmatprep.subr.mxu0 0.0
        %685 = vmatpush1.msra.mxu0 0.0
        %686 = vmatprep.subr.mxu0 0.0
        %687 = vmatpush1.msra.mxu0 0.0
        %688 = vmatprep.subr.mxu0 0.0
        %689 = vmatpush1.msra.mxu0 0.0
        %690 = vmatprep.subr.mxu0 0.0
        %691 = vmatpush1.msra.mxu0 0.0
        %692 = vmatprep.subr.mxu0 0.0
        %693 = vmatpush1.msra.mxu0 0.0
        %694 = vmatprep.subr.mxu0 0.0
        %695 = vmatpush1.msra.mxu0 0.0
        %696 = vmatprep.subr.mxu0 0.0
        %697 = vmatpush1.msra.mxu0 0.0
        %698 = vmatprep.subr.mxu0 0.0
        %699 = vmatpush1.msra.mxu0 0.0
        %700 = vmatprep.subr.mxu0 0.0
        %701 = vmatpush1.msra.mxu0 0.0
        %702 = vmatprep.subr.mxu0 0.0
        %703 = vmatpush1.msra.mxu0 0.0
        %704 = vmatprep.subr.mxu0 0.0
        %705 = vmatpush1.msra.mxu0 0.0
        %706 = vmatprep.subr.mxu0 0.0
        %707 = vmatpush1.msra.mxu0 0.0
        %708 = vmatprep.subr.mxu0 0.0
        %709 = vmatpush1.msra.mxu0 0.0
        %710 = vmatprep.subr.mxu0 0.0
        %711 = vmatpush1.msra.mxu0 0.0
        %712 = vmatprep.subr.mxu0 0.0
        %713 = vmatpush1.msra.mxu0 0.0
        %714 = vmatprep.subr.mxu0 0.0
        %715 = vmatpush1.msra.mxu0 0.0
        %716 = vmatprep.subr.mxu0 0.0
        %717 = vmatpush1.msra.mxu0 0.0
        %718 = vmatprep.subr.mxu0 0.0
        %719 = vmatpush1.msra.mxu0 0.0
        %720 = vmatprep.subr.mxu0 0.0
        %721 = vmatpush1.msra.mxu0 0.0
        %722 = vmatprep.mubr.f32.mxu0 0.0
        %723 = vmatmul.mubr.f32.gmra.mrb[0].mxu0 %v656
        %v724 = vpop.f32.mrb[0].mxu0
        %v725 = vadd.f32 %v653, %v724
        %v726 = vpop.f32.mrb[0].mxu0
        %727 = vdwg.mxu0
        %v728 = vld [vmem:[%s489] sm:$0xff]
        %v729 = vld [vmem:[#allocation13] sm:$0xff]
        %v730 = vld [vmem:[#allocation13 + $0x8] sm:$0xff]
        %v731 = vld [vmem:[#allocation13 + $0x10] sm:$0xff]
        %v732 = vld [vmem:[#allocation13 + $0x18] sm:$0xff]
        %v733 = vld [vmem:[%s9] sm:$0x1]
        %v735 = vlaneseq
        %v736 = vshrl.u32 %v735, 7
        %v737 = vsub.s32 0, %v736
        %v738 = vrot.slane %v733, %v737
        %v741 = vsel %vm568, %v728, 0
        %743 = vmatprep.subr.mxu0 0.0
        %744 = vmatpush1.msra.mxu0 %v729
        %745 = vmatprep.subr.mxu0 0.0
        %746 = vmatpush1.msra.mxu0 %v730
        %747 = vmatprep.subr.mxu0 0.0
        %748 = vmatpush1.msra.mxu0 %v731
        %749 = vmatprep.subr.mxu0 0.0
        %750 = vmatpush1.msra.mxu0 %v732
        %751 = vmatprep.subr.mxu0 0.0
        %752 = vmatpush1.msra.mxu0 0.0
        %753 = vmatprep.subr.mxu0 0.0
        %754 = vmatpush1.msra.mxu0 0.0
        %755 = vmatprep.subr.mxu0 0.0
        %756 = vmatpush1.msra.mxu0 0.0
        %757 = vmatprep.subr.mxu0 0.0
        %758 = vmatpush1.msra.mxu0 0.0
        %759 = vmatprep.subr.mxu0 0.0
        %760 = vmatpush1.msra.mxu0 0.0
        %761 = vmatprep.subr.mxu0 0.0
        %762 = vmatpush1.msra.mxu0 0.0
        %763 = vmatprep.subr.mxu0 0.0
        %764 = vmatpush1.msra.mxu0 0.0
        %765 = vmatprep.subr.mxu0 0.0
        %766 = vmatpush1.msra.mxu0 0.0
        %767 = vmatprep.subr.mxu0 0.0
        %768 = vmatpush1.msra.mxu0 0.0
        %769 = vmatprep.subr.mxu0 0.0
        %770 = vmatpush1.msra.mxu0 0.0
        %771 = vmatprep.subr.mxu0 0.0
        %772 = vmatpush1.msra.mxu0 0.0
        %773 = vmatprep.subr.mxu0 0.0
        %774 = vmatpush1.msra.mxu0 0.0
        %775 = vmatprep.subr.mxu0 0.0
        %776 = vmatpush1.msra.mxu0 0.0
        %777 = vmatprep.subr.mxu0 0.0
        %778 = vmatpush1.msra.mxu0 0.0
        %779 = vmatprep.subr.mxu0 0.0
        %780 = vmatpush1.msra.mxu0 0.0
        %781 = vmatprep.subr.mxu0 0.0
        %782 = vmatpush1.msra.mxu0 0.0
        %783 = vmatprep.subr.mxu0 0.0
        %784 = vmatpush1.msra.mxu0 0.0
        %785 = vmatprep.subr.mxu0 0.0
        %786 = vmatpush1.msra.mxu0 0.0
        %787 = vmatprep.subr.mxu0 0.0
        %788 = vmatpush1.msra.mxu0 0.0
        %789 = vmatprep.subr.mxu0 0.0
        %790 = vmatpush1.msra.mxu0 0.0
        %791 = vmatprep.subr.mxu0 0.0
        %792 = vmatpush1.msra.mxu0 0.0
        %793 = vmatprep.subr.mxu0 0.0
        %794 = vmatpush1.msra.mxu0 0.0
        %795 = vmatprep.subr.mxu0 0.0
        %796 = vmatpush1.msra.mxu0 0.0
        %797 = vmatprep.subr.mxu0 0.0
        %798 = vmatpush1.msra.mxu0 0.0
        %799 = vmatprep.subr.mxu0 0.0
        %800 = vmatpush1.msra.mxu0 0.0
        %801 = vmatprep.subr.mxu0 0.0
        %802 = vmatpush1.msra.mxu0 0.0
        %803 = vmatprep.subr.mxu0 0.0
        %804 = vmatpush1.msra.mxu0 0.0
        %805 = vmatprep.subr.mxu0 0.0
        %806 = vmatpush1.msra.mxu0 0.0
        %807 = vmatprep.mubr.f32.mxu0 0.0
        %808 = vmatmul.mubr.f32.gmra.mrb[0].mxu0 %v741
        %v809 = vpop.f32.mrb[0].mxu0
        %v810 = vadd.f32 %v738, %v809
        %v811 = vpop.f32.mrb[0].mxu0
        %812 = vdwg.mxu0
        %v813 = vld [vmem:[#allocation8] sm:$0xff]
        %vm814 = vcmask 64512
        %v816 = vsel %vm814, %v642, 0
        %v819 = vsel %vm814, %v725, 0
        %821 = vmatprep.subr.mxu0 0.0
        %822 = vmatpush1.xpose.msra.mxu0 %v819
        %823 = vmatprep.subr.mxu0 0.0
        %824 = vmatpush1.xpose.msra.mxu0 0.0
        %825 = vmatprep.subr.mxu0 0.0
        %826 = vmatpush1.xpose.msra.mxu0 0.0
        %827 = vmatprep.subr.mxu0 0.0
        %828 = vmatpush1.xpose.msra.mxu0 0.0
        %829 = vmatprep.subr.mxu0 0.0
        %830 = vmatpush1.xpose.msra.mxu0 0.0
        %831 = vmatprep.subr.mxu0 0.0
        %832 = vmatpush1.xpose.msra.mxu0 0.0
        %833 = vmatprep.subr.mxu0 0.0
        %834 = vmatpush1.xpose.msra.mxu0 0.0
        %835 = vmatprep.subr.mxu0 0.0
        %836 = vmatpush1.xpose.msra.mxu0 0.0
        %837 = vmatprep.subr.mxu0 0.0
        %838 = vmatpush1.xpose.msra.mxu0 0.0
        %839 = vmatprep.subr.mxu0 0.0
        %840 = vmatpush1.xpose.msra.mxu0 0.0
        %841 = vmatprep.subr.mxu0 0.0
        %842 = vmatpush1.xpose.msra.mxu0 0.0
        %843 = vmatprep.subr.mxu0 0.0
        %844 = vmatpush1.xpose.msra.mxu0 0.0
        %845 = vmatprep.subr.mxu0 0.0
        %846 = vmatpush1.xpose.msra.mxu0 0.0
        %847 = vmatprep.subr.mxu0 0.0
        %848 = vmatpush1.xpose.msra.mxu0 0.0
        %849 = vmatprep.subr.mxu0 0.0
        %850 = vmatpush1.xpose.msra.mxu0 0.0
        %851 = vmatprep.subr.mxu0 0.0
        %852 = vmatpush1.xpose.msra.mxu0 0.0
        %853 = vmatprep.subr.mxu0 0.0
        %854 = vmatpush1.xpose.msra.mxu0 0.0
        %855 = vmatprep.subr.mxu0 0.0
        %856 = vmatpush1.xpose.msra.mxu0 0.0
        %857 = vmatprep.subr.mxu0 0.0
        %858 = vmatpush1.xpose.msra.mxu0 0.0
        %859 = vmatprep.subr.mxu0 0.0
        %860 = vmatpush1.xpose.msra.mxu0 0.0
        %861 = vmatprep.subr.mxu0 0.0
        %862 = vmatpush1.xpose.msra.mxu0 0.0
        %863 = vmatprep.subr.mxu0 0.0
        %864 = vmatpush1.xpose.msra.mxu0 0.0
        %865 = vmatprep.subr.mxu0 0.0
        %866 = vmatpush1.xpose.msra.mxu0 0.0
        %867 = vmatprep.subr.mxu0 0.0
        %868 = vmatpush1.xpose.msra.mxu0 0.0
        %869 = vmatprep.subr.mxu0 0.0
        %870 = vmatpush1.xpose.msra.mxu0 0.0
        %871 = vmatprep.subr.mxu0 0.0
        %872 = vmatpush1.xpose.msra.mxu0 0.0
        %873 = vmatprep.subr.mxu0 0.0
        %874 = vmatpush1.xpose.msra.mxu0 0.0
        %875 = vmatprep.subr.mxu0 0.0
        %876 = vmatpush1.xpose.msra.mxu0 0.0
        %877 = vmatprep.subr.mxu0 0.0
        %878 = vmatpush1.xpose.msra.mxu0 0.0
        %879 = vmatprep.subr.mxu0 0.0
        %880 = vmatpush1.xpose.msra.mxu0 0.0
        %881 = vmatprep.subr.mxu0 0.0
        %882 = vmatpush1.xpose.msra.mxu0 0.0
        %883 = vmatprep.subr.mxu0 0.0
        %884 = vmatpush1.xpose.msra.mxu0 0.0
        %885 = vmatprep.mubr.f32.mxu0 0.0
        %886 = vmatmul.mubr.f32.gmra.mrb[0].mxu0 %v816
        %v887 = vpop.f32.mrb[0].mxu0
        %v888 = vadd.f32 %v813, %v887
        %v889 = vpop.f32.mrb[0].mxu0
        %890 = vdwg.mxu0
        %v891 = vsel %vm814, %v888, -inf
        %892 = vmax.xlane.f32.xlu0 %v891
        %v893 = vpop.xlane.xlu0 %892
        %v894 = vsub.f32 %v888, %v893
        %v895 = vmul.f32 %v894, 1.442695
        %v896 = vpow.pop %v895
        %v897 = vsel %vm814, %v896, 0.0
        %898 = vadd.xlane.f32.xlu0 %v897
        %v899 = vpop.xlane.xlu0 %898
        %v900 = vrcp.pop %v899
        %v901 = vmul.f32 %v896, %v900
        %v903 = vsel %vm814, %v901, 0
        %905 = vmatprep.subr.mxu0 0.0
        %906 = vmatpush1.msra.mxu0 %v810
        %907 = vmatprep.subr.mxu0 0.0
        %908 = vmatpush1.msra.mxu0 0.0
        %909 = vmatprep.subr.mxu0 0.0
        %910 = vmatpush1.msra.mxu0 0.0
        %911 = vmatprep.subr.mxu0 0.0
        %912 = vmatpush1.msra.mxu0 0.0
        %913 = vmatprep.subr.mxu0 0.0
        %914 = vmatpush1.msra.mxu0 0.0
        %915 = vmatprep.subr.mxu0 0.0
        %916 = vmatpush1.msra.mxu0 0.0
        %917 = vmatprep.subr.mxu0 0.0
        %918 = vmatpush1.msra.mxu0 0.0
        %919 = vmatprep.subr.mxu0 0.0
        %920 = vmatpush1.msra.mxu0 0.0
        %921 = vmatprep.subr.mxu0 0.0
        %922 = vmatpush1.msra.mxu0 0.0
        %923 = vmatprep.subr.mxu0 0.0
        %924 = vmatpush1.msra.mxu0 0.0
        %925 = vmatprep.subr.mxu0 0.0
        %926 = vmatpush1.msra.mxu0 0.0
        %927 = vmatprep.subr.mxu0 0.0
        %928 = vmatpush1.msra.mxu0 0.0
        %929 = vmatprep.subr.mxu0 0.0
        %930 = vmatpush1.msra.mxu0 0.0
        %931 = vmatprep.subr.mxu0 0.0
        %932 = vmatpush1.msra.mxu0 0.0
        %933 = vmatprep.subr.mxu0 0.0
        %934 = vmatpush1.msra.mxu0 0.0
        %935 = vmatprep.subr.mxu0 0.0
        %936 = vmatpush1.msra.mxu0 0.0
        %937 = vmatprep.subr.mxu0 0.0
        %938 = vmatpush1.msra.mxu0 0.0
        %939 = vmatprep.subr.mxu0 0.0
        %940 = vmatpush1.msra.mxu0 0.0
        %941 = vmatprep.subr.mxu0 0.0
        %942 = vmatpush1.msra.mxu0 0.0
        %943 = vmatprep.subr.mxu0 0.0
        %944 = vmatpush1.msra.mxu0 0.0
        %945 = vmatprep.subr.mxu0 0.0
        %946 = vmatpush1.msra.mxu0 0.0
        %947 = vmatprep.subr.mxu0 0.0
        %948 = vmatpush1.msra.mxu0 0.0
        %949 = vmatprep.subr.mxu0 0.0
        %950 = vmatpush1.msra.mxu0 0.0
        %951 = vmatprep.subr.mxu0 0.0
        %952 = vmatpush1.msra.mxu0 0.0
        %953 = vmatprep.subr.mxu0 0.0
        %954 = vmatpush1.msra.mxu0 0.0
        %955 = vmatprep.subr.mxu0 0.0
        %956 = vmatpush1.msra.mxu0 0.0
        %957 = vmatprep.subr.mxu0 0.0
        %958 = vmatpush1.msra.mxu0 0.0
        %959 = vmatprep.subr.mxu0 0.0
        %960 = vmatpush1.msra.mxu0 0.0
        %961 = vmatprep.subr.mxu0 0.0
        %962 = vmatpush1.msra.mxu0 0.0
        %963 = vmatprep.subr.mxu0 0.0
        %964 = vmatpush1.msra.mxu0 0.0
        %965 = vmatprep.subr.mxu0 0.0
        %966 = vmatpush1.msra.mxu0 0.0
        %967 = vmatprep.subr.mxu0 0.0
        %968 = vmatpush1.msra.mxu0 0.0
        %969 = vmatprep.mubr.f32.mxu0 0.0
        %970 = vmatmul.mubr.f32.gmra.mrb[0].mxu0 %v903
        %v971 = vpop.f32.mrb[0].mxu0
        %v972 = vadd.f32 0.0, %v971
        %v973 = vpop.f32.mrb[0].mxu0
        %974 = vdwg.mxu0
        %975 = vrot.lane.b32.xlu0 %v642, 120
        %v976 = vpop.permute.xlu0 %975
        %977 = vrot.lane.b32.xlu0 %v725, 120
        %v978 = vpop.permute.xlu0 %977
        %v979 = vsel %vm814, %v976, 0
        %v981 = vsel %vm814, %v978, 0
        %983 = vmatprep.subr.mxu0 0.0
        %984 = vmatpush1.xpose.msra.mxu0 %v981
        %985 = vmatprep.subr.mxu0 0.0
        %986 = vmatpush1.xpose.msra.mxu0 0.0
        %987 = vmatprep.subr.mxu0 0.0
        %988 = vmatpush1.xpose.msra.mxu0 0.0
        %989 = vmatprep.subr.mxu0 0.0
        %990 = vmatpush1.xpose.msra.mxu0 0.0
        %991 = vmatprep.subr.mxu0 0.0
        %992 = vmatpush1.xpose.msra.mxu0 0.0
        %993 = vmatprep.subr.mxu0 0.0
        %994 = vmatpush1.xpose.msra.mxu0 0.0
        %995 = vmatprep.subr.mxu0 0.0
        %996 = vmatpush1.xpose.msra.mxu0 0.0
        %997 = vmatprep.subr.mxu0 0.0
        %998 = vmatpush1.xpose.msra.mxu0 0.0
        %999 = vmatprep.subr.mxu0 0.0
        %1000 = vmatpush1.xpose.msra.mxu0 0.0
        %1001 = vmatprep.subr.mxu0 0.0
        %1002 = vmatpush1.xpose.msra.mxu0 0.0
        %1003 = vmatprep.subr.mxu0 0.0
        %1004 = vmatpush1.xpose.msra.mxu0 0.0
        %1005 = vmatprep.subr.mxu0 0.0
        %1006 = vmatpush1.xpose.msra.mxu0 0.0
        %1007 = vmatprep.subr.mxu0 0.0
        %1008 = vmatpush1.xpose.msra.mxu0 0.0
        %1009 = vmatprep.subr.mxu0 0.0
        %1010 = vmatpush1.xpose.msra.mxu0 0.0
        %1011 = vmatprep.subr.mxu0 0.0
        %1012 = vmatpush1.xpose.msra.mxu0 0.0
        %1013 = vmatprep.subr.mxu0 0.0
        %1014 = vmatpush1.xpose.msra.mxu0 0.0
        %1015 = vmatprep.subr.mxu0 0.0
        %1016 = vmatpush1.xpose.msra.mxu0 0.0
        %1017 = vmatprep.subr.mxu0 0.0
        %1018 = vmatpush1.xpose.msra.mxu0 0.0
        %1019 = vmatprep.subr.mxu0 0.0
        %1020 = vmatpush1.xpose.msra.mxu0 0.0
        %1021 = vmatprep.subr.mxu0 0.0
        %1022 = vmatpush1.xpose.msra.mxu0 0.0
        %1023 = vmatprep.subr.mxu0 0.0
        %1024 = vmatpush1.xpose.msra.mxu0 0.0
        %1025 = vmatprep.subr.mxu0 0.0
        %1026 = vmatpush1.xpose.msra.mxu0 0.0
        %1027 = vmatprep.subr.mxu0 0.0
        %1028 = vmatpush1.xpose.msra.mxu0 0.0
        %1029 = vmatprep.subr.mxu0 0.0
        %1030 = vmatpush1.xpose.msra.mxu0 0.0
        %1031 = vmatprep.subr.mxu0 0.0
        %1032 = vmatpush1.xpose.msra.mxu0 0.0
        %1033 = vmatprep.subr.mxu0 0.0
        %1034 = vmatpush1.xpose.msra.mxu0 0.0
        %1035 = vmatprep.subr.mxu0 0.0
        %1036 = vmatpush1.xpose.msra.mxu0 0.0
        %1037 = vmatprep.subr.mxu0 0.0
        %1038 = vmatpush1.xpose.msra.mxu0 0.0
        %1039 = vmatprep.subr.mxu0 0.0
        %1040 = vmatpush1.xpose.msra.mxu0 0.0
        %1041 = vmatprep.subr.mxu0 0.0
        %1042 = vmatpush1.xpose.msra.mxu0 0.0
        %1043 = vmatprep.subr.mxu0 0.0
        %1044 = vmatpush1.xpose.msra.mxu0 0.0
        %1045 = vmatprep.subr.mxu0 0.0
        %1046 = vmatpush1.xpose.msra.mxu0 0.0
        %1047 = vmatprep.mubr.f32.mxu0 0.0
        %1048 = vmatmul.mubr.f32.gmra.mrb[0].mxu0 %v979
        %v1049 = vpop.f32.mrb[0].mxu0
        %v1050 = vadd.f32 %v813, %v1049
        %v1051 = vpop.f32.mrb[0].mxu0
        %1052 = vdwg.mxu0
        %v1053 = vsel %vm814, %v1050, -inf
        %1054 = vmax.xlane.f32.xlu0 %v1053
        %v1055 = vpop.xlane.xlu0 %1054
        %v1056 = vsub.f32 %v1050, %v1055
        %v1057 = vmul.f32 %v1056, 1.442695
        %v1058 = vpow.pop %v1057
        %v1059 = vsel %vm814, %v1058, 0.0
        %1060 = vadd.xlane.f32.xlu0 %v1059
        %v1061 = vpop.xlane.xlu0 %1060
        %v1062 = vrcp.pop %v1061
        %v1063 = vmul.f32 %v1058, %v1062
        %1065 = vrot.lane.b32.xlu0 %v810, 120
        %v1066 = vpop.permute.xlu0 %1065
        %v1069 = vsel %vm814, %v1063, 0
        %1071 = vmatprep.subr.mxu0 0.0
        %1072 = vmatpush1.msra.mxu0 %v1066
        %1073 = vmatprep.subr.mxu0 0.0
        %1074 = vmatpush1.msra.mxu0 0.0
        %1075 = vmatprep.subr.mxu0 0.0
        %1076 = vmatpush1.msra.mxu0 0.0
        %1077 = vmatprep.subr.mxu0 0.0
        %1078 = vmatpush1.msra.mxu0 0.0
        %1079 = vmatprep.subr.mxu0 0.0
        %1080 = vmatpush1.msra.mxu0 0.0
        %1081 = vmatprep.subr.mxu0 0.0
        %1082 = vmatpush1.msra.mxu0 0.0
        %1083 = vmatprep.subr.mxu0 0.0
        %1084 = vmatpush1.msra.mxu0 0.0
        %1085 = vmatprep.subr.mxu0 0.0
        %1086 = vmatpush1.msra.mxu0 0.0
        %1087 = vmatprep.subr.mxu0 0.0
        %1088 = vmatpush1.msra.mxu0 0.0
        %1089 = vmatprep.subr.mxu0 0.0
        %1090 = vmatpush1.msra.mxu0 0.0
        %1091 = vmatprep.subr.mxu0 0.0
        %1092 = vmatpush1.msra.mxu0 0.0
        %1093 = vmatprep.subr.mxu0 0.0
        %1094 = vmatpush1.msra.mxu0 0.0
        %1095 = vmatprep.subr.mxu0 0.0
        %1096 = vmatpush1.msra.mxu0 0.0
        %1097 = vmatprep.subr.mxu0 0.0
        %1098 = vmatpush1.msra.mxu0 0.0
        %1099 = vmatprep.subr.mxu0 0.0
        %1100 = vmatpush1.msra.mxu0 0.0
        %1101 = vmatprep.subr.mxu0 0.0
        %1102 = vmatpush1.msra.mxu0 0.0
        %1103 = vmatprep.subr.mxu0 0.0
        %1104 = vmatpush1.msra.mxu0 0.0
        %1105 = vmatprep.subr.mxu0 0.0
        %1106 = vmatpush1.msra.mxu0 0.0
        %1107 = vmatprep.subr.mxu0 0.0
        %1108 = vmatpush1.msra.mxu0 0.0
        %1109 = vmatprep.subr.mxu0 0.0
        %1110 = vmatpush1.msra.mxu0 0.0
        %1111 = vmatprep.subr.mxu0 0.0
        %1112 = vmatpush1.msra.mxu0 0.0
        %1113 = vmatprep.subr.mxu0 0.0
        %1114 = vmatpush1.msra.mxu0 0.0
        %1115 = vmatprep.subr.mxu0 0.0
        %1116 = vmatpush1.msra.mxu0 0.0
        %1117 = vmatprep.subr.mxu0 0.0
        %1118 = vmatpush1.msra.mxu0 0.0
        %1119 = vmatprep.subr.mxu0 0.0
        %1120 = vmatpush1.msra.mxu0 0.0
        %1121 = vmatprep.subr.mxu0 0.0
        %1122 = vmatpush1.msra.mxu0 0.0
        %1123 = vmatprep.subr.mxu0 0.0
        %1124 = vmatpush1.msra.mxu0 0.0
        %1125 = vmatprep.subr.mxu0 0.0
        %1126 = vmatpush1.msra.mxu0 0.0
        %1127 = vmatprep.subr.mxu0 0.0
        %1128 = vmatpush1.msra.mxu0 0.0
        %1129 = vmatprep.subr.mxu0 0.0
        %1130 = vmatpush1.msra.mxu0 0.0
        %1131 = vmatprep.subr.mxu0 0.0
        %1132 = vmatpush1.msra.mxu0 0.0
        %1133 = vmatprep.subr.mxu0 0.0
        %1134 = vmatpush1.msra.mxu0 0.0
        %1135 = vmatprep.mubr.f32.mxu0 0.0
        %1136 = vmatmul.mubr.f32.gmra.mrb[0].mxu0 %v1069
        %v1137 = vpop.f32.mrb[0].mxu0
        %v1138 = vadd.f32 0.0, %v1137
        %v1139 = vpop.f32.mrb[0].mxu0
        %1140 = vdwg.mxu0
        %1141 = vrot.lane.b32.xlu0 %v642, 112
        %v1142 = vpop.permute.xlu0 %1141
        %1143 = vrot.lane.b32.xlu0 %v725, 112
        %v1144 = vpop.permute.xlu0 %1143
        %v1145 = vsel %vm814, %v1142, 0
        %v1147 = vsel %vm814, %v1144, 0
        %1149 = vmatprep.subr.mxu0 0.0
        %1150 = vmatpush1.xpose.msra.mxu0 %v1147
        %1151 = vmatprep.subr.mxu0 0.0
        %1152 = vmatpush1.xpose.msra.mxu0 0.0
        %1153 = vmatprep.subr.mxu0 0.0
        %1154 = vmatpush1.xpose.msra.mxu0 0.0
        %1155 = vmatprep.subr.mxu0 0.0
        %1156 = vmatpush1.xpose.msra.mxu0 0.0
        %1157 = vmatprep.subr.mxu0 0.0
        %1158 = vmatpush1.xpose.msra.mxu0 0.0
        %1159 = vmatprep.subr.mxu0 0.0
        %1160 = vmatpush1.xpose.msra.mxu0 0.0
        %1161 = vmatprep.subr.mxu0 0.0
        %1162 = vmatpush1.xpose.msra.mxu0 0.0
        %1163 = vmatprep.subr.mxu0 0.0
        %1164 = vmatpush1.xpose.msra.mxu0 0.0
        %1165 = vmatprep.subr.mxu0 0.0
        %1166 = vmatpush1.xpose.msra.mxu0 0.0
        %1167 = vmatprep.subr.mxu0 0.0
        %1168 = vmatpush1.xpose.msra.mxu0 0.0
        %1169 = vmatprep.subr.mxu0 0.0
        %1170 = vmatpush1.xpose.msra.mxu0 0.0
        %1171 = vmatprep.subr.mxu0 0.0
        %1172 = vmatpush1.xpose.msra.mxu0 0.0
        %1173 = vmatprep.subr.mxu0 0.0
        %1174 = vmatpush1.xpose.msra.mxu0 0.0
        %1175 = vmatprep.subr.mxu0 0.0
        %1176 = vmatpush1.xpose.msra.mxu0 0.0
        %1177 = vmatprep.subr.mxu0 0.0
        %1178 = vmatpush1.xpose.msra.mxu0 0.0
        %1179 = vmatprep.subr.mxu0 0.0
        %1180 = vmatpush1.xpose.msra.mxu0 0.0
        %1181 = vmatprep.subr.mxu0 0.0
        %1182 = vmatpush1.xpose.msra.mxu0 0.0
        %1183 = vmatprep.subr.mxu0 0.0
        %1184 = vmatpush1.xpose.msra.mxu0 0.0
        %1185 = vmatprep.subr.mxu0 0.0
        %1186 = vmatpush1.xpose.msra.mxu0 0.0
        %1187 = vmatprep.subr.mxu0 0.0
        %1188 = vmatpush1.xpose.msra.mxu0 0.0
        %1189 = vmatprep.subr.mxu0 0.0
        %1190 = vmatpush1.xpose.msra.mxu0 0.0
        %1191 = vmatprep.subr.mxu0 0.0
        %1192 = vmatpush1.xpose.msra.mxu0 0.0
        %1193 = vmatprep.subr.mxu0 0.0
        %1194 = vmatpush1.xpose.msra.mxu0 0.0
        %1195 = vmatprep.subr.mxu0 0.0
        %1196 = vmatpush1.xpose.msra.mxu0 0.0
        %1197 = vmatprep.subr.mxu0 0.0
        %1198 = vmatpush1.xpose.msra.mxu0 0.0
        %1199 = vmatprep.subr.mxu0 0.0
        %1200 = vmatpush1.xpose.msra.mxu0 0.0
        %1201 = vmatprep.subr.mxu0 0.0
        %1202 = vmatpush1.xpose.msra.mxu0 0.0
        %1203 = vmatprep.subr.mxu0 0.0
        %1204 = vmatpush1.xpose.msra.mxu0 0.0
        %1205 = vmatprep.subr.mxu0 0.0
        %1206 = vmatpush1.xpose.msra.mxu0 0.0
        %1207 = vmatprep.subr.mxu0 0.0
        %1208 = vmatpush1.xpose.msra.mxu0 0.0
        %1209 = vmatprep.subr.mxu0 0.0
        %1210 = vmatpush1.xpose.msra.mxu0 0.0
        %1211 = vmatprep.subr.mxu0 0.0
        %1212 = vmatpush1.xpose.msra.mxu0 0.0
        %1213 = vmatprep.mubr.f32.mxu0 0.0
        %1214 = vmatmul.mubr.f32.gmra.mrb[0].mxu0 %v1145
        %v1215 = vpop.f32.mrb[0].mxu0
        %v1216 = vadd.f32 %v813, %v1215
        %v1217 = vpop.f32.mrb[0].mxu0
        %1218 = vdwg.mxu0
        %v1219 = vsel %vm814, %v1216, -inf
        %1220 = vmax.xlane.f32.xlu0 %v1219
        %v1221 = vpop.xlane.xlu0 %1220
        %v1222 = vsub.f32 %v1216, %v1221
        %v1223 = vmul.f32 %v1222, 1.442695
        %v1224 = vpow.pop %v1223
        %v1225 = vsel %vm814, %v1224, 0.0
        %1226 = vadd.xlane.f32.xlu0 %v1225
        %v1227 = vpop.xlane.xlu0 %1226
        %v1228 = vrcp.pop %v1227
        %v1229 = vmul.f32 %v1224, %v1228
        %1230 = vrot.lane.b32.xlu0 %v810, 112
        %v1231 = vpop.permute.xlu0 %1230
        %v1234 = vsel %vm814, %v1229, 0
        %1236 = vmatprep.subr.mxu0 0.0
        %1237 = vmatpush1.msra.mxu0 %v1231
        %1238 = vmatprep.subr.mxu0 0.0
        %1239 = vmatpush1.msra.mxu0 0.0
        %1240 = vmatprep.subr.mxu0 0.0
        %1241 = vmatpush1.msra.mxu0 0.0
        %1242 = vmatprep.subr.mxu0 0.0
        %1243 = vmatpush1.msra.mxu0 0.0
        %1244 = vmatprep.subr.mxu0 0.0
        %1245 = vmatpush1.msra.mxu0 0.0
        %1246 = vmatprep.subr.mxu0 0.0
        %1247 = vmatpush1.msra.mxu0 0.0
        %1248 = vmatprep.subr.mxu0 0.0
        %1249 = vmatpush1.msra.mxu0 0.0
        %1250 = vmatprep.subr.mxu0 0.0
        %1251 = vmatpush1.msra.mxu0 0.0
        %1252 = vmatprep.subr.mxu0 0.0
        %1253 = vmatpush1.msra.mxu0 0.0
        %1254 = vmatprep.subr.mxu0 0.0
        %1255 = vmatpush1.msra.mxu0 0.0
        %1256 = vmatprep.subr.mxu0 0.0
        %1257 = vmatpush1.msra.mxu0 0.0
        %1258 = vmatprep.subr.mxu0 0.0
        %1259 = vmatpush1.msra.mxu0 0.0
        %1260 = vmatprep.subr.mxu0 0.0
        %1261 = vmatpush1.msra.mxu0 0.0
        %1262 = vmatprep.subr.mxu0 0.0
        %1263 = vmatpush1.msra.mxu0 0.0
        %1264 = vmatprep.subr.mxu0 0.0
        %1265 = vmatpush1.msra.mxu0 0.0
        %1266 = vmatprep.subr.mxu0 0.0
        %1267 = vmatpush1.msra.mxu0 0.0
        %1268 = vmatprep.subr.mxu0 0.0
        %1269 = vmatpush1.msra.mxu0 0.0
        %1270 = vmatprep.subr.mxu0 0.0
        %1271 = vmatpush1.msra.mxu0 0.0
        %1272 = vmatprep.subr.mxu0 0.0
        %1273 = vmatpush1.msra.mxu0 0.0
        %1274 = vmatprep.subr.mxu0 0.0
        %1275 = vmatpush1.msra.mxu0 0.0
        %1276 = vmatprep.subr.mxu0 0.0
        %1277 = vmatpush1.msra.mxu0 0.0
        %1278 = vmatprep.subr.mxu0 0.0
        %1279 = vmatpush1.msra.mxu0 0.0
        %1280 = vmatprep.subr.mxu0 0.0
        %1281 = vmatpush1.msra.mxu0 0.0
        %1282 = vmatprep.subr.mxu0 0.0
        %1283 = vmatpush1.msra.mxu0 0.0
        %1284 = vmatprep.subr.mxu0 0.0
        %1285 = vmatpush1.msra.mxu0 0.0
        %1286 = vmatprep.subr.mxu0 0.0
        %1287 = vmatpush1.msra.mxu0 0.0
        %1288 = vmatprep.subr.mxu0 0.0
        %1289 = vmatpush1.msra.mxu0 0.0
        %1290 = vmatprep.subr.mxu0 0.0
        %1291 = vmatpush1.msra.mxu0 0.0
        %1292 = vmatprep.subr.mxu0 0.0
        %1293 = vmatpush1.msra.mxu0 0.0
        %1294 = vmatprep.subr.mxu0 0.0
        %1295 = vmatpush1.msra.mxu0 0.0
        %1296 = vmatprep.subr.mxu0 0.0
        %1297 = vmatpush1.msra.mxu0 0.0
        %1298 = vmatprep.subr.mxu0 0.0
        %1299 = vmatpush1.msra.mxu0 0.0
        %1300 = vmatprep.mubr.f32.mxu0 0.0
        %1301 = vmatmul.mubr.f32.gmra.mrb[0].mxu0 %v1234
        %v1302 = vpop.f32.mrb[0].mxu0
        %v1303 = vadd.f32 0.0, %v1302
        %v1304 = vpop.f32.mrb[0].mxu0
        %1305 = vdwg.mxu0
        %1306 = vrot.lane.b32.xlu0 %v642, 104
        %v1307 = vpop.permute.xlu0 %1306
        %1308 = vrot.lane.b32.xlu0 %v725, 104
        %v1309 = vpop.permute.xlu0 %1308
        %v1310 = vsel %vm814, %v1307, 0
        %v1312 = vsel %vm814, %v1309, 0
        %1314 = vmatprep.subr.mxu0 0.0
        %1315 = vmatpush1.xpose.msra.mxu0 %v1312
        %1316 = vmatprep.subr.mxu0 0.0
        %1317 = vmatpush1.xpose.msra.mxu0 0.0
        %1318 = vmatprep.subr.mxu0 0.0
        %1319 = vmatpush1.xpose.msra.mxu0 0.0
        %1320 = vmatprep.subr.mxu0 0.0
        %1321 = vmatpush1.xpose.msra.mxu0 0.0
        %1322 = vmatprep.subr.mxu0 0.0
        %1323 = vmatpush1.xpose.msra.mxu0 0.0
        %1324 = vmatprep.subr.mxu0 0.0
        %1325 = vmatpush1.xpose.msra.mxu0 0.0
        %1326 = vmatprep.subr.mxu0 0.0
        %1327 = vmatpush1.xpose.msra.mxu0 0.0
        %1328 = vmatprep.subr.mxu0 0.0
        %1329 = vmatpush1.xpose.msra.mxu0 0.0
        %1330 = vmatprep.subr.mxu0 0.0
        %1331 = vmatpush1.xpose.msra.mxu0 0.0
        %1332 = vmatprep.subr.mxu0 0.0
        %1333 = vmatpush1.xpose.msra.mxu0 0.0
        %1334 = vmatprep.subr.mxu0 0.0
        %1335 = vmatpush1.xpose.msra.mxu0 0.0
        %1336 = vmatprep.subr.mxu0 0.0
        %1337 = vmatpush1.xpose.msra.mxu0 0.0
        %1338 = vmatprep.subr.mxu0 0.0
        %1339 = vmatpush1.xpose.msra.mxu0 0.0
        %1340 = vmatprep.subr.mxu0 0.0
        %1341 = vmatpush1.xpose.msra.mxu0 0.0
        %1342 = vmatprep.subr.mxu0 0.0
        %1343 = vmatpush1.xpose.msra.mxu0 0.0
        %1344 = vmatprep.subr.mxu0 0.0
        %1345 = vmatpush1.xpose.msra.mxu0 0.0
        %1346 = vmatprep.subr.mxu0 0.0
        %1347 = vmatpush1.xpose.msra.mxu0 0.0
        %1348 = vmatprep.subr.mxu0 0.0
        %1349 = vmatpush1.xpose.msra.mxu0 0.0
        %1350 = vmatprep.subr.mxu0 0.0
        %1351 = vmatpush1.xpose.msra.mxu0 0.0
        %1352 = vmatprep.subr.mxu0 0.0
        %1353 = vmatpush1.xpose.msra.mxu0 0.0
        %1354 = vmatprep.subr.mxu0 0.0
        %1355 = vmatpush1.xpose.msra.mxu0 0.0
        %1356 = vmatprep.subr.mxu0 0.0
        %1357 = vmatpush1.xpose.msra.mxu0 0.0
        %1358 = vmatprep.subr.mxu0 0.0
        %1359 = vmatpush1.xpose.msra.mxu0 0.0
        %1360 = vmatprep.subr.mxu0 0.0
        %1361 = vmatpush1.xpose.msra.mxu0 0.0
        %1362 = vmatprep.subr.mxu0 0.0
        %1363 = vmatpush1.xpose.msra.mxu0 0.0
        %1364 = vmatprep.subr.mxu0 0.0
        %1365 = vmatpush1.xpose.msra.mxu0 0.0
        %1366 = vmatprep.subr.mxu0 0.0
        %1367 = vmatpush1.xpose.msra.mxu0 0.0
        %1368 = vmatprep.subr.mxu0 0.0
        %1369 = vmatpush1.xpose.msra.mxu0 0.0
        %1370 = vmatprep.subr.mxu0 0.0
        %1371 = vmatpush1.xpose.msra.mxu0 0.0
        %1372 = vmatprep.subr.mxu0 0.0
        %1373 = vmatpush1.xpose.msra.mxu0 0.0
        %1374 = vmatprep.subr.mxu0 0.0
        %1375 = vmatpush1.xpose.msra.mxu0 0.0
        %1376 = vmatprep.subr.mxu0 0.0
        %1377 = vmatpush1.xpose.msra.mxu0 0.0
        %1378 = vmatprep.mubr.f32.mxu0 0.0
        %1379 = vmatmul.mubr.f32.gmra.mrb[0].mxu0 %v1310
        %v1380 = vpop.f32.mrb[0].mxu0
        %v1381 = vadd.f32 %v813, %v1380
        %v1382 = vpop.f32.mrb[0].mxu0
        %1383 = vdwg.mxu0
        %v1384 = vsel %vm814, %v1381, -inf
        %1385 = vmax.xlane.f32.xlu0 %v1384
        %v1386 = vpop.xlane.xlu0 %1385
        %v1387 = vsub.f32 %v1381, %v1386
        %v1388 = vmul.f32 %v1387, 1.442695
        %v1389 = vpow.pop %v1388
        %v1390 = vsel %vm814, %v1389, 0.0
        %1391 = vadd.xlane.f32.xlu0 %v1390
        %v1392 = vpop.xlane.xlu0 %1391
        %v1393 = vrcp.pop %v1392
        %v1394 = vmul.f32 %v1389, %v1393
        %1395 = vrot.lane.b32.xlu0 %v810, 104
        %v1396 = vpop.permute.xlu0 %1395
        %v1399 = vsel %vm814, %v1394, 0
        %1401 = vmatprep.subr.mxu0 0.0
        %1402 = vmatpush1.msra.mxu0 %v1396
        %1403 = vmatprep.subr.mxu0 0.0
        %1404 = vmatpush1.msra.mxu0 0.0
        %1405 = vmatprep.subr.mxu0 0.0
        %1406 = vmatpush1.msra.mxu0 0.0
        %1407 = vmatprep.subr.mxu0 0.0
        %1408 = vmatpush1.msra.mxu0 0.0
        %1409 = vmatprep.subr.mxu0 0.0
        %1410 = vmatpush1.msra.mxu0 0.0
        %1411 = vmatprep.subr.mxu0 0.0
        %1412 = vmatpush1.msra.mxu0 0.0
        %1413 = vmatprep.subr.mxu0 0.0
        %1414 = vmatpush1.msra.mxu0 0.0
        %1415 = vmatprep.subr.mxu0 0.0
        %1416 = vmatpush1.msra.mxu0 0.0
        %1417 = vmatprep.subr.mxu0 0.0
        %1418 = vmatpush1.msra.mxu0 0.0
        %1419 = vmatprep.subr.mxu0 0.0
        %1420 = vmatpush1.msra.mxu0 0.0
        %1421 = vmatprep.subr.mxu0 0.0
        %1422 = vmatpush1.msra.mxu0 0.0
        %1423 = vmatprep.subr.mxu0 0.0
        %1424 = vmatpush1.msra.mxu0 0.0
        %1425 = vmatprep.subr.mxu0 0.0
        %1426 = vmatpush1.msra.mxu0 0.0
        %1427 = vmatprep.subr.mxu0 0.0
        %1428 = vmatpush1.msra.mxu0 0.0
        %1429 = vmatprep.subr.mxu0 0.0
        %1430 = vmatpush1.msra.mxu0 0.0
        %1431 = vmatprep.subr.mxu0 0.0
        %1432 = vmatpush1.msra.mxu0 0.0
        %1433 = vmatprep.subr.mxu0 0.0
        %1434 = vmatpush1.msra.mxu0 0.0
        %1435 = vmatprep.subr.mxu0 0.0
        %1436 = vmatpush1.msra.mxu0 0.0
        %1437 = vmatprep.subr.mxu0 0.0
        %1438 = vmatpush1.msra.mxu0 0.0
        %1439 = vmatprep.subr.mxu0 0.0
        %1440 = vmatpush1.msra.mxu0 0.0
        %1441 = vmatprep.subr.mxu0 0.0
        %1442 = vmatpush1.msra.mxu0 0.0
        %1443 = vmatprep.subr.mxu0 0.0
        %1444 = vmatpush1.msra.mxu0 0.0
        %1445 = vmatprep.subr.mxu0 0.0
        %1446 = vmatpush1.msra.mxu0 0.0
        %1447 = vmatprep.subr.mxu0 0.0
        %1448 = vmatpush1.msra.mxu0 0.0
        %1449 = vmatprep.subr.mxu0 0.0
        %1450 = vmatpush1.msra.mxu0 0.0
        %1451 = vmatprep.subr.mxu0 0.0
        %1452 = vmatpush1.msra.mxu0 0.0
        %1453 = vmatprep.subr.mxu0 0.0
        %1454 = vmatpush1.msra.mxu0 0.0
        %1455 = vmatprep.subr.mxu0 0.0
        %1456 = vmatpush1.msra.mxu0 0.0
        %1457 = vmatprep.subr.mxu0 0.0
        %1458 = vmatpush1.msra.mxu0 0.0
        %1459 = vmatprep.subr.mxu0 0.0
        %1460 = vmatpush1.msra.mxu0 0.0
        %1461 = vmatprep.subr.mxu0 0.0
        %1462 = vmatpush1.msra.mxu0 0.0
        %1463 = vmatprep.subr.mxu0 0.0
        %1464 = vmatpush1.msra.mxu0 0.0
        %1465 = vmatprep.mubr.f32.mxu0 0.0
        %1466 = vmatmul.mubr.f32.gmra.mrb[0].mxu0 %v1399
        %v1467 = vpop.f32.mrb[0].mxu0
        %v1468 = vadd.f32 0.0, %v1467
        %v1469 = vpop.f32.mrb[0].mxu0
        %1470 = vdwg.mxu0
        %1472 = vrot.lane.b32.xlu0 %v1138, 8
        %v1473 = vpop.permute.xlu0 %1472
        %1476 = vrot.lane.b32.xlu0 %v1303, 16
        %v1477 = vpop.permute.xlu0 %1476
        %1480 = vrot.lane.b32.xlu0 %v1468, 24
        %v1481 = vpop.permute.xlu0 %1480
        %v1483 = vsel %vm814, %v972, %v1473
        %vm1484 = vcmask 130048
        %v1485 = vsel %vm1484, %v1483, %v1477
        %vm1486 = vcmask 195584
        %v1487 = vsel %vm1486, %v1485, %v1481
        %v1488 = vld [vmem:[%s10] sm:$0xff]
        %v1489 = vld [vmem:[%s10 + $0x8] sm:$0xff]
        %v1490 = vld [vmem:[%s10 + $0x10] sm:$0xff]
        %v1491 = vld [vmem:[%s10 + $0x18] sm:$0xff]
        %v1492 = vld [vmem:[%s11] sm:$0x1]
        %v1494 = vlaneseq
        %v1495 = vshrl.u32 %v1494, 7
        %v1496 = vsub.s32 0, %v1495
        %v1497 = vrot.slane %v1492, %v1496
        %v1500 = vsel %vm568, %v1487, 0
        %1502 = vmatprep.subr.mxu0 0.0
        %1503 = vmatpush1.msra.mxu0 %v1488
        %1504 = vmatprep.subr.mxu0 0.0
        %1505 = vmatpush1.msra.mxu0 %v1489
        %1506 = vmatprep.subr.mxu0 0.0
        %1507 = vmatpush1.msra.mxu0 %v1490
        %1508 = vmatprep.subr.mxu0 0.0
        %1509 = vmatpush1.msra.mxu0 %v1491
        %1510 = vmatprep.subr.mxu0 0.0
        %1511 = vmatpush1.msra.mxu0 0.0
        %1512 = vmatprep.subr.mxu0 0.0
        %1513 = vmatpush1.msra.mxu0 0.0
        %1514 = vmatprep.subr.mxu0 0.0
        %1515 = vmatpush1.msra.mxu0 0.0
        %1516 = vmatprep.subr.mxu0 0.0
        %1517 = vmatpush1.msra.mxu0 0.0
        %1518 = vmatprep.subr.mxu0 0.0
        %1519 = vmatpush1.msra.mxu0 0.0
        %1520 = vmatprep.subr.mxu0 0.0
        %1521 = vmatpush1.msra.mxu0 0.0
        %1522 = vmatprep.subr.mxu0 0.0
        %1523 = vmatpush1.msra.mxu0 0.0
        %1524 = vmatprep.subr.mxu0 0.0
        %1525 = vmatpush1.msra.mxu0 0.0
        %1526 = vmatprep.subr.mxu0 0.0
        %1527 = vmatpush1.msra.mxu0 0.0
        %1528 = vmatprep.subr.mxu0 0.0
        %1529 = vmatpush1.msra.mxu0 0.0
        %1530 = vmatprep.subr.mxu0 0.0
        %1531 = vmatpush1.msra.mxu0 0.0
        %1532 = vmatprep.subr.mxu0 0.0
        %1533 = vmatpush1.msra.mxu0 0.0
        %1534 = vmatprep.subr.mxu0 0.0
        %1535 = vmatpush1.msra.mxu0 0.0
        %1536 = vmatprep.subr.mxu0 0.0
        %1537 = vmatpush1.msra.mxu0 0.0
        %1538 = vmatprep.subr.mxu0 0.0
        %1539 = vmatpush1.msra.mxu0 0.0
        %1540 = vmatprep.subr.mxu0 0.0
        %1541 = vmatpush1.msra.mxu0 0.0
        %1542 = vmatprep.subr.mxu0 0.0
        %1543 = vmatpush1.msra.mxu0 0.0
        %1544 = vmatprep.subr.mxu0 0.0
        %1545 = vmatpush1.msra.mxu0 0.0
        %1546 = vmatprep.subr.mxu0 0.0
        %1547 = vmatpush1.msra.mxu0 0.0
        %1548 = vmatprep.subr.mxu0 0.0
        %1549 = vmatpush1.msra.mxu0 0.0
        %1550 = vmatprep.subr.mxu0 0.0
        %1551 = vmatpush1.msra.mxu0 0.0
        %1552 = vmatprep.subr.mxu0 0.0
        %1553 = vmatpush1.msra.mxu0 0.0
        %1554 = vmatprep.subr.mxu0 0.0
        %1555 = vmatpush1.msra.mxu0 0.0
        %1556 = vmatprep.subr.mxu0 0.0
        %1557 = vmatpush1.msra.mxu0 0.0
        %1558 = vmatprep.subr.mxu0 0.0
        %1559 = vmatpush1.msra.mxu0 0.0
        %1560 = vmatprep.subr.mxu0 0.0
        %1561 = vmatpush1.msra.mxu0 0.0
        %1562 = vmatprep.subr.mxu0 0.0
        %1563 = vmatpush1.msra.mxu0 0.0
        %1564 = vmatprep.subr.mxu0 0.0
        %1565 = vmatpush1.msra.mxu0 0.0
        %1566 = vmatprep.mubr.f32.mxu0 0.0
        %1567 = vmatmul.mubr.f32.gmra.mrb[0].mxu0 %v1500
        %v1568 = vpop.f32.mrb[0].mxu0
        %v1569 = vadd.f32 %v1497, %v1568
        %v1570 = vpop.f32.mrb[0].mxu0
        %1571 = vdwg.mxu0
        %1572 = vst.msk [vmem:[%s555] sm:$0xff] %vm568, %v1569
        %s1573 = sand.u32 %s309, 1
        %s1574 = scalar_lea.sflag [#allocation4], %s1573
        %s1575 = sand.u32 %s309, 1
        %s1576 = smul.addr %s1575, 8
        %s1577 = scalar_lea.vmem [#allocation14], %s1576
        // Predicated region
        $region97: #{tpu_custom_call.1} parent=67 // pred_check
          %p1578 = pneg %p319
        $region98: #{tpu_custom_call.1} parent=67 // pred_check_branch
          %1580 = sbr.rel (%p1578) target = $region100
        $region99: #{tpu_custom_call.1} parent=67 // pred_region
          %s1582 = ssub.s32 128, 128
          %1583 = vsyncadd %s1574, %s1582
          %s1584 = smul.addr %s34, 128
          %s1585 = scalar_lea.hbm %s12, %s1584
          %s1587 = sshll.u32 %s1577, 4
          %s1588 = int_to_ptr.vmem [resolvable:$true] %s1587
          %1590 = dma.vmem_to_hbm [thread:$0]  %s1588, 128, %s1585, %s1574
        $region100: #{tpu_custom_call.1} parent=67 // pred_fallthru
          _
      $region68: #{tpu_custom_call.1} parent=5 // pred_fallthru
        _
      %p1591 = scmp.le.s32.totalorder 2, %s29
      // Predicated region
      $region101: #{tpu_custom_call.1} parent=5 // pred_check
        %p1592 = pneg %p1591
      $region102: #{tpu_custom_call.1} parent=5 // pred_check_branch
        %1594 = sbr.rel (%p1592) target = $region104
      $region103: #{tpu_custom_call.1} parent=5 // pred_region
        %s1595 = ssub.s32 %s29, 2
        // Predicated region
        $region105: #{tpu_custom_call.1} parent=103 // pred_check
          %p1596 = pneg %p325
        $region106: #{tpu_custom_call.1} parent=103 // pred_check_branch
          %1598 = sbr.rel (%p1596) target = $region108
        $region107: #{tpu_custom_call.1} parent=103 // pred_region
          %s1599 = sand.u32 %s310, 1
          %s1600 = scalar_lea.sflag [#allocation4], %s1599
          %s1601 = sand.u32 %s310, 1
          %s1602 = smul.addr %s1601, 8
          %s1603 = scalar_lea.vmem [#allocation14], %s1602
          %1604 = dma.done %s1600, 128
        $region108: #{tpu_custom_call.1} parent=103 // pred_fallthru
          _
      $region104: #{tpu_custom_call.1} parent=5 // pred_fallthru
        _
    $region6: #{tpu_custom_call.1} parent=1 // loop_footer
      %s33 = sadd.s32 1, %s29
    $region7: #{tpu_custom_call.1} parent=1 // loop_footer_branch
      %28 = sbr.rel target = $region3
    $region8: #{tpu_custom_call.1} parent=1 // loop_exit
      _
    %1605 = vsyncpa [#allocation3], 1
    %s1606 = scalar_lea.sflag [#allocation3], 1
    %1607 = vsyncpa %s1606, 1
    %1608 = vsyncpa [#allocation6], 1
    %s1609 = scalar_lea.sflag [#allocation6], 1
    %1610 = vsyncpa %s1609, 1
    %1611 = vsyncpa [#allocation9], 1
    %1612 = vsyncpa [#allocation12], 1
    %1613 = vsyncpa [#allocation4], 1
    %s1614 = scalar_lea.sflag [#allocation4], 1
    %1615 = vsyncpa %s1614, 1

</llo_original>
